<compile_context>
chip_gen: v6e
topology: v6e:2x2x1
jax: 0.10.0
libtpu: 0.0.40
codegen_flags: <defaults>
</compile_context>

<pallas_src>
import functools
import math

import jax
import jax.numpy as jnp
from jax import lax
from jax.experimental import pallas as pl
from jax.experimental.pallas import tpu as pltpu

_EPS = 1e-5
_PAD = 4            # BasicBlock convs: kernel_size=9, padding=4
_K_BLOCK = 9
_K_CONV1 = 12       # stem conv: Conv1d(1, channels[0], 12), padding=0
_POOL_K, _POOL_S = 3, 2
_N_VEC_COLS = 32    # padded column count of the per-channel vector table


def _ceil_to(v, m):
    return ((v + m - 1) // m) * m


# ---------------------------------------------------------------------------
# Static configuration derived from the module architecture
# ---------------------------------------------------------------------------
def make_config(channels, no_classes, input_len=187, batch=2):
    c0, c1, c2, c3 = channels
    assert c0 == 10, "bn1 = nn.BatchNorm1d(10) in the module requires channels[0] == 10"
    la = input_len - _K_CONV1 + 1                  # 176 for input_len=187
    lb = (la - _POOL_K) // _POOL_S + 1             # 87
    cp = _ceil_to(max(channels), 8)                # channel padding (sublanes)
    cpi = 8                                        # stem input-channel padding

    def seg(min_len):
        s = _ceil_to(min_len, 64)
        if (batch * s) % 128:
            s = _ceil_to(s, 128)
        return s

    seg_a = seg(max(la + 2 * _PAD, input_len))     # 192 (batch=2, input_len=187)
    seg_b = seg(lb + 2 * _PAD)                     # 128
    f = 1 if no_classes == 2 else no_classes
    fp = _ceil_to(f, 8)
    changes = (c0 != c1, True, True)               # mirrors ResNet1d.__init__
    return dict(channels=tuple(channels), no_classes=no_classes, batch=batch,
                input_len=input_len, la=la, lb=lb, cp=cp, cpi=cpi,
                seg_a=seg_a, seg_b=seg_b, f=f, fp=fp, changes=changes)


# ---------------------------------------------------------------------------
# Constant-slab layout (row offsets, all multiples of 8)
# ---------------------------------------------------------------------------
def _layout(cfg):
    n, cp, fp = cfg["batch"], cfg["cp"], cfg["fp"]
    lanes_a, lanes_b = n * cfg["seg_a"], n * cfg["seg_b"]
    nfp = n * fp
    out_w = _ceil_to(max(nfp, 128), 128)
    width = max(lanes_a, lanes_b, cp * nfp, out_w, _N_VEC_COLS)
    o = dict(lanes_a=lanes_a, lanes_b=lanes_b, nfp=nfp, out_w=out_w, width=width)
    o["sel"] = 0
    o["big"] = lanes_a
    o["fold"] = o["big"] + lanes_b
    o["diag"] = o["fold"] + cp * nfp
    o["vec"] = o["diag"] + cp
    o["mask_a"] = o["vec"] + cp
    o["mask_b"] = o["mask_a"] + 8
    o["bias"] = o["mask_b"] + 8
    o["rows"] = o["bias"] + 8
    return o


# ---------------------------------------------------------------------------
# One-time parameter preparation (all padding / re-layout done at init)
# ---------------------------------------------------------------------------
def prepare_params(raw, cfg):
    n = cfg["batch"]
    cp, cpi, fp, f = cfg["cp"], cfg["cpi"], cfg["fp"], cfg["f"]
    la, lb = cfg["la"], cfg["lb"]
    seg_a, seg_b = cfg["seg_a"], cfg["seg_b"]
    c3 = cfg["channels"][3]
    lo = _layout(cfg)
    lanes_a, lanes_b, nfp, out_w = lo["lanes_a"], lo["lanes_b"], lo["nfp"], lo["out_w"]
    wcols = _K_BLOCK * cp

    # ---- conv weights: (7, 2*cp, wcols).  The 1x1 residual conv is embedded
    #      at the centre tap and stacked on rows [cp:2cp] of the block's conv1.
    def conv_mat(w, cin_pad):
        cout, cin, k = w.shape
        wkc = jnp.transpose(w, (0, 2, 1)).astype(jnp.float32)        # (Cout, K, Cin)
        wkc = jnp.pad(wkc, ((0, 0), (0, 0), (0, cin_pad - cin))).reshape(cout, k * cin_pad)
        return jnp.pad(wkc, ((0, cp - cout), (0, wcols - k * cin_pad)))

    slabs = [jnp.pad(conv_mat(raw["conv1_w"], cpi), ((0, cp), (0, 0)))]      # stem
    for bi, bname in enumerate(("block1", "block2", "block3")):
        p = raw[bname]
        bottom = jnp.zeros((cp, wcols), jnp.float32)
        if cfg["changes"][bi]:
            cout, cin, _ = p["wx"].shape
            bottom = bottom.at[:cout, _PAD * cp:_PAD * cp + cin].set(
                p["wx"][:, :, 0].astype(jnp.float32))
        slabs.append(jnp.concatenate([conv_mat(p["w1"], cp), bottom], axis=0))
        slabs.append(jnp.pad(conv_mat(p["w2"], cp), ((0, cp), (0, 0))))
    w_pack = jnp.stack(slabs, axis=0)

    # ---- per-channel vector table (cp, 32): BN gamma/beta + residual biases
    def vcol(v):
        return jnp.pad(v.astype(jnp.float32), (0, cp - v.shape[0]))

    cols = [vcol(raw["bn1_g"]), vcol(raw["bn1_b"])]
    for bi, bname in enumerate(("block1", "block2", "block3")):
        p = raw[bname]
        cols += [vcol(p["g1"]), vcol(p["be1"]), vcol(p["g2"]), vcol(p["be2"]),
                 vcol(p["bx"]) if cfg["changes"][bi] else jnp.zeros((cp,), jnp.float32)]
    vec_tab = jnp.pad(jnp.stack(cols, axis=1), ((0, 0), (0, _N_VEC_COLS - len(cols))))

    # ---- lane masks (valid-sample lanes inside each per-batch segment)
    def lane_mask(lanes, seg, length):
        p = jnp.arange(lanes) % seg
        return ((p >= _PAD) & (p < _PAD + length)).astype(jnp.float32)

    mask_a = lane_mask(lanes_a, seg_a, la)
    mask_b = lane_mask(lanes_b, seg_b, lb)
    mcol_pack = jnp.zeros((lanes_a, 8), jnp.float32)
    mcol_pack = mcol_pack.at[:, 0].set(mask_a).at[:lanes_b, 1].set(mask_b)

    # ---- maxpool stride-2 selection matrix (stage-A lanes -> stage-B lanes)
    src = jnp.arange(lanes_a)[:, None]
    dst = jnp.arange(lanes_b)[None, :]
    nd, pd = dst // seg_b, dst % seg_b
    sel = ((pd >= _PAD) & (pd < _PAD + lb)
           & (src == nd * seg_a + _PAD + _POOL_S * (pd - _PAD))).astype(jnp.float32)

    # ---- fused flatten+Linear matrices
    fcw3 = jnp.transpose(raw["fc_w"].reshape(f, c3, lb), (2, 1, 0)).astype(jnp.float32)
    fc_big = jnp.zeros((lanes_b, cp * nfp), jnp.float32)
    for ni in range(n):
        sub = jnp.zeros((lb, cp, nfp), jnp.float32)
        sub = sub.at[:, :c3, ni * fp:ni * fp + f].set(fcw3)
        fc_big = fc_big.at[ni * seg_b + _PAD:ni * seg_b + _PAD + lb, :].set(
            sub.reshape(lb, cp * nfp))
    m_idx = jnp.arange(cp * nfp)
    fc_diag = (m_idx[None, :] // nfp == jnp.arange(cp)[:, None]).astype(jnp.float32)
    fc_fold = (m_idx[:, None] % nfp == jnp.arange(out_w)[None, :]).astype(jnp.float32)
    fc_bias = jnp.zeros((out_w,), jnp.float32).at[:nfp].set(
        jnp.tile(jnp.pad(raw["fc_b"].astype(jnp.float32), (0, fp - f)), n))

    # ---- one constants slab holding everything above
    c = jnp.zeros((lo["rows"], lo["width"]), jnp.float32)
    c = c.at[lo["sel"]:lo["sel"] + lanes_a, :lanes_b].set(sel)
    c = c.at[lo["big"]:lo["big"] + lanes_b, :cp * nfp].set(fc_big)
    c = c.at[lo["fold"]:lo["fold"] + cp * nfp, :out_w].set(fc_fold)
    c = c.at[lo["diag"]:lo["diag"] + cp, :cp * nfp].set(fc_diag)
    c = c.at[lo["vec"]:lo["vec"] + cp, :_N_VEC_COLS].set(vec_tab)
    c = c.at[lo["mask_a"], :lanes_a].set(mask_a)
    c = c.at[lo["mask_b"], :lanes_b].set(mask_b)
    c = c.at[lo["bias"], :out_w].set(fc_bias)

    return dict(w_pack=w_pack, const_pack=c, mcol_pack=mcol_pack)


# ---------------------------------------------------------------------------
# The single fused kernel
# ---------------------------------------------------------------------------
def _build_kernel(cfg):
    n = cfg["batch"]
    la, lb = cfg["la"], cfg["lb"]
    cp, cpi = cfg["cp"], cfg["cpi"]
    changes = cfg["changes"]
    lo = _layout(cfg)
    lanes_a, lanes_b = lo["lanes_a"], lo["lanes_b"]
    nfp, out_w = lo["nfp"], lo["out_w"]
    stem_cols = _K_CONV1 * cpi

    def kernel(x_ref, w_ref, const_ref, mcol_ref, out_ref):
        def dot(a, b):
            return lax.dot_general(a, b, (((1,), (0,)), ((), ())),
                                   preferred_element_type=jnp.float32)

        vecs = const_ref[lo["vec"]:lo["vec"] + cp, 0:_N_VEC_COLS]       # (cp, 32)
        mask_a = const_ref[lo["mask_a"]:lo["mask_a"] + 1, 0:lanes_a]    # (1, lanes_a)
        mask_b = const_ref[lo["mask_b"]:lo["mask_b"] + 1, 0:lanes_b]    # (1, lanes_b)
        mcol_a = mcol_ref[...]                                          # (lanes_a, 8)
        mcol_b = mcol_ref[0:lanes_b, :]                                 # (lanes_b, 8)

        def col(i):                                                     # (cp, 1)
            return vecs[:, i:i + 1]

        def im2col(x, k_taps, lanes):
            # one lane-rotated copy per tap (XLU), stacked on sublanes
            blocks = []
            for k in range(k_taps):
                s = (_PAD - k) % lanes
                blocks.append(x if s == 0 else pltpu.roll(x, shift=s, axis=1))
            return jnp.concatenate(blocks, axis=0)

        def batch_norm(y, g, b, mcol, stat_col, count):
            # training-mode BN; single-pass masked stats via two MXU mat-vecs
            inv_n = 1.0 / count
            mean = dot(y, mcol)[:, stat_col:stat_col + 1] * inv_n       # (cp, 1)
            ex2 = dot(y * y, mcol)[:, stat_col:stat_col + 1] * inv_n    # (cp, 1)
            scale = g * lax.rsqrt(ex2 - mean * mean + _EPS)
            return y * scale + (b - mean * scale)

        # ---- stem: conv1 (K=12, pad=0) + bn1(train stats) + relu ----
        w_stem = w_ref[0][0:cp, 0:stem_cols]
        acc = dot(w_stem, im2col(x_ref[...], _K_CONV1, lanes_a))
        act = jnp.maximum(batch_norm(acc, col(0), col(1), mcol_a, 0, n * la),
                          0.0) * mask_a

        # ---- BasicBlock: conv-bn-relu-conv-bn + residual (1x1 conv fused) ----
        def basic_block(x, block_i, change, lanes, mask, mcol, stat_col, count):
            wslot, vbase = 1 + 2 * block_i, 2 + 5 * block_i
            rows = 2 * cp if change else cp
            acc = dot(w_ref[wslot][0:rows, :], im2col(x, _K_BLOCK, lanes))
            if change:
                iden = acc[cp:2 * cp, :] + col(vbase + 4)               # conv_for_x
            else:
                iden = x
            h = jnp.maximum(batch_norm(acc[0:cp, :], col(vbase), col(vbase + 1),
                                       mcol, stat_col, count), 0.0) * mask
            o = batch_norm(dot(w_ref[wslot + 1][0:cp, :], im2col(h, _K_BLOCK, lanes)),
                           col(vbase + 2), col(vbase + 3), mcol, stat_col, count)
            return jnp.maximum(o + iden, 0.0) * mask

        act = basic_block(act, 0, changes[0], lanes_a, mask_a, mcol_a, 0, n * la)

        # ---- MaxPool1d(3,2): sliding max + precomputed selection-matrix dot ----
        m = jnp.maximum(jnp.maximum(act, pltpu.roll(act, shift=lanes_a - 1, axis=1)),
                        pltpu.roll(act, shift=lanes_a - 2, axis=1))
        sel = const_ref[lo["sel"]:lo["sel"] + lanes_a, 0:lanes_b]
        act = dot(m, sel)                                               # (cp, lanes_b)

        act = basic_block(act, 1, changes[1], lanes_b, mask_b, mcol_b, 1, n * lb)
        act = basic_block(act, 2, changes[2], lanes_b, mask_b, mcol_b, 1, n * lb)

        # ---- fused flatten + Linear: two MXU dots + a diagonal-block pick ----
        fc_big = const_ref[lo["big"]:lo["big"] + lanes_b, 0:cp * nfp]
        fc_diag = const_ref[lo["diag"]:lo["diag"] + cp, 0:cp * nfp]
        fc_fold = const_ref[lo["fold"]:lo["fold"] + cp * nfp, 0:out_w]
        fc_bias = const_ref[lo["bias"]:lo["bias"] + 1, 0:out_w]
        raw_fc = dot(act, fc_big)                                       # (cp, cp*nfp)
        flat = jnp.sum(dot(raw_fc * fc_diag, fc_fold), axis=0, keepdims=True) + fc_bias
        out_ref[...] = jnp.broadcast_to(flat, (8, out_w))               # lane-dense slab

    return kernel


# ---------------------------------------------------------------------------
# Wrapper: one pallas_call for the whole forward pass
# ---------------------------------------------------------------------------
def _prep_input(x, cfg):
    # (N, 1, L) -> (8, N*SEG_A): batch folded into lanes, samples at lane
    # offset 0 of each segment, unused sublanes/lanes zero.
    nb, cin, l = x.shape
    assert cin == 1 and l == cfg["input_len"] and nb == cfg["batch"]
    row = jnp.pad(x[:, 0, :], ((0, 0), (0, cfg["seg_a"] - l))).reshape(1, nb * cfg["seg_a"])
    return jnp.pad(row, ((0, cfg["cpi"] - 1), (0, 0))).astype(jnp.float32)


def _cost_estimate(cfg, inputs):
    n, cp, cpi = cfg["batch"], cfg["cp"], cfg["cpi"]
    lo = _layout(cfg)
    lanes_a, lanes_b, nfp = lo["lanes_a"], lo["lanes_b"], lo["nfp"]
    kc = _K_BLOCK * cp
    rows = [3 * cp if ch else 2 * cp for ch in cfg["changes"]]
    macs = (cp * _K_CONV1 * cpi * lanes_a                     # stem conv
            + rows[0] * kc * lanes_a                          # block1 convs
            + cp * lanes_a * lanes_b                          # maxpool selection dot
            + (rows[1] + rows[2]) * kc * lanes_b              # blocks 2 & 3
            + cp * lanes_b * cp * nfp + cp * nfp * lo["out_w"]  # fc dots
            + 7 * 2 * cp * 8 * lanes_a)                       # BN stat mat-vecs (bound)
    bytes_accessed = sum(int(a.size) * 4 for a in inputs) + 8 * lo["out_w"] * 4
    return pl.CostEstimate(flops=int(2 * macs), transcendentals=int(7 * cp),
                           bytes_accessed=int(bytes_accessed))


def resnet1d_forward(x, prepared, cfg):
    n, f, fp = cfg["batch"], cfg["f"], cfg["fp"]
    lo = _layout(cfg)
    inputs = (_prep_input(x, cfg), prepared["w_pack"], prepared["const_pack"],
              prepared["mcol_pack"])
    vmem = pl.BlockSpec(memory_space=pltpu.MemorySpace.VMEM)
    slab = pl.pallas_call(
        _build_kernel(cfg),
        out_shape=jax.ShapeDtypeStruct((8, lo["out_w"]), jnp.float32),
        in_specs=[vmem] * len(inputs),
        out_specs=vmem,
        cost_estimate=_cost_estimate(cfg, inputs),
    )(*inputs)
    return slab[0, :n * fp].reshape(n, fp)[:, :f]


# ---------------------------------------------------------------------------
# Deterministic parameter init (PyTorch-default-style uniform bounds)
# ---------------------------------------------------------------------------
def _uniform(key, shape, fan_in):
    bound = 1.0 / math.sqrt(fan_in)
    return jax.random.uniform(key, shape, jnp.float32, -bound, bound)


def _init_conv(key, cout, cin, k):
    kw, kb = jax.random.split(key)
    fan_in = cin * k
    return _uniform(kw, (cout, cin, k), fan_in), _uniform(kb, (cout,), fan_in)


def _init_block(key, cin, cout):
    k1, k2, kx = jax.random.split(key, 3)
    w1, b1 = _init_conv(k1, cout, cin, _K_BLOCK)
    w2, b2 = _init_conv(k2, cout, cout, _K_BLOCK)
    wx, bx = _init_conv(kx, cout, cin, 1)
    ones = jnp.ones((cout,), jnp.float32)
    zeros = jnp.zeros((cout,), jnp.float32)
    return dict(w1=w1, b1=b1, g1=ones, be1=zeros,
                w2=w2, b2=b2, g2=ones, be2=zeros, wx=wx, bx=bx)


def init_params(key, cfg):
    c0, c1, c2, c3 = cfg["channels"]
    k_conv1, k_b1, k_b2, k_b3, k_fc = jax.random.split(key, 5)
    conv1_w, conv1_b = _init_conv(k_conv1, c0, 1, _K_CONV1)
    in_features = cfg["lb"] * c3
    kfw, kfb = jax.random.split(k_fc)
    return dict(conv1_w=conv1_w, conv1_b=conv1_b,
                bn1_g=jnp.ones((c0,), jnp.float32), bn1_b=jnp.zeros((c0,), jnp.float32),
                block1=_init_block(k_b1, c0, c1),
                block2=_init_block(k_b2, c1, c2),
                block3=_init_block(k_b3, c2, c3),
                fc_w=_uniform(kfw, (cfg["f"], in_features), in_features),
                fc_b=_uniform(kfb, (cfg["f"],), in_features))


# ---------------------------------------------------------------------------
# Pure-JAX reference (training-mode BN), used for the correctness cross-check
# ---------------------------------------------------------------------------
def _ref_forward(x, raw, cfg):
    def conv1d(x, w, b, padding):
        out = lax.conv_general_dilated(x, w, (1,), [(padding, padding)],
                                       dimension_numbers=("NCH", "OIH", "NCH"))
        return out + b[None, :, None]

    def bn(x, g, b):
        mean = jnp.mean(x, axis=(0, 2), keepdims=True)
        var = jnp.mean((x - mean) ** 2, axis=(0, 2), keepdims=True)
        return (x - mean) * lax.rsqrt(var + _EPS) * g[None, :, None] + b[None, :, None]

    def block(x, p, change):
        h = jax.nn.relu(bn(conv1d(x, p["w1"], p["b1"], _PAD), p["g1"], p["be1"]))
        o = bn(conv1d(h, p["w2"], p["b2"], _PAD), p["g2"], p["be2"])
        iden = conv1d(x, p["wx"], p["bx"], 0) if change else x
        return jax.nn.relu(o + iden)

    h = jax.nn.relu(bn(conv1d(x, raw["conv1_w"], raw["conv1_b"], 0),
                       raw["bn1_g"], raw["bn1_b"]))
    h = block(h, raw["block1"], cfg["changes"][0])
    lout = (h.shape[2] - _POOL_K) // _POOL_S + 1
    h = jnp.max(jnp.stack([h[:, :, t:t + _POOL_S * lout - 1:_POOL_S]
                           for t in range(_POOL_K)], axis=0), axis=0)
    h = block(h, raw["block2"], cfg["changes"][1])
    h = block(h, raw["block3"], cfg["changes"][2])
    hf = h.reshape(h.shape[0], -1)
    return hf @ raw["fc_w"].T + raw["fc_b"][None, :]


# ---------------------------------------------------------------------------
if __name__ == "__main__":
    channels = [10, 12, 16, 16]       # channels[0] must be 10 (BatchNorm1d(10))
    no_classes = 5
    batch = 2

    cfg = make_config(channels, no_classes, input_len=187, batch=batch)

    key = jax.random.PRNGKey(0)
    kx, kp = jax.random.split(key)
    x = jax.random.normal(kx, (batch, 1, cfg["input_len"]), dtype=jnp.float32)

    raw = init_params(kp, cfg)
    prepared = prepare_params(raw, cfg)          # one-time weight re-layout / packing

    fwd = jax.jit(functools.partial(resnet1d_forward, cfg=cfg))
    out = fwd(x, prepared)
    jax.block_until_ready(out)

    assert out.shape == (batch, no_classes), out.shape
    assert bool(jnp.all(jnp.isfinite(out)))

    # Cross-check against a pure-JAX reference of the same (train-mode BN) forward.
    with jax.default_matmul_precision("highest"):
        ref = _ref_forward(x, raw, cfg)
    max_err = float(jnp.max(jnp.abs(out - ref)))
    assert max_err < 1e-2, f"mismatch vs reference: max_err={max_err}"

    print("KERNEL_OK")
</pallas_src>

<mosaic_0001>
module attributes {stable_mosaic.version = 11 : i64} {
  func.func @kernel(%arg0: memref<8x384xf32, #tpu.memory_space<vmem>>, %arg1: memref<7x32x144xf32, #tpu.memory_space<vmem>>, %arg2: memref<952x384xf32, #tpu.memory_space<vmem>>, %arg3: memref<384x8xf32, #tpu.memory_space<vmem>>, %arg4: memref<8x128xf32, #tpu.memory_space<vmem>>) attributes {dimension_semantics = [], scalar_prefetch = 0 : i64, scratch_operands = 0 : i64, tpu.core_type = #tpu.core_type<tc>} {
    %c912 = arith.constant 912 : index
    %c0 = arith.constant 0 : index
    %0 = vector.load %arg2[%c912, %c0] : memref<952x384xf32, #tpu.memory_space<vmem>>, vector<16x32xf32>
    %c928 = arith.constant 928 : index
    %c0_0 = arith.constant 0 : index
    %1 = vector.load %arg2[%c928, %c0_0] : memref<952x384xf32, #tpu.memory_space<vmem>>, vector<1x384xf32>
    %c936 = arith.constant 936 : index
    %c0_1 = arith.constant 0 : index
    %2 = vector.load %arg2[%c936, %c0_1] : memref<952x384xf32, #tpu.memory_space<vmem>>, vector<1x256xf32>
    %c0_2 = arith.constant 0 : index
    %c0_3 = arith.constant 0 : index
    %3 = vector.load %arg3[%c0_2, %c0_3] : memref<384x8xf32, #tpu.memory_space<vmem>>, vector<384x8xf32>
    %c0_4 = arith.constant 0 : index
    %c0_5 = arith.constant 0 : index
    %4 = vector.load %arg3[%c0_4, %c0_5] : memref<384x8xf32, #tpu.memory_space<vmem>>, vector<256x8xf32>
    %c0_6 = arith.constant 0 : index
    %c0_7 = arith.constant 0 : index
    %c0_8 = arith.constant 0 : index
    %5 = vector.load %arg1[%c0_6, %c0_7, %c0_8] : memref<7x32x144xf32, #tpu.memory_space<vmem>>, vector<1x32x144xf32>
    %6 = vector.shape_cast %5 : vector<1x32x144xf32> to vector<32x144xf32>
    %7 = vector.extract_strided_slice %6 {offsets = [0, 0], sizes = [16, 96], strides = [1, 1]} : vector<32x144xf32> to vector<16x96xf32>
    %c0_9 = arith.constant 0 : index
    %c0_10 = arith.constant 0 : index
    %8 = vector.load %arg0[%c0_9, %c0_10] : memref<8x384xf32, #tpu.memory_space<vmem>>, vector<8x384xf32>
    %c4_i32 = arith.constant 4 : i32
    %9 = tpu.dynamic_rotate %8 by %c4_i32 dim 1 : vector<8x384xf32>, i32 -> vector<8x384xf32>
    %c3_i32 = arith.constant 3 : i32
    %10 = tpu.dynamic_rotate %8 by %c3_i32 dim 1 : vector<8x384xf32>, i32 -> vector<8x384xf32>
    %c2_i32 = arith.constant 2 : i32
    %11 = tpu.dynamic_rotate %8 by %c2_i32 dim 1 : vector<8x384xf32>, i32 -> vector<8x384xf32>
    %c1_i32 = arith.constant 1 : i32
    %12 = tpu.dynamic_rotate %8 by %c1_i32 dim 1 : vector<8x384xf32>, i32 -> vector<8x384xf32>
    %c383_i32 = arith.constant 383 : i32
    %13 = tpu.dynamic_rotate %8 by %c383_i32 dim 1 : vector<8x384xf32>, i32 -> vector<8x384xf32>
    %c382_i32 = arith.constant 382 : i32
    %14 = tpu.dynamic_rotate %8 by %c382_i32 dim 1 : vector<8x384xf32>, i32 -> vector<8x384xf32>
    %c381_i32 = arith.constant 381 : i32
    %15 = tpu.dynamic_rotate %8 by %c381_i32 dim 1 : vector<8x384xf32>, i32 -> vector<8x384xf32>
    %c380_i32 = arith.constant 380 : i32
    %16 = tpu.dynamic_rotate %8 by %c380_i32 dim 1 : vector<8x384xf32>, i32 -> vector<8x384xf32>
    %c379_i32 = arith.constant 379 : i32
    %17 = tpu.dynamic_rotate %8 by %c379_i32 dim 1 : vector<8x384xf32>, i32 -> vector<8x384xf32>
    %c378_i32 = arith.constant 378 : i32
    %18 = tpu.dynamic_rotate %8 by %c378_i32 dim 1 : vector<8x384xf32>, i32 -> vector<8x384xf32>
    %c377_i32 = arith.constant 377 : i32
    %19 = tpu.dynamic_rotate %8 by %c377_i32 dim 1 : vector<8x384xf32>, i32 -> vector<8x384xf32>
    %20 = tpu.concatenate %9, %10, %11, %12, %8, %13, %14, %15, %16, %17, %18, %19 in 0 : vector<8x384xf32>, vector<8x384xf32>, vector<8x384xf32>, vector<8x384xf32>, vector<8x384xf32>, vector<8x384xf32>, vector<8x384xf32>, vector<8x384xf32>, vector<8x384xf32>, vector<8x384xf32>, vector<8x384xf32>, vector<8x384xf32> -> vector<96x384xf32>
    %cst = arith.constant dense<0.000000e+00> : vector<16x384xf32>
    %21 = tpu.matmul %7, %20, %cst {dimension_numbers = #tpu.dot_dimension_numbers<[1], [0], [0], [1], [0, 0, 1, 1], [], []>} : vector<16x96xf32>, vector<96x384xf32>, vector<16x384xf32> -> vector<16x384xf32>
    %22 = vector.extract_strided_slice %0 {offsets = [0, 0], sizes = [16, 1], strides = [1, 1]} : vector<16x32xf32> to vector<16x1xf32>
    %23 = vector.extract_strided_slice %0 {offsets = [0, 1], sizes = [16, 1], strides = [1, 1]} : vector<16x32xf32> to vector<16x1xf32>
    %cst_11 = arith.constant dense<0.000000e+00> : vector<16x8xf32>
    %24 = tpu.matmul %21, %3, %cst_11 {dimension_numbers = #tpu.dot_dimension_numbers<[1], [0], [0], [1], [0, 0, 1, 1], [], []>} : vector<16x384xf32>, vector<384x8xf32>, vector<16x8xf32> -> vector<16x8xf32>
    %25 = vector.extract_strided_slice %24 {offsets = [0, 0], sizes = [16, 1], strides = [1, 1]} : vector<16x8xf32> to vector<16x1xf32>
    %cst_12 = arith.constant 0.00284090918 : f32
    %26 = vector.broadcast %cst_12 : f32 to vector<16x1xf32>
    %27 = arith.mulf %25, %26 : vector<16x1xf32>
    %28 = arith.mulf %21, %21 : vector<16x384xf32>
    %cst_13 = arith.constant dense<0.000000e+00> : vector<16x8xf32>
    %29 = tpu.matmul %28, %3, %cst_13 {dimension_numbers = #tpu.dot_dimension_numbers<[1], [0], [0], [1], [0, 0, 1, 1], [], []>} : vector<16x384xf32>, vector<384x8xf32>, vector<16x8xf32> -> vector<16x8xf32>
    %30 = vector.extract_strided_slice %29 {offsets = [0, 0], sizes = [16, 1], strides = [1, 1]} : vector<16x8xf32> to vector<16x1xf32>
    %cst_14 = arith.constant 0.00284090918 : f32
    %31 = vector.broadcast %cst_14 : f32 to vector<16x1xf32>
    %32 = arith.mulf %30, %31 : vector<16x1xf32>
    %33 = arith.mulf %27, %27 : vector<16x1xf32>
    %34 = arith.subf %32, %33 : vector<16x1xf32>
    %cst_15 = arith.constant 9.99999974E-6 : f32
    %35 = vector.broadcast %cst_15 : f32 to vector<16x1xf32>
    %36 = arith.addf %34, %35 : vector<16x1xf32>
    %37 = math.rsqrt %36 : vector<16x1xf32>
    %38 = arith.mulf %22, %37 : vector<16x1xf32>
    %39 = vector.broadcast %38 : vector<16x1xf32> to vector<16x384xf32>
    %40 = arith.mulf %21, %39 : vector<16x384xf32>
    %41 = arith.mulf %27, %38 : vector<16x1xf32>
    %42 = arith.subf %23, %41 : vector<16x1xf32>
    %43 = vector.broadcast %42 : vector<16x1xf32> to vector<16x384xf32>
    %44 = arith.addf %40, %43 : vector<16x384xf32>
    %cst_16 = arith.constant 0.000000e+00 : f32
    %45 = vector.broadcast %cst_16 : f32 to vector<16x384xf32>
    %46 = arith.maximumf %44, %45 : vector<16x384xf32>
    %47 = vector.broadcast %1 : vector<1x384xf32> to vector<16x384xf32>
    %48 = arith.mulf %46, %47 : vector<16x384xf32>
    %c1 = arith.constant 1 : index
    %c0_17 = arith.constant 0 : index
    %c0_18 = arith.constant 0 : index
    %49 = vector.load %arg1[%c1, %c0_17, %c0_18] : memref<7x32x144xf32, #tpu.memory_space<vmem>>, vector<1x32x144xf32>
    %50 = vector.shape_cast %49 : vector<1x32x144xf32> to vector<32x144xf32>
    %c4_i32_19 = arith.constant 4 : i32
    %51 = tpu.dynamic_rotate %48 by %c4_i32_19 dim 1 : vector<16x384xf32>, i32 -> vector<16x384xf32>
    %c3_i32_20 = arith.constant 3 : i32
    %52 = tpu.dynamic_rotate %48 by %c3_i32_20 dim 1 : vector<16x384xf32>, i32 -> vector<16x384xf32>
    %c2_i32_21 = arith.constant 2 : i32
    %53 = tpu.dynamic_rotate %48 by %c2_i32_21 dim 1 : vector<16x384xf32>, i32 -> vector<16x384xf32>
    %c1_i32_22 = arith.constant 1 : i32
    %54 = tpu.dynamic_rotate %48 by %c1_i32_22 dim 1 : vector<16x384xf32>, i32 -> vector<16x384xf32>
    %c383_i32_23 = arith.constant 383 : i32
    %55 = tpu.dynamic_rotate %48 by %c383_i32_23 dim 1 : vector<16x384xf32>, i32 -> vector<16x384xf32>
    %c382_i32_24 = arith.constant 382 : i32
    %56 = tpu.dynamic_rotate %48 by %c382_i32_24 dim 1 : vector<16x384xf32>, i32 -> vector<16x384xf32>
    %c381_i32_25 = arith.constant 381 : i32
    %57 = tpu.dynamic_rotate %48 by %c381_i32_25 dim 1 : vector<16x384xf32>, i32 -> vector<16x384xf32>
    %c380_i32_26 = arith.constant 380 : i32
    %58 = tpu.dynamic_rotate %48 by %c380_i32_26 dim 1 : vector<16x384xf32>, i32 -> vector<16x384xf32>
    %59 = tpu.concatenate %51, %52, %53, %54, %48, %55, %56, %57, %58 in 0 : vector<16x384xf32>, vector<16x384xf32>, vector<16x384xf32>, vector<16x384xf32>, vector<16x384xf32>, vector<16x384xf32>, vector<16x384xf32>, vector<16x384xf32>, vector<16x384xf32> -> vector<144x384xf32>
    %cst_27 = arith.constant dense<0.000000e+00> : vector<32x384xf32>
    %60 = tpu.matmul %50, %59, %cst_27 {dimension_numbers = #tpu.dot_dimension_numbers<[1], [0], [0], [1], [0, 0, 1, 1], [], []>} : vector<32x144xf32>, vector<144x384xf32>, vector<32x384xf32> -> vector<32x384xf32>
    %61 = vector.extract_strided_slice %60 {offsets = [16, 0], sizes = [16, 384], strides = [1, 1]} : vector<32x384xf32> to vector<16x384xf32>
    %62 = vector.extract_strided_slice %0 {offsets = [0, 6], sizes = [16, 1], strides = [1, 1]} : vector<16x32xf32> to vector<16x1xf32>
    %63 = vector.broadcast %62 : vector<16x1xf32> to vector<16x384xf32>
    %64 = arith.addf %61, %63 : vector<16x384xf32>
    %65 = vector.extract_strided_slice %60 {offsets = [0, 0], sizes = [16, 384], strides = [1, 1]} : vector<32x384xf32> to vector<16x384xf32>
    %66 = vector.extract_strided_slice %0 {offsets = [0, 2], sizes = [16, 1], strides = [1, 1]} : vector<16x32xf32> to vector<16x1xf32>
    %67 = vector.extract_strided_slice %0 {offsets = [0, 3], sizes = [16, 1], strides = [1, 1]} : vector<16x32xf32> to vector<16x1xf32>
    %cst_28 = arith.constant dense<0.000000e+00> : vector<16x8xf32>
    %68 = tpu.matmul %65, %3, %cst_28 {dimension_numbers = #tpu.dot_dimension_numbers<[1], [0], [0], [1], [0, 0, 1, 1], [], []>} : vector<16x384xf32>, vector<384x8xf32>, vector<16x8xf32> -> vector<16x8xf32>
    %69 = vector.extract_strided_slice %68 {offsets = [0, 0], sizes = [16, 1], strides = [1, 1]} : vector<16x8xf32> to vector<16x1xf32>
    %cst_29 = arith.constant 0.00284090918 : f32
    %70 = vector.broadcast %cst_29 : f32 to vector<16x1xf32>
    %71 = arith.mulf %69, %70 : vector<16x1xf32>
    %72 = arith.mulf %65, %65 : vector<16x384xf32>
    %cst_30 = arith.constant dense<0.000000e+00> : vector<16x8xf32>
    %73 = tpu.matmul %72, %3, %cst_30 {dimension_numbers = #tpu.dot_dimension_numbers<[1], [0], [0], [1], [0, 0, 1, 1], [], []>} : vector<16x384xf32>, vector<384x8xf32>, vector<16x8xf32> -> vector<16x8xf32>
    %74 = vector.extract_strided_slice %73 {offsets = [0, 0], sizes = [16, 1], strides = [1, 1]} : vector<16x8xf32> to vector<16x1xf32>
    %cst_31 = arith.constant 0.00284090918 : f32
    %75 = vector.broadcast %cst_31 : f32 to vector<16x1xf32>
    %76 = arith.mulf %74, %75 : vector<16x1xf32>
    %77 = arith.mulf %71, %71 : vector<16x1xf32>
    %78 = arith.subf %76, %77 : vector<16x1xf32>
    %cst_32 = arith.constant 9.99999974E-6 : f32
    %79 = vector.broadcast %cst_32 : f32 to vector<16x1xf32>
    %80 = arith.addf %78, %79 : vector<16x1xf32>
    %81 = math.rsqrt %80 : vector<16x1xf32>
    %82 = arith.mulf %66, %81 : vector<16x1xf32>
    %83 = vector.broadcast %82 : vector<16x1xf32> to vector<16x384xf32>
    %84 = arith.mulf %65, %83 : vector<16x384xf32>
    %85 = arith.mulf %71, %82 : vector<16x1xf32>
    %86 = arith.subf %67, %85 : vector<16x1xf32>
    %87 = vector.broadcast %86 : vector<16x1xf32> to vector<16x384xf32>
    %88 = arith.addf %84, %87 : vector<16x384xf32>
    %cst_33 = arith.constant 0.000000e+00 : f32
    %89 = vector.broadcast %cst_33 : f32 to vector<16x384xf32>
    %90 = arith.maximumf %88, %89 : vector<16x384xf32>
    %91 = vector.broadcast %1 : vector<1x384xf32> to vector<16x384xf32>
    %92 = arith.mulf %90, %91 : vector<16x384xf32>
    %c2 = arith.constant 2 : index
    %c0_34 = arith.constant 0 : index
    %c0_35 = arith.constant 0 : index
    %93 = vector.load %arg1[%c2, %c0_34, %c0_35] : memref<7x32x144xf32, #tpu.memory_space<vmem>>, vector<1x32x144xf32>
    %94 = vector.shape_cast %93 : vector<1x32x144xf32> to vector<32x144xf32>
    %95 = vector.extract_strided_slice %94 {offsets = [0, 0], sizes = [16, 144], strides = [1, 1]} : vector<32x144xf32> to vector<16x144xf32>
    %c4_i32_36 = arith.constant 4 : i32
    %96 = tpu.dynamic_rotate %92 by %c4_i32_36 dim 1 : vector<16x384xf32>, i32 -> vector<16x384xf32>
    %c3_i32_37 = arith.constant 3 : i32
    %97 = tpu.dynamic_rotate %92 by %c3_i32_37 dim 1 : vector<16x384xf32>, i32 -> vector<16x384xf32>
    %c2_i32_38 = arith.constant 2 : i32
    %98 = tpu.dynamic_rotate %92 by %c2_i32_38 dim 1 : vector<16x384xf32>, i32 -> vector<16x384xf32>
    %c1_i32_39 = arith.constant 1 : i32
    %99 = tpu.dynamic_rotate %92 by %c1_i32_39 dim 1 : vector<16x384xf32>, i32 -> vector<16x384xf32>
    %c383_i32_40 = arith.constant 383 : i32
    %100 = tpu.dynamic_rotate %92 by %c383_i32_40 dim 1 : vector<16x384xf32>, i32 -> vector<16x384xf32>
    %c382_i32_41 = arith.constant 382 : i32
    %101 = tpu.dynamic_rotate %92 by %c382_i32_41 dim 1 : vector<16x384xf32>, i32 -> vector<16x384xf32>
    %c381_i32_42 = arith.constant 381 : i32
    %102 = tpu.dynamic_rotate %92 by %c381_i32_42 dim 1 : vector<16x384xf32>, i32 -> vector<16x384xf32>
    %c380_i32_43 = arith.constant 380 : i32
    %103 = tpu.dynamic_rotate %92 by %c380_i32_43 dim 1 : vector<16x384xf32>, i32 -> vector<16x384xf32>
    %104 = tpu.concatenate %96, %97, %98, %99, %92, %100, %101, %102, %103 in 0 : vector<16x384xf32>, vector<16x384xf32>, vector<16x384xf32>, vector<16x384xf32>, vector<16x384xf32>, vector<16x384xf32>, vector<16x384xf32>, vector<16x384xf32>, vector<16x384xf32> -> vector<144x384xf32>
    %cst_44 = arith.constant dense<0.000000e+00> : vector<16x384xf32>
    %105 = tpu.matmul %95, %104, %cst_44 {dimension_numbers = #tpu.dot_dimension_numbers<[1], [0], [0], [1], [0, 0, 1, 1], [], []>} : vector<16x144xf32>, vector<144x384xf32>, vector<16x384xf32> -> vector<16x384xf32>
    %106 = vector.extract_strided_slice %0 {offsets = [0, 4], sizes = [16, 1], strides = [1, 1]} : vector<16x32xf32> to vector<16x1xf32>
    %107 = vector.extract_strided_slice %0 {offsets = [0, 5], sizes = [16, 1], strides = [1, 1]} : vector<16x32xf32> to vector<16x1xf32>
    %cst_45 = arith.constant dense<0.000000e+00> : vector<16x8xf32>
    %108 = tpu.matmul %105, %3, %cst_45 {dimension_numbers = #tpu.dot_dimension_numbers<[1], [0], [0], [1], [0, 0, 1, 1], [], []>} : vector<16x384xf32>, vector<384x8xf32>, vector<16x8xf32> -> vector<16x8xf32>
    %109 = vector.extract_strided_slice %108 {offsets = [0, 0], sizes = [16, 1], strides = [1, 1]} : vector<16x8xf32> to vector<16x1xf32>
    %cst_46 = arith.constant 0.00284090918 : f32
    %110 = vector.broadcast %cst_46 : f32 to vector<16x1xf32>
    %111 = arith.mulf %109, %110 : vector<16x1xf32>
    %112 = arith.mulf %105, %105 : vector<16x384xf32>
    %cst_47 = arith.constant dense<0.000000e+00> : vector<16x8xf32>
    %113 = tpu.matmul %112, %3, %cst_47 {dimension_numbers = #tpu.dot_dimension_numbers<[1], [0], [0], [1], [0, 0, 1, 1], [], []>} : vector<16x384xf32>, vector<384x8xf32>, vector<16x8xf32> -> vector<16x8xf32>
    %114 = vector.extract_strided_slice %113 {offsets = [0, 0], sizes = [16, 1], strides = [1, 1]} : vector<16x8xf32> to vector<16x1xf32>
    %cst_48 = arith.constant 0.00284090918 : f32
    %115 = vector.broadcast %cst_48 : f32 to vector<16x1xf32>
    %116 = arith.mulf %114, %115 : vector<16x1xf32>
    %117 = arith.mulf %111, %111 : vector<16x1xf32>
    %118 = arith.subf %116, %117 : vector<16x1xf32>
    %cst_49 = arith.constant 9.99999974E-6 : f32
    %119 = vector.broadcast %cst_49 : f32 to vector<16x1xf32>
    %120 = arith.addf %118, %119 : vector<16x1xf32>
    %121 = math.rsqrt %120 : vector<16x1xf32>
    %122 = arith.mulf %106, %121 : vector<16x1xf32>
    %123 = vector.broadcast %122 : vector<16x1xf32> to vector<16x384xf32>
    %124 = arith.mulf %105, %123 : vector<16x384xf32>
    %125 = arith.mulf %111, %122 : vector<16x1xf32>
    %126 = arith.subf %107, %125 : vector<16x1xf32>
    %127 = vector.broadcast %126 : vector<16x1xf32> to vector<16x384xf32>
    %128 = arith.addf %124, %127 : vector<16x384xf32>
    %129 = arith.addf %128, %64 : vector<16x384xf32>
    %cst_50 = arith.constant 0.000000e+00 : f32
    %130 = vector.broadcast %cst_50 : f32 to vector<16x384xf32>
    %131 = arith.maximumf %129, %130 : vector<16x384xf32>
    %132 = vector.broadcast %1 : vector<1x384xf32> to vector<16x384xf32>
    %133 = arith.mulf %131, %132 : vector<16x384xf32>
    %c383_i32_51 = arith.constant 383 : i32
    %134 = tpu.dynamic_rotate %133 by %c383_i32_51 dim 1 : vector<16x384xf32>, i32 -> vector<16x384xf32>
    %135 = arith.maximumf %133, %134 : vector<16x384xf32>
    %c382_i32_52 = arith.constant 382 : i32
    %136 = tpu.dynamic_rotate %133 by %c382_i32_52 dim 1 : vector<16x384xf32>, i32 -> vector<16x384xf32>
    %137 = arith.maximumf %135, %136 : vector<16x384xf32>
    %c0_53 = arith.constant 0 : index
    %c0_54 = arith.constant 0 : index
    %138 = vector.load %arg2[%c0_53, %c0_54] : memref<952x384xf32, #tpu.memory_space<vmem>>, vector<384x256xf32>
    %cst_55 = arith.constant dense<0.000000e+00> : vector<16x256xf32>
    %139 = tpu.matmul %137, %138, %cst_55 {dimension_numbers = #tpu.dot_dimension_numbers<[1], [0], [0], [1], [0, 0, 1, 1], [], []>} : vector<16x384xf32>, vector<384x256xf32>, vector<16x256xf32> -> vector<16x256xf32>
    %c3 = arith.constant 3 : index
    %c0_56 = arith.constant 0 : index
    %c0_57 = arith.constant 0 : index
    %140 = vector.load %arg1[%c3, %c0_56, %c0_57] : memref<7x32x144xf32, #tpu.memory_space<vmem>>, vector<1x32x144xf32>
    %141 = vector.shape_cast %140 : vector<1x32x144xf32> to vector<32x144xf32>
    %c4_i32_58 = arith.constant 4 : i32
    %142 = tpu.dynamic_rotate %139 by %c4_i32_58 dim 1 : vector<16x256xf32>, i32 -> vector<16x256xf32>
    %c3_i32_59 = arith.constant 3 : i32
    %143 = tpu.dynamic_rotate %139 by %c3_i32_59 dim 1 : vector<16x256xf32>, i32 -> vector<16x256xf32>
    %c2_i32_60 = arith.constant 2 : i32
    %144 = tpu.dynamic_rotate %139 by %c2_i32_60 dim 1 : vector<16x256xf32>, i32 -> vector<16x256xf32>
    %c1_i32_61 = arith.constant 1 : i32
    %145 = tpu.dynamic_rotate %139 by %c1_i32_61 dim 1 : vector<16x256xf32>, i32 -> vector<16x256xf32>
    %c255_i32 = arith.constant 255 : i32
    %146 = tpu.dynamic_rotate %139 by %c255_i32 dim 1 : vector<16x256xf32>, i32 -> vector<16x256xf32>
    %c254_i32 = arith.constant 254 : i32
    %147 = tpu.dynamic_rotate %139 by %c254_i32 dim 1 : vector<16x256xf32>, i32 -> vector<16x256xf32>
    %c253_i32 = arith.constant 253 : i32
    %148 = tpu.dynamic_rotate %139 by %c253_i32 dim 1 : vector<16x256xf32>, i32 -> vector<16x256xf32>
    %c252_i32 = arith.constant 252 : i32
    %149 = tpu.dynamic_rotate %139 by %c252_i32 dim 1 : vector<16x256xf32>, i32 -> vector<16x256xf32>
    %150 = tpu.concatenate %142, %143, %144, %145, %139, %146, %147, %148, %149 in 0 : vector<16x256xf32>, vector<16x256xf32>, vector<16x256xf32>, vector<16x256xf32>, vector<16x256xf32>, vector<16x256xf32>, vector<16x256xf32>, vector<16x256xf32>, vector<16x256xf32> -> vector<144x256xf32>
    %cst_62 = arith.constant dense<0.000000e+00> : vector<32x256xf32>
    %151 = tpu.matmul %141, %150, %cst_62 {dimension_numbers = #tpu.dot_dimension_numbers<[1], [0], [0], [1], [0, 0, 1, 1], [], []>} : vector<32x144xf32>, vector<144x256xf32>, vector<32x256xf32> -> vector<32x256xf32>
    %152 = vector.extract_strided_slice %151 {offsets = [16, 0], sizes = [16, 256], strides = [1, 1]} : vector<32x256xf32> to vector<16x256xf32>
    %153 = vector.extract_strided_slice %0 {offsets = [0, 11], sizes = [16, 1], strides = [1, 1]} : vector<16x32xf32> to vector<16x1xf32>
    %154 = vector.broadcast %153 : vector<16x1xf32> to vector<16x256xf32>
    %155 = arith.addf %152, %154 : vector<16x256xf32>
    %156 = vector.extract_strided_slice %151 {offsets = [0, 0], sizes = [16, 256], strides = [1, 1]} : vector<32x256xf32> to vector<16x256xf32>
    %157 = vector.extract_strided_slice %0 {offsets = [0, 7], sizes = [16, 1], strides = [1, 1]} : vector<16x32xf32> to vector<16x1xf32>
    %158 = vector.extract_strided_slice %0 {offsets = [0, 8], sizes = [16, 1], strides = [1, 1]} : vector<16x32xf32> to vector<16x1xf32>
    %cst_63 = arith.constant dense<0.000000e+00> : vector<16x8xf32>
    %159 = tpu.matmul %156, %4, %cst_63 {dimension_numbers = #tpu.dot_dimension_numbers<[1], [0], [0], [1], [0, 0, 1, 1], [], []>} : vector<16x256xf32>, vector<256x8xf32>, vector<16x8xf32> -> vector<16x8xf32>
    %160 = vector.extract_strided_slice %159 {offsets = [0, 1], sizes = [16, 1], strides = [1, 1]} : vector<16x8xf32> to vector<16x1xf32>
    %cst_64 = arith.constant 0.00574712642 : f32
    %161 = vector.broadcast %cst_64 : f32 to vector<16x1xf32>
    %162 = arith.mulf %160, %161 : vector<16x1xf32>
    %163 = arith.mulf %156, %156 : vector<16x256xf32>
    %cst_65 = arith.constant dense<0.000000e+00> : vector<16x8xf32>
    %164 = tpu.matmul %163, %4, %cst_65 {dimension_numbers = #tpu.dot_dimension_numbers<[1], [0], [0], [1], [0, 0, 1, 1], [], []>} : vector<16x256xf32>, vector<256x8xf32>, vector<16x8xf32> -> vector<16x8xf32>
    %165 = vector.extract_strided_slice %164 {offsets = [0, 1], sizes = [16, 1], strides = [1, 1]} : vector<16x8xf32> to vector<16x1xf32>
    %cst_66 = arith.constant 0.00574712642 : f32
    %166 = vector.broadcast %cst_66 : f32 to vector<16x1xf32>
    %167 = arith.mulf %165, %166 : vector<16x1xf32>
    %168 = arith.mulf %162, %162 : vector<16x1xf32>
    %169 = arith.subf %167, %168 : vector<16x1xf32>
    %cst_67 = arith.constant 9.99999974E-6 : f32
    %170 = vector.broadcast %cst_67 : f32 to vector<16x1xf32>
    %171 = arith.addf %169, %170 : vector<16x1xf32>
    %172 = math.rsqrt %171 : vector<16x1xf32>
    %173 = arith.mulf %157, %172 : vector<16x1xf32>
    %174 = vector.broadcast %173 : vector<16x1xf32> to vector<16x256xf32>
    %175 = arith.mulf %156, %174 : vector<16x256xf32>
    %176 = arith.mulf %162, %173 : vector<16x1xf32>
    %177 = arith.subf %158, %176 : vector<16x1xf32>
    %178 = vector.broadcast %177 : vector<16x1xf32> to vector<16x256xf32>
    %179 = arith.addf %175, %178 : vector<16x256xf32>
    %cst_68 = arith.constant 0.000000e+00 : f32
    %180 = vector.broadcast %cst_68 : f32 to vector<16x256xf32>
    %181 = arith.maximumf %179, %180 : vector<16x256xf32>
    %182 = vector.broadcast %2 : vector<1x256xf32> to vector<16x256xf32>
    %183 = arith.mulf %181, %182 : vector<16x256xf32>
    %c4 = arith.constant 4 : index
    %c0_69 = arith.constant 0 : index
    %c0_70 = arith.constant 0 : index
    %184 = vector.load %arg1[%c4, %c0_69, %c0_70] : memref<7x32x144xf32, #tpu.memory_space<vmem>>, vector<1x32x144xf32>
    %185 = vector.shape_cast %184 : vector<1x32x144xf32> to vector<32x144xf32>
    %186 = vector.extract_strided_slice %185 {offsets = [0, 0], sizes = [16, 144], strides = [1, 1]} : vector<32x144xf32> to vector<16x144xf32>
    %c4_i32_71 = arith.constant 4 : i32
    %187 = tpu.dynamic_rotate %183 by %c4_i32_71 dim 1 : vector<16x256xf32>, i32 -> vector<16x256xf32>
    %c3_i32_72 = arith.constant 3 : i32
    %188 = tpu.dynamic_rotate %183 by %c3_i32_72 dim 1 : vector<16x256xf32>, i32 -> vector<16x256xf32>
    %c2_i32_73 = arith.constant 2 : i32
    %189 = tpu.dynamic_rotate %183 by %c2_i32_73 dim 1 : vector<16x256xf32>, i32 -> vector<16x256xf32>
    %c1_i32_74 = arith.constant 1 : i32
    %190 = tpu.dynamic_rotate %183 by %c1_i32_74 dim 1 : vector<16x256xf32>, i32 -> vector<16x256xf32>
    %c255_i32_75 = arith.constant 255 : i32
    %191 = tpu.dynamic_rotate %183 by %c255_i32_75 dim 1 : vector<16x256xf32>, i32 -> vector<16x256xf32>
    %c254_i32_76 = arith.constant 254 : i32
    %192 = tpu.dynamic_rotate %183 by %c254_i32_76 dim 1 : vector<16x256xf32>, i32 -> vector<16x256xf32>
    %c253_i32_77 = arith.constant 253 : i32
    %193 = tpu.dynamic_rotate %183 by %c253_i32_77 dim 1 : vector<16x256xf32>, i32 -> vector<16x256xf32>
    %c252_i32_78 = arith.constant 252 : i32
    %194 = tpu.dynamic_rotate %183 by %c252_i32_78 dim 1 : vector<16x256xf32>, i32 -> vector<16x256xf32>
    %195 = tpu.concatenate %187, %188, %189, %190, %183, %191, %192, %193, %194 in 0 : vector<16x256xf32>, vector<16x256xf32>, vector<16x256xf32>, vector<16x256xf32>, vector<16x256xf32>, vector<16x256xf32>, vector<16x256xf32>, vector<16x256xf32>, vector<16x256xf32> -> vector<144x256xf32>
    %cst_79 = arith.constant dense<0.000000e+00> : vector<16x256xf32>
    %196 = tpu.matmul %186, %195, %cst_79 {dimension_numbers = #tpu.dot_dimension_numbers<[1], [0], [0], [1], [0, 0, 1, 1], [], []>} : vector<16x144xf32>, vector<144x256xf32>, vector<16x256xf32> -> vector<16x256xf32>
    %197 = vector.extract_strided_slice %0 {offsets = [0, 9], sizes = [16, 1], strides = [1, 1]} : vector<16x32xf32> to vector<16x1xf32>
    %198 = vector.extract_strided_slice %0 {offsets = [0, 10], sizes = [16, 1], strides = [1, 1]} : vector<16x32xf32> to vector<16x1xf32>
    %cst_80 = arith.constant dense<0.000000e+00> : vector<16x8xf32>
    %199 = tpu.matmul %196, %4, %cst_80 {dimension_numbers = #tpu.dot_dimension_numbers<[1], [0], [0], [1], [0, 0, 1, 1], [], []>} : vector<16x256xf32>, vector<256x8xf32>, vector<16x8xf32> -> vector<16x8xf32>
    %200 = vector.extract_strided_slice %199 {offsets = [0, 1], sizes = [16, 1], strides = [1, 1]} : vector<16x8xf32> to vector<16x1xf32>
    %cst_81 = arith.constant 0.00574712642 : f32
    %201 = vector.broadcast %cst_81 : f32 to vector<16x1xf32>
    %202 = arith.mulf %200, %201 : vector<16x1xf32>
    %203 = arith.mulf %196, %196 : vector<16x256xf32>
    %cst_82 = arith.constant dense<0.000000e+00> : vector<16x8xf32>
    %204 = tpu.matmul %203, %4, %cst_82 {dimension_numbers = #tpu.dot_dimension_numbers<[1], [0], [0], [1], [0, 0, 1, 1], [], []>} : vector<16x256xf32>, vector<256x8xf32>, vector<16x8xf32> -> vector<16x8xf32>
    %205 = vector.extract_strided_slice %204 {offsets = [0, 1], sizes = [16, 1], strides = [1, 1]} : vector<16x8xf32> to vector<16x1xf32>
    %cst_83 = arith.constant 0.00574712642 : f32
    %206 = vector.broadcast %cst_83 : f32 to vector<16x1xf32>
    %207 = arith.mulf %205, %206 : vector<16x1xf32>
    %208 = arith.mulf %202, %202 : vector<16x1xf32>
    %209 = arith.subf %207, %208 : vector<16x1xf32>
    %cst_84 = arith.constant 9.99999974E-6 : f32
    %210 = vector.broadcast %cst_84 : f32 to vector<16x1xf32>
    %211 = arith.addf %209, %210 : vector<16x1xf32>
    %212 = math.rsqrt %211 : vector<16x1xf32>
    %213 = arith.mulf %197, %212 : vector<16x1xf32>
    %214 = vector.broadcast %213 : vector<16x1xf32> to vector<16x256xf32>
    %215 = arith.mulf %196, %214 : vector<16x256xf32>
    %216 = arith.mulf %202, %213 : vector<16x1xf32>
    %217 = arith.subf %198, %216 : vector<16x1xf32>
    %218 = vector.broadcast %217 : vector<16x1xf32> to vector<16x256xf32>
    %219 = arith.addf %215, %218 : vector<16x256xf32>
    %220 = arith.addf %219, %155 : vector<16x256xf32>
    %cst_85 = arith.constant 0.000000e+00 : f32
    %221 = vector.broadcast %cst_85 : f32 to vector<16x256xf32>
    %222 = arith.maximumf %220, %221 : vector<16x256xf32>
    %223 = vector.broadcast %2 : vector<1x256xf32> to vector<16x256xf32>
    %224 = arith.mulf %222, %223 : vector<16x256xf32>
    %c5 = arith.constant 5 : index
    %c0_86 = arith.constant 0 : index
    %c0_87 = arith.constant 0 : index
    %225 = vector.load %arg1[%c5, %c0_86, %c0_87] : memref<7x32x144xf32, #tpu.memory_space<vmem>>, vector<1x32x144xf32>
    %226 = vector.shape_cast %225 : vector<1x32x144xf32> to vector<32x144xf32>
    %c4_i32_88 = arith.constant 4 : i32
    %227 = tpu.dynamic_rotate %224 by %c4_i32_88 dim 1 : vector<16x256xf32>, i32 -> vector<16x256xf32>
    %c3_i32_89 = arith.constant 3 : i32
    %228 = tpu.dynamic_rotate %224 by %c3_i32_89 dim 1 : vector<16x256xf32>, i32 -> vector<16x256xf32>
    %c2_i32_90 = arith.constant 2 : i32
    %229 = tpu.dynamic_rotate %224 by %c2_i32_90 dim 1 : vector<16x256xf32>, i32 -> vector<16x256xf32>
    %c1_i32_91 = arith.constant 1 : i32
    %230 = tpu.dynamic_rotate %224 by %c1_i32_91 dim 1 : vector<16x256xf32>, i32 -> vector<16x256xf32>
    %c255_i32_92 = arith.constant 255 : i32
    %231 = tpu.dynamic_rotate %224 by %c255_i32_92 dim 1 : vector<16x256xf32>, i32 -> vector<16x256xf32>
    %c254_i32_93 = arith.constant 254 : i32
    %232 = tpu.dynamic_rotate %224 by %c254_i32_93 dim 1 : vector<16x256xf32>, i32 -> vector<16x256xf32>
    %c253_i32_94 = arith.constant 253 : i32
    %233 = tpu.dynamic_rotate %224 by %c253_i32_94 dim 1 : vector<16x256xf32>, i32 -> vector<16x256xf32>
    %c252_i32_95 = arith.constant 252 : i32
    %234 = tpu.dynamic_rotate %224 by %c252_i32_95 dim 1 : vector<16x256xf32>, i32 -> vector<16x256xf32>
    %235 = tpu.concatenate %227, %228, %229, %230, %224, %231, %232, %233, %234 in 0 : vector<16x256xf32>, vector<16x256xf32>, vector<16x256xf32>, vector<16x256xf32>, vector<16x256xf32>, vector<16x256xf32>, vector<16x256xf32>, vector<16x256xf32>, vector<16x256xf32> -> vector<144x256xf32>
    %cst_96 = arith.constant dense<0.000000e+00> : vector<32x256xf32>
    %236 = tpu.matmul %226, %235, %cst_96 {dimension_numbers = #tpu.dot_dimension_numbers<[1], [0], [0], [1], [0, 0, 1, 1], [], []>} : vector<32x144xf32>, vector<144x256xf32>, vector<32x256xf32> -> vector<32x256xf32>
    %237 = vector.extract_strided_slice %236 {offsets = [16, 0], sizes = [16, 256], strides = [1, 1]} : vector<32x256xf32> to vector<16x256xf32>
    %238 = vector.extract_strided_slice %0 {offsets = [0, 16], sizes = [16, 1], strides = [1, 1]} : vector<16x32xf32> to vector<16x1xf32>
    %239 = vector.broadcast %238 : vector<16x1xf32> to vector<16x256xf32>
    %240 = arith.addf %237, %239 : vector<16x256xf32>
    %241 = vector.extract_strided_slice %236 {offsets = [0, 0], sizes = [16, 256], strides = [1, 1]} : vector<32x256xf32> to vector<16x256xf32>
    %242 = vector.extract_strided_slice %0 {offsets = [0, 12], sizes = [16, 1], strides = [1, 1]} : vector<16x32xf32> to vector<16x1xf32>
    %243 = vector.extract_strided_slice %0 {offsets = [0, 13], sizes = [16, 1], strides = [1, 1]} : vector<16x32xf32> to vector<16x1xf32>
    %cst_97 = arith.constant dense<0.000000e+00> : vector<16x8xf32>
    %244 = tpu.matmul %241, %4, %cst_97 {dimension_numbers = #tpu.dot_dimension_numbers<[1], [0], [0], [1], [0, 0, 1, 1], [], []>} : vector<16x256xf32>, vector<256x8xf32>, vector<16x8xf32> -> vector<16x8xf32>
    %245 = vector.extract_strided_slice %244 {offsets = [0, 1], sizes = [16, 1], strides = [1, 1]} : vector<16x8xf32> to vector<16x1xf32>
    %cst_98 = arith.constant 0.00574712642 : f32
    %246 = vector.broadcast %cst_98 : f32 to vector<16x1xf32>
    %247 = arith.mulf %245, %246 : vector<16x1xf32>
    %248 = arith.mulf %241, %241 : vector<16x256xf32>
    %cst_99 = arith.constant dense<0.000000e+00> : vector<16x8xf32>
    %249 = tpu.matmul %248, %4, %cst_99 {dimension_numbers = #tpu.dot_dimension_numbers<[1], [0], [0], [1], [0, 0, 1, 1], [], []>} : vector<16x256xf32>, vector<256x8xf32>, vector<16x8xf32> -> vector<16x8xf32>
    %250 = vector.extract_strided_slice %249 {offsets = [0, 1], sizes = [16, 1], strides = [1, 1]} : vector<16x8xf32> to vector<16x1xf32>
    %cst_100 = arith.constant 0.00574712642 : f32
    %251 = vector.broadcast %cst_100 : f32 to vector<16x1xf32>
    %252 = arith.mulf %250, %251 : vector<16x1xf32>
    %253 = arith.mulf %247, %247 : vector<16x1xf32>
    %254 = arith.subf %252, %253 : vector<16x1xf32>
    %cst_101 = arith.constant 9.99999974E-6 : f32
    %255 = vector.broadcast %cst_101 : f32 to vector<16x1xf32>
    %256 = arith.addf %254, %255 : vector<16x1xf32>
    %257 = math.rsqrt %256 : vector<16x1xf32>
    %258 = arith.mulf %242, %257 : vector<16x1xf32>
    %259 = vector.broadcast %258 : vector<16x1xf32> to vector<16x256xf32>
    %260 = arith.mulf %241, %259 : vector<16x256xf32>
    %261 = arith.mulf %247, %258 : vector<16x1xf32>
    %262 = arith.subf %243, %261 : vector<16x1xf32>
    %263 = vector.broadcast %262 : vector<16x1xf32> to vector<16x256xf32>
    %264 = arith.addf %260, %263 : vector<16x256xf32>
    %cst_102 = arith.constant 0.000000e+00 : f32
    %265 = vector.broadcast %cst_102 : f32 to vector<16x256xf32>
    %266 = arith.maximumf %264, %265 : vector<16x256xf32>
    %267 = vector.broadcast %2 : vector<1x256xf32> to vector<16x256xf32>
    %268 = arith.mulf %266, %267 : vector<16x256xf32>
    %c6 = arith.constant 6 : index
    %c0_103 = arith.constant 0 : index
    %c0_104 = arith.constant 0 : index
    %269 = vector.load %arg1[%c6, %c0_103, %c0_104] : memref<7x32x144xf32, #tpu.memory_space<vmem>>, vector<1x32x144xf32>
    %270 = vector.shape_cast %269 : vector<1x32x144xf32> to vector<32x144xf32>
    %271 = vector.extract_strided_slice %270 {offsets = [0, 0], sizes = [16, 144], strides = [1, 1]} : vector<32x144xf32> to vector<16x144xf32>
    %c4_i32_105 = arith.constant 4 : i32
    %272 = tpu.dynamic_rotate %268 by %c4_i32_105 dim 1 : vector<16x256xf32>, i32 -> vector<16x256xf32>
    %c3_i32_106 = arith.constant 3 : i32
    %273 = tpu.dynamic_rotate %268 by %c3_i32_106 dim 1 : vector<16x256xf32>, i32 -> vector<16x256xf32>
    %c2_i32_107 = arith.constant 2 : i32
    %274 = tpu.dynamic_rotate %268 by %c2_i32_107 dim 1 : vector<16x256xf32>, i32 -> vector<16x256xf32>
    %c1_i32_108 = arith.constant 1 : i32
    %275 = tpu.dynamic_rotate %268 by %c1_i32_108 dim 1 : vector<16x256xf32>, i32 -> vector<16x256xf32>
    %c255_i32_109 = arith.constant 255 : i32
    %276 = tpu.dynamic_rotate %268 by %c255_i32_109 dim 1 : vector<16x256xf32>, i32 -> vector<16x256xf32>
    %c254_i32_110 = arith.constant 254 : i32
    %277 = tpu.dynamic_rotate %268 by %c254_i32_110 dim 1 : vector<16x256xf32>, i32 -> vector<16x256xf32>
    %c253_i32_111 = arith.constant 253 : i32
    %278 = tpu.dynamic_rotate %268 by %c253_i32_111 dim 1 : vector<16x256xf32>, i32 -> vector<16x256xf32>
    %c252_i32_112 = arith.constant 252 : i32
    %279 = tpu.dynamic_rotate %268 by %c252_i32_112 dim 1 : vector<16x256xf32>, i32 -> vector<16x256xf32>
    %280 = tpu.concatenate %272, %273, %274, %275, %268, %276, %277, %278, %279 in 0 : vector<16x256xf32>, vector<16x256xf32>, vector<16x256xf32>, vector<16x256xf32>, vector<16x256xf32>, vector<16x256xf32>, vector<16x256xf32>, vector<16x256xf32>, vector<16x256xf32> -> vector<144x256xf32>
    %cst_113 = arith.constant dense<0.000000e+00> : vector<16x256xf32>
    %281 = tpu.matmul %271, %280, %cst_113 {dimension_numbers = #tpu.dot_dimension_numbers<[1], [0], [0], [1], [0, 0, 1, 1], [], []>} : vector<16x144xf32>, vector<144x256xf32>, vector<16x256xf32> -> vector<16x256xf32>
    %282 = vector.extract_strided_slice %0 {offsets = [0, 14], sizes = [16, 1], strides = [1, 1]} : vector<16x32xf32> to vector<16x1xf32>
    %283 = vector.extract_strided_slice %0 {offsets = [0, 15], sizes = [16, 1], strides = [1, 1]} : vector<16x32xf32> to vector<16x1xf32>
    %cst_114 = arith.constant dense<0.000000e+00> : vector<16x8xf32>
    %284 = tpu.matmul %281, %4, %cst_114 {dimension_numbers = #tpu.dot_dimension_numbers<[1], [0], [0], [1], [0, 0, 1, 1], [], []>} : vector<16x256xf32>, vector<256x8xf32>, vector<16x8xf32> -> vector<16x8xf32>
    %285 = vector.extract_strided_slice %284 {offsets = [0, 1], sizes = [16, 1], strides = [1, 1]} : vector<16x8xf32> to vector<16x1xf32>
    %cst_115 = arith.constant 0.00574712642 : f32
    %286 = vector.broadcast %cst_115 : f32 to vector<16x1xf32>
    %287 = arith.mulf %285, %286 : vector<16x1xf32>
    %288 = arith.mulf %281, %281 : vector<16x256xf32>
    %cst_116 = arith.constant dense<0.000000e+00> : vector<16x8xf32>
    %289 = tpu.matmul %288, %4, %cst_116 {dimension_numbers = #tpu.dot_dimension_numbers<[1], [0], [0], [1], [0, 0, 1, 1], [], []>} : vector<16x256xf32>, vector<256x8xf32>, vector<16x8xf32> -> vector<16x8xf32>
    %290 = vector.extract_strided_slice %289 {offsets = [0, 1], sizes = [16, 1], strides = [1, 1]} : vector<16x8xf32> to vector<16x1xf32>
    %cst_117 = arith.constant 0.00574712642 : f32
    %291 = vector.broadcast %cst_117 : f32 to vector<16x1xf32>
    %292 = arith.mulf %290, %291 : vector<16x1xf32>
    %293 = arith.mulf %287, %287 : vector<16x1xf32>
    %294 = arith.subf %292, %293 : vector<16x1xf32>
    %cst_118 = arith.constant 9.99999974E-6 : f32
    %295 = vector.broadcast %cst_118 : f32 to vector<16x1xf32>
    %296 = arith.addf %294, %295 : vector<16x1xf32>
    %297 = math.rsqrt %296 : vector<16x1xf32>
    %298 = arith.mulf %282, %297 : vector<16x1xf32>
    %299 = vector.broadcast %298 : vector<16x1xf32> to vector<16x256xf32>
    %300 = arith.mulf %281, %299 : vector<16x256xf32>
    %301 = arith.mulf %287, %298 : vector<16x1xf32>
    %302 = arith.subf %283, %301 : vector<16x1xf32>
    %303 = vector.broadcast %302 : vector<16x1xf32> to vector<16x256xf32>
    %304 = arith.addf %300, %303 : vector<16x256xf32>
    %305 = arith.addf %304, %240 : vector<16x256xf32>
    %cst_119 = arith.constant 0.000000e+00 : f32
    %306 = vector.broadcast %cst_119 : f32 to vector<16x256xf32>
    %307 = arith.maximumf %305, %306 : vector<16x256xf32>
    %308 = vector.broadcast %2 : vector<1x256xf32> to vector<16x256xf32>
    %309 = arith.mulf %307, %308 : vector<16x256xf32>
    %c384 = arith.constant 384 : index
    %c0_120 = arith.constant 0 : index
    %310 = vector.load %arg2[%c384, %c0_120] : memref<952x384xf32, #tpu.memory_space<vmem>>, vector<256x256xf32>
    %c896 = arith.constant 896 : index
    %c0_121 = arith.constant 0 : index
    %311 = vector.load %arg2[%c896, %c0_121] : memref<952x384xf32, #tpu.memory_space<vmem>>, vector<16x256xf32>
    %c640 = arith.constant 640 : index
    %c0_122 = arith.constant 0 : index
    %312 = vector.load %arg2[%c640, %c0_122] : memref<952x384xf32, #tpu.memory_space<vmem>>, vector<256x128xf32>
    %c944 = arith.constant 944 : index
    %c0_123 = arith.constant 0 : index
    %313 = vector.load %arg2[%c944, %c0_123] : memref<952x384xf32, #tpu.memory_space<vmem>>, vector<1x128xf32>
    %cst_124 = arith.constant dense<0.000000e+00> : vector<16x256xf32>
    %314 = tpu.matmul %309, %310, %cst_124 {dimension_numbers = #tpu.dot_dimension_numbers<[1], [0], [0], [1], [0, 0, 1, 1], [], []>} : vector<16x256xf32>, vector<256x256xf32>, vector<16x256xf32> -> vector<16x256xf32>
    %315 = arith.mulf %314, %311 : vector<16x256xf32>
    %cst_125 = arith.constant dense<0.000000e+00> : vector<16x128xf32>
    %316 = tpu.matmul %315, %312, %cst_125 {dimension_numbers = #tpu.dot_dimension_numbers<[1], [0], [0], [1], [0, 0, 1, 1], [], []>} : vector<16x256xf32>, vector<256x128xf32>, vector<16x128xf32> -> vector<16x128xf32>
    %cst_126 = arith.constant dense<0.000000e+00> : vector<128xf32>
    %317 = vector.multi_reduction <add>, %316, %cst_126 [0] : vector<16x128xf32> to vector<128xf32>
    %318 = vector.shape_cast %317 : vector<128xf32> to vector<1x128xf32>
    %319 = arith.addf %318, %313 : vector<1x128xf32>
    %320 = vector.shape_cast %319 : vector<1x128xf32> to vector<1x128xf32>
    %321 = vector.broadcast %320 : vector<1x128xf32> to vector<8x128xf32>
    %c0_127 = arith.constant 0 : index
    %c0_128 = arith.constant 0 : index
    %322 = vector.load %arg4[%c0_127, %c0_128] : memref<8x128xf32, #tpu.memory_space<vmem>>, vector<8x128xf32>
    tpu.vector_store %arg4[%c0_127, %c0_128], %321 {strides = array<i32>} : memref<8x128xf32, #tpu.memory_space<vmem>>, vector<8x128xf32>,
    return
  }
}

</mosaic_0001>

<llo_original>
// kernel: squeeze.3
$region0: #{squeeze.3}
  %s0 = inlined_call_operand.vmem [shape: f32[16], index: 0, kind: input, shape index: {}]
  %s1 = inlined_call_operand.hbm [shape: f32[2,8], index: 1, kind: output, shape index: {}]
  $region1: #{squeeze.3} parent=0
    #allocation0 [shape = 'u8[1024]{0}', space=vmem, size = 0x400, scoped, tag = 'operand span for operand 1']
    #allocation1 [shape = 's32[1]{0}', space=sflag, size = 0x4, scoped, tag = 'scoped memory for squeeze.3']
    #allocation2 [shape = 'u8[4096]{0}', space=vmem, size = 0x1000, scoped, tag = 'scoped mem for output reshape']
    #allocation3 [shape = 'u8[4096]{0}', space=vmem, size = 0x1000, scoped, tag = 'scoped mem for input reshape']
    %2 = vsyncpa [#allocation1], 0
    %s4 = sshll.u32 1, 1
    %s5 = ssub.s32 %s4, 1
    %v6 = vld [vmem:[%s0] sm:%s5]
    %7 = vst [vmem:[#allocation3] sm:%s5] %v6
    %v8 = vld [vmem:[#allocation3] sm:$0x1]
    %vm9 = vcmask 64512
    %10 = vst.msk [vmem:[#allocation2] sm:$0x1] %vm9, %v8
    %v11 = vld [vmem:[#allocation3] sm:$0x1]
    %12 = vrot.lane.b32.xlu0 %v11, 120
    %v13 = vpop.permute.xlu0 %12
    %vm14 = vcmask 64512
    %s15 = scalar_lea.vmem [#allocation2], 1
    %16 = vst.msk [vmem:[%s15] sm:$0x1] %vm14, %v13
    %s18 = sshll.u32 1, 2
    %s19 = ssub.s32 %s18, 1
    %v21 = vld [vmem:[#allocation2] sm:%s19]
    %s22 = sshll.u32 1, 2
    %s23 = ssub.s32 %s22, 1
    %24 = vst [vmem:[#allocation0] sm:%s23] %v21
    %s26 = ssub.s32 32, 32
    %27 = vsyncadd [#allocation1], %s26
    %s29 = sshll.u32 [#allocation0], 4
    %s30 = int_to_ptr.vmem [resolvable:$true] %s29
    %32 = dma.vmem_to_hbm [thread:$0]  %s30, 32, %s1, [#allocation1]
    %33 = dma.done [#allocation1], 32
    %34 = vsyncpa [#allocation1], 1

// kernel: resnet1d_forward.1
$region0: #{resnet1d_forward.1}
  #allocation0 [shape = 'u32[]', space=smem, size = 0x4, offset = 0x4, fixed_abs, tag = 'smem constant byte address 0x4 - core index']
  #allocation1 [shape = 'u32[144,128]{1,0:T(1,128)}', space=vmem, size = 0x12000, scoped, tag = 'internal scratch']
  %s0 = inlined_call_operand.vmem [shape: f32[8,384], index: 0, kind: input, shape index: {}]
  %s1 = inlined_call_operand.hbm [shape: f32[7,32,144], index: 1, kind: input, shape index: {}]
  %s2 = inlined_call_operand.hbm [shape: f32[952,384], index: 2, kind: input, shape index: {}]
  %s3 = inlined_call_operand.vmem [shape: f32[384,8], index: 3, kind: input, shape index: {}]
  %s4 = inlined_call_operand.vmem [shape: f32[8,128], index: 4, kind: output, shape index: {}]
  %s5 = sld [smem:[#allocation0]]
  $region34: #{resnet1d_forward.1} parent=0
    _
  %s7 = ssub.s32 1, %s5
  %s8 = scalar_select 0, %s7, %s5
  $region1: #{resnet1d_forward.1} parent=0
    #allocation2 [shape = 'u8[229376]{0}', space=vmem, size = 0x38000, scoped, tag = 'input window, operand 1, single buffered']
    #allocation3 [shape = 's32[1]{0}', space=sflag, size = 0x4, scoped, tag = 'scoped memory for resnet1d_forward.1']
    #allocation4 [shape = 'u8[1462272]{0}', space=vmem, size = 0x165000, scoped, tag = 'input window, operand 2, single buffered']
    #allocation5 [shape = 's32[1]{0}', space=sflag, size = 0x4, scoped, tag = 'scoped memory for resnet1d_forward.1']
    %9 = vsyncpa [#allocation3], 0
    %10 = vsyncpa [#allocation5], 0
    // Predicated region
    $region2: #{resnet1d_forward.1} parent=1 // pred_check
      _
    $region3: #{resnet1d_forward.1} parent=1 // pred_check_branch
      %12 = sbr.rel (0) target = $region5
    $region4: #{resnet1d_forward.1} parent=1 // pred_region
      _
    $region5: #{resnet1d_forward.1} parent=1 // pred_fallthru
      _
    // Predicated region
    $region6: #{resnet1d_forward.1} parent=1 // pred_check
      _
    $region7: #{resnet1d_forward.1} parent=1 // pred_check_branch
      %14 = sbr.rel (0) target = $region9
    $region8: #{resnet1d_forward.1} parent=1 // pred_region
      %s16 = ssub.s32 7168, 7168
      %17 = vsyncadd [#allocation3], %s16
      %s18 = sshll.u32 [#allocation2], 4
      %s19 = int_to_ptr.vmem [resolvable:$true] %s18
      %24 = dma.hbm_to_vmem [thread:$0]  %s1, 7168, %s19, [#allocation3], 256, 256, 16
    $region9: #{resnet1d_forward.1} parent=1 // pred_fallthru
      _
    // Predicated region
    $region10: #{resnet1d_forward.1} parent=1 // pred_check
      _
    $region11: #{resnet1d_forward.1} parent=1 // pred_check_branch
      %26 = sbr.rel (0) target = $region13
    $region12: #{resnet1d_forward.1} parent=1 // pred_region
      %s28 = ssub.s32 45696, 45696
      %29 = vsyncadd [#allocation5], %s28
      %s30 = sshll.u32 [#allocation4], 4
      %s31 = int_to_ptr.vmem [resolvable:$true] %s30
      %36 = dma.hbm_to_vmem [thread:$0]  %s2, 45696, %s31, [#allocation5], 384, 384, 24
    $region13: #{resnet1d_forward.1} parent=1 // pred_fallthru
      _
    // Predicated region
    $region14: #{resnet1d_forward.1} parent=1 // pred_check
      _
    $region15: #{resnet1d_forward.1} parent=1 // pred_check_branch
      %38 = sbr.rel (0) target = $region17
    $region16: #{resnet1d_forward.1} parent=1 // pred_region
      _
    $region17: #{resnet1d_forward.1} parent=1 // pred_fallthru
      _
    // Predicated region
    $region18: #{resnet1d_forward.1} parent=1 // pred_check
      _
    $region19: #{resnet1d_forward.1} parent=1 // pred_check_branch
      %40 = sbr.rel (0) target = $region21
    $region20: #{resnet1d_forward.1} parent=1 // pred_region
      %41 = dma.done [#allocation3], 7168
    $region21: #{resnet1d_forward.1} parent=1 // pred_fallthru
      _
    // Predicated region
    $region22: #{resnet1d_forward.1} parent=1 // pred_check
      _
    $region23: #{resnet1d_forward.1} parent=1 // pred_check_branch
      %43 = sbr.rel (0) target = $region25
    $region24: #{resnet1d_forward.1} parent=1 // pred_region
      %44 = dma.done [#allocation5], 45696
    $region25: #{resnet1d_forward.1} parent=1 // pred_fallthru
      _
    %v45 = vld [vmem:[#allocation4 + $0xab0] sm:$0xff]
    %v46 = vld [vmem:[#allocation4 + $0xac8] sm:$0xff]
    %s47 = scalar_lea.vmem [#allocation4], 2784
    %v48 = vld [vmem:[%s47] ss:$8 sm:$0x7]
    %s49 = scalar_lea.vmem [#allocation4], 2808
    %v50 = vld [vmem:[%s49] ss:$8 sm:$0x3]
    %v51 = vld [vmem:[%s3] sm:$0xff]
    %v52 = vld [vmem:[%s3 + $0x8] sm:$0xff]
    %v53 = vld [vmem:[%s3 + $0x10] sm:$0xff]
    %v54 = vld [vmem:[%s3 + $0x18] sm:$0xff]
    %v55 = vld [vmem:[%s3 + $0x20] sm:$0xff]
    %v56 = vld [vmem:[%s3 + $0x28] sm:$0xff]
    %v57 = vld [vmem:[%s3 + $0x30] sm:$0xff]
    %v58 = vld [vmem:[%s3 + $0x38] sm:$0xff]
    %v59 = vld [vmem:[%s3 + $0x40] sm:$0xff]
    %v60 = vld [vmem:[%s3 + $0x48] sm:$0xff]
    %v61 = vld [vmem:[%s3 + $0x50] sm:$0xff]
    %v62 = vld [vmem:[%s3 + $0x58] sm:$0xff]
    %v63 = vld [vmem:[%s3 + $0x60] sm:$0xff]
    %v64 = vld [vmem:[%s3 + $0x68] sm:$0xff]
    %v65 = vld [vmem:[%s3 + $0x70] sm:$0xff]
    %v66 = vld [vmem:[%s3 + $0x78] sm:$0xff]
    %v67 = vld [vmem:[%s3 + $0x80] sm:$0xff]
    %v68 = vld [vmem:[%s3 + $0x88] sm:$0xff]
    %v69 = vld [vmem:[%s3 + $0x90] sm:$0xff]
    %v70 = vld [vmem:[%s3 + $0x98] sm:$0xff]
    %v71 = vld [vmem:[%s3 + $0xa0] sm:$0xff]
    %v72 = vld [vmem:[%s3 + $0xa8] sm:$0xff]
    %v73 = vld [vmem:[%s3 + $0xb0] sm:$0xff]
    %v74 = vld [vmem:[%s3 + $0xb8] sm:$0xff]
    %v75 = vld [vmem:[%s3 + $0xc0] sm:$0xff]
    %v76 = vld [vmem:[%s3 + $0xc8] sm:$0xff]
    %v77 = vld [vmem:[%s3 + $0xd0] sm:$0xff]
    %v78 = vld [vmem:[%s3 + $0xd8] sm:$0xff]
    %v79 = vld [vmem:[%s3 + $0xe0] sm:$0xff]
    %v80 = vld [vmem:[%s3 + $0xe8] sm:$0xff]
    %v81 = vld [vmem:[%s3 + $0xf0] sm:$0xff]
    %v82 = vld [vmem:[%s3 + $0xf8] sm:$0xff]
    %v83 = vld [vmem:[%s3 + $0x100] sm:$0xff]
    %v84 = vld [vmem:[%s3 + $0x108] sm:$0xff]
    %v85 = vld [vmem:[%s3 + $0x110] sm:$0xff]
    %v86 = vld [vmem:[%s3 + $0x118] sm:$0xff]
    %v87 = vld [vmem:[%s3 + $0x120] sm:$0xff]
    %v88 = vld [vmem:[%s3 + $0x128] sm:$0xff]
    %v89 = vld [vmem:[%s3 + $0x130] sm:$0xff]
    %v90 = vld [vmem:[%s3 + $0x138] sm:$0xff]
    %v91 = vld [vmem:[%s3 + $0x140] sm:$0xff]
    %v92 = vld [vmem:[%s3 + $0x148] sm:$0xff]
    %v93 = vld [vmem:[%s3 + $0x150] sm:$0xff]
    %v94 = vld [vmem:[%s3 + $0x158] sm:$0xff]
    %v95 = vld [vmem:[%s3 + $0x160] sm:$0xff]
    %v96 = vld [vmem:[%s3 + $0x168] sm:$0xff]
    %v97 = vld [vmem:[%s3 + $0x170] sm:$0xff]
    %v98 = vld [vmem:[%s3 + $0x178] sm:$0xff]
    %v99 = vld [vmem:[#allocation2] sm:$0xff]
    %v100 = vld [vmem:[#allocation2 + $0x10] sm:$0xff]
    %v101 = vld [vmem:[%s0] sm:$0xff]
    %v102 = vld [vmem:[%s0 + $0x8] sm:$0xff]
    %v103 = vld [vmem:[%s0 + $0x10] sm:$0xff]
    %104 = vrot.lane.b32.xlu0 %v101, 4
    %v105 = vpop.permute.xlu0 %104
    %106 = vrot.lane.b32.xlu0 %v102, 4
    %v107 = vpop.permute.xlu0 %106
    %108 = vrot.lane.b32.xlu0 %v103, 4
    %v109 = vpop.permute.xlu0 %108
    %v110 = vlaneseq
    %v111 = vand.u32 %v110, 127
    %vm112 = vcmp.lt.s32.totalorder %v111, 4
    %v113 = vsel %vm112, %v107, %v109
    %v114 = vsel %vm112, %v105, %v107
    %v115 = vsel %vm112, %v109, %v105
    %116 = vrot.lane.b32.xlu0 %v101, 3
    %v117 = vpop.permute.xlu0 %116
    %118 = vrot.lane.b32.xlu0 %v102, 3
    %v119 = vpop.permute.xlu0 %118
    %120 = vrot.lane.b32.xlu0 %v103, 3
    %v121 = vpop.permute.xlu0 %120
    %vm122 = vcmp.lt.s32.totalorder %v111, 3
    %v123 = vsel %vm122, %v119, %v121
    %v124 = vsel %vm122, %v117, %v119
    %v125 = vsel %vm122, %v121, %v117
    %126 = vrot.lane.b32.xlu0 %v101, 2
    %v127 = vpop.permute.xlu0 %126
    %128 = vrot.lane.b32.xlu0 %v102, 2
    %v129 = vpop.permute.xlu0 %128
    %130 = vrot.lane.b32.xlu0 %v103, 2
    %v131 = vpop.permute.xlu0 %130
    %vm132 = vcmp.lt.s32.totalorder %v111, 2
    %v133 = vsel %vm132, %v129, %v131
    %v134 = vsel %vm132, %v127, %v129
    %v135 = vsel %vm132, %v131, %v127
    %136 = vrot.lane.b32.xlu0 %v101, 1
    %v137 = vpop.permute.xlu0 %136
    %138 = vrot.lane.b32.xlu0 %v102, 1
    %v139 = vpop.permute.xlu0 %138
    %140 = vrot.lane.b32.xlu0 %v103, 1
    %v141 = vpop.permute.xlu0 %140
    %vm142 = vcmp.lt.s32.totalorder %v111, 1
    %v143 = vsel %vm142, %v139, %v141
    %v144 = vsel %vm142, %v137, %v139
    %v145 = vsel %vm142, %v141, %v137
    %146 = vrot.lane.b32.xlu0 %v101, 127
    %v147 = vpop.permute.xlu0 %146
    %148 = vrot.lane.b32.xlu0 %v102, 127
    %v149 = vpop.permute.xlu0 %148
    %150 = vrot.lane.b32.xlu0 %v103, 127
    %v151 = vpop.permute.xlu0 %150
    %vm152 = vcmp.lt.s32.totalorder %v111, 127
    %v153 = vsel %vm152, %v149, %v151
    %v154 = vsel %vm152, %v147, %v149
    %v155 = vsel %vm152, %v151, %v147
    %156 = vrot.lane.b32.xlu0 %v101, 126
    %v157 = vpop.permute.xlu0 %156
    %158 = vrot.lane.b32.xlu0 %v102, 126
    %v159 = vpop.permute.xlu0 %158
    %160 = vrot.lane.b32.xlu0 %v103, 126
    %v161 = vpop.permute.xlu0 %160
    %vm162 = vcmp.lt.s32.totalorder %v111, 126
    %v163 = vsel %vm162, %v159, %v161
    %v164 = vsel %vm162, %v157, %v159
    %v165 = vsel %vm162, %v161, %v157
    %166 = vrot.lane.b32.xlu0 %v101, 125
    %v167 = vpop.permute.xlu0 %166
    %168 = vrot.lane.b32.xlu0 %v102, 125
    %v169 = vpop.permute.xlu0 %168
    %170 = vrot.lane.b32.xlu0 %v103, 125
    %v171 = vpop.permute.xlu0 %170
    %vm172 = vcmp.lt.s32.totalorder %v111, 125
    %v173 = vsel %vm172, %v169, %v171
    %v174 = vsel %vm172, %v167, %v169
    %v175 = vsel %vm172, %v171, %v167
    %176 = vrot.lane.b32.xlu0 %v101, 124
    %v177 = vpop.permute.xlu0 %176
    %178 = vrot.lane.b32.xlu0 %v102, 124
    %v179 = vpop.permute.xlu0 %178
    %180 = vrot.lane.b32.xlu0 %v103, 124
    %v181 = vpop.permute.xlu0 %180
    %vm182 = vcmp.lt.s32.totalorder %v111, 124
    %v183 = vsel %vm182, %v179, %v181
    %v184 = vsel %vm182, %v177, %v179
    %v185 = vsel %vm182, %v181, %v177
    %186 = vrot.lane.b32.xlu0 %v101, 123
    %v187 = vpop.permute.xlu0 %186
    %188 = vrot.lane.b32.xlu0 %v102, 123
    %v189 = vpop.permute.xlu0 %188
    %190 = vrot.lane.b32.xlu0 %v103, 123
    %v191 = vpop.permute.xlu0 %190
    %vm192 = vcmp.lt.s32.totalorder %v111, 123
    %v193 = vsel %vm192, %v189, %v191
    %v194 = vsel %vm192, %v187, %v189
    %v195 = vsel %vm192, %v191, %v187
    %196 = vrot.lane.b32.xlu0 %v101, 122
    %v197 = vpop.permute.xlu0 %196
    %198 = vrot.lane.b32.xlu0 %v102, 122
    %v199 = vpop.permute.xlu0 %198
    %200 = vrot.lane.b32.xlu0 %v103, 122
    %v201 = vpop.permute.xlu0 %200
    %vm202 = vcmp.lt.s32.totalorder %v111, 122
    %v203 = vsel %vm202, %v199, %v201
    %v204 = vsel %vm202, %v197, %v199
    %v205 = vsel %vm202, %v201, %v197
    %206 = vrot.lane.b32.xlu0 %v101, 121
    %v207 = vpop.permute.xlu0 %206
    %208 = vrot.lane.b32.xlu0 %v102, 121
    %v209 = vpop.permute.xlu0 %208
    %210 = vrot.lane.b32.xlu0 %v103, 121
    %v211 = vpop.permute.xlu0 %210
    %vm212 = vcmp.lt.s32.totalorder %v111, 121
    %v213 = vsel %vm212, %v209, %v211
    %v214 = vsel %vm212, %v207, %v209
    %v215 = vsel %vm212, %v211, %v207
    %vm216 = vcmask 785408
    %v218 = vsel %vm216, %v99, 0
    %v221 = vsel %vm216, %v100, 0
    %223 = vmatprep.subr.mxu0 0.0
    %224 = vmatpush1.msra.mxu0 0.0
    %225 = vmatprep.subr.mxu0 0.0
    %226 = vmatpush1.msra.mxu0 0.0
    %227 = vmatprep.subr.mxu0 0.0
    %228 = vmatpush1.msra.mxu0 0.0
    %229 = vmatprep.subr.mxu0 0.0
    %230 = vmatpush1.msra.mxu0 0.0
    %231 = vmatprep.subr.mxu0 %v213
    %232 = vmatpush1.msra.mxu0 %v214
    %233 = vmatprep.subr.mxu0 %v203
    %234 = vmatpush1.msra.mxu0 %v204
    %235 = vmatprep.subr.mxu0 %v193
    %236 = vmatpush1.msra.mxu0 %v194
    %237 = vmatprep.subr.mxu0 %v183
    %238 = vmatpush1.msra.mxu0 %v184
    %239 = vmatprep.subr.mxu0 %v173
    %240 = vmatpush1.msra.mxu0 %v174
    %241 = vmatprep.subr.mxu0 %v163
    %242 = vmatpush1.msra.mxu0 %v164
    %243 = vmatprep.subr.mxu0 %v153
    %244 = vmatpush1.msra.mxu0 %v154
    %245 = vmatprep.subr.mxu0 %v102
    %246 = vmatpush1.msra.mxu0 %v101
    %247 = vmatprep.subr.mxu0 %v144
    %248 = vmatpush1.msra.mxu0 %v145
    %249 = vmatprep.subr.mxu0 %v134
    %250 = vmatpush1.msra.mxu0 %v135
    %251 = vmatprep.subr.mxu0 %v124
    %252 = vmatpush1.msra.mxu0 %v125
    %253 = vmatprep.subr.mxu0 %v114
    %254 = vmatpush1.msra.mxu0 %v115
    %255 = vmatprep.subr.mxu0 0.0
    %256 = vmatpush2.msra.mxu0 0.0
    %257 = vmatprep.subr.mxu0 0.0
    %258 = vmatpush2.msra.mxu0 0.0
    %259 = vmatprep.subr.mxu0 0.0
    %260 = vmatpush2.msra.mxu0 0.0
    %261 = vmatprep.subr.mxu0 0.0
    %262 = vmatpush2.msra.mxu0 0.0
    %263 = vmatprep.subr.mxu0 0.0
    %264 = vmatpush2.msra.mxu0 0.0
    %265 = vmatprep.subr.mxu0 0.0
    %266 = vmatpush2.msra.mxu0 0.0
    %267 = vmatprep.subr.mxu0 0.0
    %268 = vmatpush2.msra.mxu0 0.0
    %269 = vmatprep.subr.mxu0 0.0
    %270 = vmatpush2.msra.mxu0 0.0
    %271 = vmatprep.subr.mxu0 0.0
    %272 = vmatpush2.msra.mxu0 0.0
    %273 = vmatprep.subr.mxu0 0.0
    %274 = vmatpush2.msra.mxu0 0.0
    %275 = vmatprep.subr.mxu0 0.0
    %276 = vmatpush2.msra.mxu0 0.0
    %277 = vmatprep.subr.mxu0 0.0
    %278 = vmatpush2.msra.mxu0 0.0
    %279 = vmatprep.subr.mxu0 0.0
    %280 = vmatpush2.msra.mxu0 0.0
    %281 = vmatprep.subr.mxu0 0.0
    %282 = vmatpush2.msra.mxu0 0.0
    %283 = vmatprep.subr.mxu0 0.0
    %284 = vmatpush2.msra.mxu0 0.0
    %285 = vmatprep.subr.mxu0 0.0
    %286 = vmatpush2.msra.mxu0 0.0
    %287 = vmatprep.mubr.f32.mxu0 0.0
    %288 = vmatmul.mubr.f32.gmra.mxu0 %v218
    %v289 = vpop.f32.mrf.mxu0
    %v290 = vadd.f32 0.0, %v289
    %v291 = vpop.f32.mrf.mxu0
    %v292 = vadd.f32 0.0, %v291
    %293 = vmatprep.mubr.f32.mxu0 0.0
    %294 = vmatmul.mubr.f32.gmra.mxu0 %v221
    %v295 = vpop.f32.mrf.mxu0
    %v296 = vadd.f32 0.0, %v295
    %v297 = vpop.f32.mrf.mxu0
    %v298 = vadd.f32 0.0, %v297
    %299 = vdwg.mxu0
    %300 = vmatprep.subr.mxu0 0.0
    %301 = vmatpush1.msra.mxu0 0.0
    %302 = vmatprep.subr.mxu0 0.0
    %303 = vmatpush1.msra.mxu0 0.0
    %304 = vmatprep.subr.mxu0 0.0
    %305 = vmatpush1.msra.mxu0 0.0
    %306 = vmatprep.subr.mxu0 0.0
    %307 = vmatpush1.msra.mxu0 0.0
    %308 = vmatprep.subr.mxu0 0.0
    %309 = vmatpush1.msra.mxu0 %v215
    %310 = vmatprep.subr.mxu0 0.0
    %311 = vmatpush1.msra.mxu0 %v205
    %312 = vmatprep.subr.mxu0 0.0
    %313 = vmatpush1.msra.mxu0 %v195
    %314 = vmatprep.subr.mxu0 0.0
    %315 = vmatpush1.msra.mxu0 %v185
    %316 = vmatprep.subr.mxu0 0.0
    %317 = vmatpush1.msra.mxu0 %v175
    %318 = vmatprep.subr.mxu0 0.0
    %319 = vmatpush1.msra.mxu0 %v165
    %320 = vmatprep.subr.mxu0 0.0
    %321 = vmatpush1.msra.mxu0 %v155
    %322 = vmatprep.subr.mxu0 0.0
    %323 = vmatpush1.msra.mxu0 %v103
    %324 = vmatprep.subr.mxu0 0.0
    %325 = vmatpush1.msra.mxu0 %v143
    %326 = vmatprep.subr.mxu0 0.0
    %327 = vmatpush1.msra.mxu0 %v133
    %328 = vmatprep.subr.mxu0 0.0
    %329 = vmatpush1.msra.mxu0 %v123
    %330 = vmatprep.subr.mxu0 0.0
    %331 = vmatpush1.msra.mxu0 %v113
    %332 = vmatprep.subr.mxu0 0.0
    %333 = vmatpush2.msra.mxu0 0.0
    %334 = vmatprep.subr.mxu0 0.0
    %335 = vmatpush2.msra.mxu0 0.0
    %336 = vmatprep.subr.mxu0 0.0
    %337 = vmatpush2.msra.mxu0 0.0
    %338 = vmatprep.subr.mxu0 0.0
    %339 = vmatpush2.msra.mxu0 0.0
    %340 = vmatprep.subr.mxu0 0.0
    %341 = vmatpush2.msra.mxu0 0.0
    %342 = vmatprep.subr.mxu0 0.0
    %343 = vmatpush2.msra.mxu0 0.0
    %344 = vmatprep.subr.mxu0 0.0
    %345 = vmatpush2.msra.mxu0 0.0
    %346 = vmatprep.subr.mxu0 0.0
    %347 = vmatpush2.msra.mxu0 0.0
    %348 = vmatprep.subr.mxu0 0.0
    %349 = vmatpush2.msra.mxu0 0.0
    %350 = vmatprep.subr.mxu0 0.0
    %351 = vmatpush2.msra.mxu0 0.0
    %352 = vmatprep.subr.mxu0 0.0
    %353 = vmatpush2.msra.mxu0 0.0
    %354 = vmatprep.subr.mxu0 0.0
    %355 = vmatpush2.msra.mxu0 0.0
    %356 = vmatprep.subr.mxu0 0.0
    %357 = vmatpush2.msra.mxu0 0.0
    %358 = vmatprep.subr.mxu0 0.0
    %359 = vmatpush2.msra.mxu0 0.0
    %360 = vmatprep.subr.mxu0 0.0
    %361 = vmatpush2.msra.mxu0 0.0
    %362 = vmatprep.subr.mxu0 0.0
    %363 = vmatpush2.msra.mxu0 0.0
    %364 = vmatprep.mubr.f32.mxu0 0.0
    %365 = vmatmul.mubr.f32.gmra.mxu0 %v218
    %v366 = vpop.f32.mrf.mxu0
    %v367 = vadd.f32 0.0, %v366
    %v368 = vpop.f32.mrf.mxu0
    %369 = vmatprep.mubr.f32.mxu0 0.0
    %370 = vmatmul.mubr.f32.gmra.mxu0 %v221
    %v371 = vpop.f32.mrf.mxu0
    %v372 = vadd.f32 0.0, %v371
    %v373 = vpop.f32.mrf.mxu0
    %374 = vdwg.mxu0
    %375 = vmatprep.subr.mxu0 0.0
    %376 = vmatpush1.msra.mxu0 %v66
    %377 = vmatprep.subr.mxu0 0.0
    %378 = vmatpush1.msra.mxu0 %v65
    %379 = vmatprep.subr.mxu0 0.0
    %380 = vmatpush1.msra.mxu0 %v64
    %381 = vmatprep.subr.mxu0 0.0
    %382 = vmatpush1.msra.mxu0 %v63
    %383 = vmatprep.subr.mxu0 0.0
    %384 = vmatpush1.msra.mxu0 %v62
    %385 = vmatprep.subr.mxu0 0.0
    %386 = vmatpush1.msra.mxu0 %v61
    %387 = vmatprep.subr.mxu0 0.0
    %388 = vmatpush1.msra.mxu0 %v60
    %389 = vmatprep.subr.mxu0 0.0
    %390 = vmatpush1.msra.mxu0 %v59
    %391 = vmatprep.subr.mxu0 0.0
    %392 = vmatpush1.msra.mxu0 %v58
    %393 = vmatprep.subr.mxu0 0.0
    %394 = vmatpush1.msra.mxu0 %v57
    %395 = vmatprep.subr.mxu0 0.0
    %396 = vmatpush1.msra.mxu0 %v56
    %397 = vmatprep.subr.mxu0 0.0
    %398 = vmatpush1.msra.mxu0 %v55
    %399 = vmatprep.subr.mxu0 0.0
    %400 = vmatpush1.msra.mxu0 %v54
    %401 = vmatprep.subr.mxu0 0.0
    %402 = vmatpush1.msra.mxu0 %v53
    %403 = vmatprep.subr.mxu0 0.0
    %404 = vmatpush1.msra.mxu0 %v52
    %405 = vmatprep.subr.mxu0 0.0
    %406 = vmatpush1.msra.mxu0 %v51
    %407 = vmatprep.subr.mxu0 0.0
    %408 = vmatpush2.msra.mxu0 %v82
    %409 = vmatprep.subr.mxu0 0.0
    %410 = vmatpush2.msra.mxu0 %v81
    %411 = vmatprep.subr.mxu0 0.0
    %412 = vmatpush2.msra.mxu0 %v80
    %413 = vmatprep.subr.mxu0 0.0
    %414 = vmatpush2.msra.mxu0 %v79
    %415 = vmatprep.subr.mxu0 0.0
    %416 = vmatpush2.msra.mxu0 %v78
    %417 = vmatprep.subr.mxu0 0.0
    %418 = vmatpush2.msra.mxu0 %v77
    %419 = vmatprep.subr.mxu0 0.0
    %420 = vmatpush2.msra.mxu0 %v76
    %421 = vmatprep.subr.mxu0 0.0
    %422 = vmatpush2.msra.mxu0 %v75
    %423 = vmatprep.subr.mxu0 0.0
    %424 = vmatpush2.msra.mxu0 %v74
    %425 = vmatprep.subr.mxu0 0.0
    %426 = vmatpush2.msra.mxu0 %v73
    %427 = vmatprep.subr.mxu0 0.0
    %428 = vmatpush2.msra.mxu0 %v72
    %429 = vmatprep.subr.mxu0 0.0
    %430 = vmatpush2.msra.mxu0 %v71
    %431 = vmatprep.subr.mxu0 0.0
    %432 = vmatpush2.msra.mxu0 %v70
    %433 = vmatprep.subr.mxu0 0.0
    %434 = vmatpush2.msra.mxu0 %v69
    %435 = vmatprep.subr.mxu0 0.0
    %436 = vmatpush2.msra.mxu0 %v68
    %437 = vmatprep.subr.mxu0 0.0
    %438 = vmatpush2.msra.mxu0 %v67
    %439 = vmatprep.mubr.f32.mxu0 %v292
    %440 = vmatmul.mubr.f32.gmra.mxu0 %v290
    %v441 = vpop.f32.mrf.mxu0
    %v442 = vadd.f32 0.0, %v441
    %v443 = vpop.f32.mrf.mxu0
    %444 = vmatprep.mubr.f32.mxu0 %v298
    %445 = vmatmul.mubr.f32.gmra.mxu0 %v296
    %v446 = vpop.f32.mrf.mxu0
    %v447 = vadd.f32 0.0, %v446
    %v448 = vpop.f32.mrf.mxu0
    %449 = vdwg.mxu0
    %450 = vmatprep.subr.mxu0 0.0
    %451 = vmatpush1.msra.mxu0 %v98
    %452 = vmatprep.subr.mxu0 0.0
    %453 = vmatpush1.msra.mxu0 %v97
    %454 = vmatprep.subr.mxu0 0.0
    %455 = vmatpush1.msra.mxu0 %v96
    %456 = vmatprep.subr.mxu0 0.0
    %457 = vmatpush1.msra.mxu0 %v95
    %458 = vmatprep.subr.mxu0 0.0
    %459 = vmatpush1.msra.mxu0 %v94
    %460 = vmatprep.subr.mxu0 0.0
    %461 = vmatpush1.msra.mxu0 %v93
    %462 = vmatprep.subr.mxu0 0.0
    %463 = vmatpush1.msra.mxu0 %v92
    %464 = vmatprep.subr.mxu0 0.0
    %465 = vmatpush1.msra.mxu0 %v91
    %466 = vmatprep.subr.mxu0 0.0
    %467 = vmatpush1.msra.mxu0 %v90
    %468 = vmatprep.subr.mxu0 0.0
    %469 = vmatpush1.msra.mxu0 %v89
    %470 = vmatprep.subr.mxu0 0.0
    %471 = vmatpush1.msra.mxu0 %v88
    %472 = vmatprep.subr.mxu0 0.0
    %473 = vmatpush1.msra.mxu0 %v87
    %474 = vmatprep.subr.mxu0 0.0
    %475 = vmatpush1.msra.mxu0 %v86
    %476 = vmatprep.subr.mxu0 0.0
    %477 = vmatpush1.msra.mxu0 %v85
    %478 = vmatprep.subr.mxu0 0.0
    %479 = vmatpush1.msra.mxu0 %v84
    %480 = vmatprep.subr.mxu0 0.0
    %481 = vmatpush1.msra.mxu0 %v83
    %482 = vmatprep.subr.mxu0 0.0
    %483 = vmatpush2.msra.mxu0 0.0
    %484 = vmatprep.subr.mxu0 0.0
    %485 = vmatpush2.msra.mxu0 0.0
    %486 = vmatprep.subr.mxu0 0.0
    %487 = vmatpush2.msra.mxu0 0.0
    %488 = vmatprep.subr.mxu0 0.0
    %489 = vmatpush2.msra.mxu0 0.0
    %490 = vmatprep.subr.mxu0 0.0
    %491 = vmatpush2.msra.mxu0 0.0
    %492 = vmatprep.subr.mxu0 0.0
    %493 = vmatpush2.msra.mxu0 0.0
    %494 = vmatprep.subr.mxu0 0.0
    %495 = vmatpush2.msra.mxu0 0.0
    %496 = vmatprep.subr.mxu0 0.0
    %497 = vmatpush2.msra.mxu0 0.0
    %498 = vmatprep.subr.mxu0 0.0
    %499 = vmatpush2.msra.mxu0 0.0
    %500 = vmatprep.subr.mxu0 0.0
    %501 = vmatpush2.msra.mxu0 0.0
    %502 = vmatprep.subr.mxu0 0.0
    %503 = vmatpush2.msra.mxu0 0.0
    %504 = vmatprep.subr.mxu0 0.0
    %505 = vmatpush2.msra.mxu0 0.0
    %506 = vmatprep.subr.mxu0 0.0
    %507 = vmatpush2.msra.mxu0 0.0
    %508 = vmatprep.subr.mxu0 0.0
    %509 = vmatpush2.msra.mxu0 0.0
    %510 = vmatprep.subr.mxu0 0.0
    %511 = vmatpush2.msra.mxu0 0.0
    %512 = vmatprep.subr.mxu0 0.0
    %513 = vmatpush2.msra.mxu0 0.0
    %514 = vmatprep.mubr.f32.mxu0 0.0
    %515 = vmatmul.mubr.f32.gmra.mxu0 %v367
    %v516 = vpop.f32.mrf.mxu0
    %v517 = vadd.f32 %v442, %v516
    %v518 = vpop.f32.mrf.mxu0
    %519 = vmatprep.mubr.f32.mxu0 0.0
    %520 = vmatmul.mubr.f32.gmra.mxu0 %v372
    %v521 = vpop.f32.mrf.mxu0
    %v522 = vadd.f32 %v447, %v521
    %v523 = vpop.f32.mrf.mxu0
    %524 = vdwg.mxu0
    %v525 = vmul.f32 %v517, 0.0028409092
    %v526 = vmul.f32 %v522, 0.0028409092
    %v527 = vmul.f32 %v290, %v290
    %v528 = vmul.f32 %v292, %v292
    %v529 = vmul.f32 %v367, %v367
    %v530 = vmul.f32 %v296, %v296
    %v531 = vmul.f32 %v298, %v298
    %v532 = vmul.f32 %v372, %v372
    %533 = vmatprep.subr.mxu0 0.0
    %534 = vmatpush1.msra.mxu0 %v66
    %535 = vmatprep.subr.mxu0 0.0
    %536 = vmatpush1.msra.mxu0 %v65
    %537 = vmatprep.subr.mxu0 0.0
    %538 = vmatpush1.msra.mxu0 %v64
    %539 = vmatprep.subr.mxu0 0.0
    %540 = vmatpush1.msra.mxu0 %v63
    %541 = vmatprep.subr.mxu0 0.0
    %542 = vmatpush1.msra.mxu0 %v62
    %543 = vmatprep.subr.mxu0 0.0
    %544 = vmatpush1.msra.mxu0 %v61
    %545 = vmatprep.subr.mxu0 0.0
    %546 = vmatpush1.msra.mxu0 %v60
    %547 = vmatprep.subr.mxu0 0.0
    %548 = vmatpush1.msra.mxu0 %v59
    %549 = vmatprep.subr.mxu0 0.0
    %550 = vmatpush1.msra.mxu0 %v58
    %551 = vmatprep.subr.mxu0 0.0
    %552 = vmatpush1.msra.mxu0 %v57
    %553 = vmatprep.subr.mxu0 0.0
    %554 = vmatpush1.msra.mxu0 %v56
    %555 = vmatprep.subr.mxu0 0.0
    %556 = vmatpush1.msra.mxu0 %v55
    %557 = vmatprep.subr.mxu0 0.0
    %558 = vmatpush1.msra.mxu0 %v54
    %559 = vmatprep.subr.mxu0 0.0
    %560 = vmatpush1.msra.mxu0 %v53
    %561 = vmatprep.subr.mxu0 0.0
    %562 = vmatpush1.msra.mxu0 %v52
    %563 = vmatprep.subr.mxu0 0.0
    %564 = vmatpush1.msra.mxu0 %v51
    %565 = vmatprep.subr.mxu0 0.0
    %566 = vmatpush2.msra.mxu0 %v82
    %567 = vmatprep.subr.mxu0 0.0
    %568 = vmatpush2.msra.mxu0 %v81
    %569 = vmatprep.subr.mxu0 0.0
    %570 = vmatpush2.msra.mxu0 %v80
    %571 = vmatprep.subr.mxu0 0.0
    %572 = vmatpush2.msra.mxu0 %v79
    %573 = vmatprep.subr.mxu0 0.0
    %574 = vmatpush2.msra.mxu0 %v78
    %575 = vmatprep.subr.mxu0 0.0
    %576 = vmatpush2.msra.mxu0 %v77
    %577 = vmatprep.subr.mxu0 0.0
    %578 = vmatpush2.msra.mxu0 %v76
    %579 = vmatprep.subr.mxu0 0.0
    %580 = vmatpush2.msra.mxu0 %v75
    %581 = vmatprep.subr.mxu0 0.0
    %582 = vmatpush2.msra.mxu0 %v74
    %583 = vmatprep.subr.mxu0 0.0
    %584 = vmatpush2.msra.mxu0 %v73
    %585 = vmatprep.subr.mxu0 0.0
    %586 = vmatpush2.msra.mxu0 %v72
    %587 = vmatprep.subr.mxu0 0.0
    %588 = vmatpush2.msra.mxu0 %v71
    %589 = vmatprep.subr.mxu0 0.0
    %590 = vmatpush2.msra.mxu0 %v70
    %591 = vmatprep.subr.mxu0 0.0
    %592 = vmatpush2.msra.mxu0 %v69
    %593 = vmatprep.subr.mxu0 0.0
    %594 = vmatpush2.msra.mxu0 %v68
    %595 = vmatprep.subr.mxu0 0.0
    %596 = vmatpush2.msra.mxu0 %v67
    %597 = vmatprep.mubr.f32.mxu0 %v528
    %598 = vmatmul.mubr.f32.gmra.mxu0 %v527
    %v599 = vpop.f32.mrf.mxu0
    %v600 = vadd.f32 0.0, %v599
    %v601 = vpop.f32.mrf.mxu0
    %602 = vmatprep.mubr.f32.mxu0 %v531
    %603 = vmatmul.mubr.f32.gmra.mxu0 %v530
    %v604 = vpop.f32.mrf.mxu0
    %v605 = vadd.f32 0.0, %v604
    %v606 = vpop.f32.mrf.mxu0
    %607 = vdwg.mxu0
    %608 = vmatprep.subr.mxu0 0.0
    %609 = vmatpush1.msra.mxu0 %v98
    %610 = vmatprep.subr.mxu0 0.0
    %611 = vmatpush1.msra.mxu0 %v97
    %612 = vmatprep.subr.mxu0 0.0
    %613 = vmatpush1.msra.mxu0 %v96
    %614 = vmatprep.subr.mxu0 0.0
    %615 = vmatpush1.msra.mxu0 %v95
    %616 = vmatprep.subr.mxu0 0.0
    %617 = vmatpush1.msra.mxu0 %v94
    %618 = vmatprep.subr.mxu0 0.0
    %619 = vmatpush1.msra.mxu0 %v93
    %620 = vmatprep.subr.mxu0 0.0
    %621 = vmatpush1.msra.mxu0 %v92
    %622 = vmatprep.subr.mxu0 0.0
    %623 = vmatpush1.msra.mxu0 %v91
    %624 = vmatprep.subr.mxu0 0.0
    %625 = vmatpush1.msra.mxu0 %v90
    %626 = vmatprep.subr.mxu0 0.0
    %627 = vmatpush1.msra.mxu0 %v89
    %628 = vmatprep.subr.mxu0 0.0
    %629 = vmatpush1.msra.mxu0 %v88
    %630 = vmatprep.subr.mxu0 0.0
    %631 = vmatpush1.msra.mxu0 %v87
    %632 = vmatprep.subr.mxu0 0.0
    %633 = vmatpush1.msra.mxu0 %v86
    %634 = vmatprep.subr.mxu0 0.0
    %635 = vmatpush1.msra.mxu0 %v85
    %636 = vmatprep.subr.mxu0 0.0
    %637 = vmatpush1.msra.mxu0 %v84
    %638 = vmatprep.subr.mxu0 0.0
    %639 = vmatpush1.msra.mxu0 %v83
    %640 = vmatprep.subr.mxu0 0.0
    %641 = vmatpush2.msra.mxu0 0.0
    %642 = vmatprep.subr.mxu0 0.0
    %643 = vmatpush2.msra.mxu0 0.0
    %644 = vmatprep.subr.mxu0 0.0
    %645 = vmatpush2.msra.mxu0 0.0
    %646 = vmatprep.subr.mxu0 0.0
    %647 = vmatpush2.msra.mxu0 0.0
    %648 = vmatprep.subr.mxu0 0.0
    %649 = vmatpush2.msra.mxu0 0.0
    %650 = vmatprep.subr.mxu0 0.0
    %651 = vmatpush2.msra.mxu0 0.0
    %652 = vmatprep.subr.mxu0 0.0
    %653 = vmatpush2.msra.mxu0 0.0
    %654 = vmatprep.subr.mxu0 0.0
    %655 = vmatpush2.msra.mxu0 0.0
    %656 = vmatprep.subr.mxu0 0.0
    %657 = vmatpush2.msra.mxu0 0.0
    %658 = vmatprep.subr.mxu0 0.0
    %659 = vmatpush2.msra.mxu0 0.0
    %660 = vmatprep.subr.mxu0 0.0
    %661 = vmatpush2.msra.mxu0 0.0
    %662 = vmatprep.subr.mxu0 0.0
    %663 = vmatpush2.msra.mxu0 0.0
    %664 = vmatprep.subr.mxu0 0.0
    %665 = vmatpush2.msra.mxu0 0.0
    %666 = vmatprep.subr.mxu0 0.0
    %667 = vmatpush2.msra.mxu0 0.0
    %668 = vmatprep.subr.mxu0 0.0
    %669 = vmatpush2.msra.mxu0 0.0
    %670 = vmatprep.subr.mxu0 0.0
    %671 = vmatpush2.msra.mxu0 0.0
    %672 = vmatprep.mubr.f32.mxu0 0.0
    %673 = vmatmul.mubr.f32.gmra.mxu0 %v529
    %v674 = vpop.f32.mrf.mxu0
    %v675 = vadd.f32 %v600, %v674
    %v676 = vpop.f32.mrf.mxu0
    %677 = vmatprep.mubr.f32.mxu0 0.0
    %678 = vmatmul.mubr.f32.gmra.mxu0 %v532
    %v679 = vpop.f32.mrf.mxu0
    %v680 = vadd.f32 %v605, %v679
    %v681 = vpop.f32.mrf.mxu0
    %682 = vdwg.mxu0
    %v683 = vmul.f32 %v675, 0.0028409092
    %v684 = vmul.f32 %v680, 0.0028409092
    %v685 = vmul.f32 %v525, %v525
    %v686 = vmul.f32 %v526, %v526
    %v687 = vsub.f32 %v683, %v685
    %v688 = vsub.f32 %v684, %v686
    %v689 = vadd.f32 %v687, 1e-05
    %v690 = vadd.f32 %v688, 1e-05
    %v691 = vrsqrt.pop %v689
    %v692 = vrsqrt.pop %v690
    %v693 = vmul.f32 %v45, %v691
    %v694 = vmul.f32 %v46, %v692
    %696 = vset.pattern.permute.xlu0 0
    %697 = vperm.xlu0 %696, %v693
    %v698 = vpop.permute.xlu0 %697
    %701 = vset.pattern.permute.xlu0 0
    %702 = vperm.xlu0 %701, %v694
    %v703 = vpop.permute.xlu0 %702
    %v705 = vmul.f32 %v290, %v698
    %v706 = vmul.f32 %v292, %v698
    %v707 = vmul.f32 %v367, %v698
    %v708 = vmul.f32 %v296, %v703
    %v709 = vmul.f32 %v298, %v703
    %v710 = vmul.f32 %v372, %v703
    %v711 = vmul.f32 %v525, %v693
    %v712 = vmul.f32 %v526, %v694
    %715 = vrot.lane.b32.xlu0 %v711, 1
    %v716 = vpop.permute.xlu0 %715
    %717 = vrot.lane.b32.xlu0 %v712, 1
    %v718 = vpop.permute.xlu0 %717
    %v721 = vsub.f32 %v45, %v716
    %v722 = vsub.f32 %v46, %v718
    %724 = vset.pattern.permute.xlu0 1
    %725 = vperm.xlu0 %724, %v721
    %v726 = vpop.permute.xlu0 %725
    %729 = vset.pattern.permute.xlu0 1
    %730 = vperm.xlu0 %729, %v722
    %v731 = vpop.permute.xlu0 %730
    %v733 = vadd.f32 %v705, %v726
    %v734 = vadd.f32 %v706, %v726
    %v735 = vadd.f32 %v707, %v726
    %v736 = vadd.f32 %v708, %v731
    %v737 = vadd.f32 %v709, %v731
    %v738 = vadd.f32 %v710, %v731
    %v739 = vmax.f32 %v733, 0.0
    %v740 = vmax.f32 %v734, 0.0
    %v741 = vmax.f32 %v735, 0.0
    %v742 = vmax.f32 %v736, 0.0
    %v743 = vmax.f32 %v737, 0.0
    %v744 = vmax.f32 %v738, 0.0
    %v746 = vlaneseq
    %v747 = vshrl.u32 %v746, 7
    %v748 = vsub.s32 0, %v747
    %v749 = vrot.slane %v48, %v748
    %v750 = vlaneseq
    %v751 = vshrl.u32 %v750, 7
    %v752 = vsub.s32 1, %v751
    %v753 = vrot.slane %v48, %v752
    %v754 = vlaneseq
    %v755 = vshrl.u32 %v754, 7
    %v756 = vsub.s32 2, %v755
    %v757 = vrot.slane %v48, %v756
    %v761 = vmul.f32 %v739, %v749
    %v762 = vmul.f32 %v740, %v753
    %v763 = vmul.f32 %v741, %v757
    %v764 = vmul.f32 %v742, %v749
    %v765 = vmul.f32 %v743, %v753
    %v766 = vmul.f32 %v744, %v757
    %s767 = scalar_lea.vmem [#allocation2], 64
    %v768 = vld [vmem:[%s767] sm:$0xff]
    %v769 = vld [vmem:[%s767 + $0x8] sm:$0xff]
    %v770 = vld [vmem:[%s767 + $0x10] sm:$0xff]
    %v771 = vld [vmem:[%s767 + $0x18] sm:$0xff]
    %v772 = vld [vmem:[%s767 + $0x20] sm:$0xff]
    %v773 = vld [vmem:[%s767 + $0x28] sm:$0xff]
    %v774 = vld [vmem:[%s767 + $0x30] sm:$0xff]
    %v775 = vld [vmem:[%s767 + $0x38] sm:$0xff]
    %776 = vrot.lane.b32.xlu0 %v761, 4
    %v777 = vpop.permute.xlu0 %776
    %778 = vrot.lane.b32.xlu0 %v764, 4
    %v779 = vpop.permute.xlu0 %778
    %780 = vrot.lane.b32.xlu0 %v762, 4
    %v781 = vpop.permute.xlu0 %780
    %782 = vrot.lane.b32.xlu0 %v765, 4
    %v783 = vpop.permute.xlu0 %782
    %784 = vrot.lane.b32.xlu0 %v763, 4
    %v785 = vpop.permute.xlu0 %784
    %786 = vrot.lane.b32.xlu0 %v766, 4
    %v787 = vpop.permute.xlu0 %786
    %v788 = vsel %vm112, %v781, %v785
    %v789 = vsel %vm112, %v783, %v787
    %v790 = vsel %vm112, %v777, %v781
    %v791 = vsel %vm112, %v779, %v783
    %v792 = vsel %vm112, %v785, %v777
    %v793 = vsel %vm112, %v787, %v779
    %794 = vrot.lane.b32.xlu0 %v761, 3
    %v795 = vpop.permute.xlu0 %794
    %796 = vrot.lane.b32.xlu0 %v764, 3
    %v797 = vpop.permute.xlu0 %796
    %798 = vrot.lane.b32.xlu0 %v762, 3
    %v799 = vpop.permute.xlu0 %798
    %800 = vrot.lane.b32.xlu0 %v765, 3
    %v801 = vpop.permute.xlu0 %800
    %802 = vrot.lane.b32.xlu0 %v763, 3
    %v803 = vpop.permute.xlu0 %802
    %804 = vrot.lane.b32.xlu0 %v766, 3
    %v805 = vpop.permute.xlu0 %804
    %v806 = vsel %vm122, %v799, %v803
    %v807 = vsel %vm122, %v801, %v805
    %v808 = vsel %vm122, %v795, %v799
    %v809 = vsel %vm122, %v797, %v801
    %v810 = vsel %vm122, %v803, %v795
    %v811 = vsel %vm122, %v805, %v797
    %812 = vrot.lane.b32.xlu0 %v761, 2
    %v813 = vpop.permute.xlu0 %812
    %814 = vrot.lane.b32.xlu0 %v764, 2
    %v815 = vpop.permute.xlu0 %814
    %816 = vrot.lane.b32.xlu0 %v762, 2
    %v817 = vpop.permute.xlu0 %816
    %818 = vrot.lane.b32.xlu0 %v765, 2
    %v819 = vpop.permute.xlu0 %818
    %820 = vrot.lane.b32.xlu0 %v763, 2
    %v821 = vpop.permute.xlu0 %820
    %822 = vrot.lane.b32.xlu0 %v766, 2
    %v823 = vpop.permute.xlu0 %822
    %v824 = vsel %vm132, %v817, %v821
    %v825 = vsel %vm132, %v819, %v823
    %v826 = vsel %vm132, %v813, %v817
    %v827 = vsel %vm132, %v815, %v819
    %v828 = vsel %vm132, %v821, %v813
    %v829 = vsel %vm132, %v823, %v815
    %830 = vrot.lane.b32.xlu0 %v761, 1
    %v831 = vpop.permute.xlu0 %830
    %832 = vrot.lane.b32.xlu0 %v764, 1
    %v833 = vpop.permute.xlu0 %832
    %834 = vrot.lane.b32.xlu0 %v762, 1
    %v835 = vpop.permute.xlu0 %834
    %836 = vrot.lane.b32.xlu0 %v765, 1
    %v837 = vpop.permute.xlu0 %836
    %838 = vrot.lane.b32.xlu0 %v763, 1
    %v839 = vpop.permute.xlu0 %838
    %840 = vrot.lane.b32.xlu0 %v766, 1
    %v841 = vpop.permute.xlu0 %840
    %v842 = vsel %vm142, %v835, %v839
    %v843 = vsel %vm142, %v837, %v841
    %v844 = vsel %vm142, %v831, %v835
    %v845 = vsel %vm142, %v833, %v837
    %v846 = vsel %vm142, %v839, %v831
    %v847 = vsel %vm142, %v841, %v833
    %848 = vrot.lane.b32.xlu0 %v761, 127
    %v849 = vpop.permute.xlu0 %848
    %850 = vrot.lane.b32.xlu0 %v764, 127
    %v851 = vpop.permute.xlu0 %850
    %852 = vrot.lane.b32.xlu0 %v762, 127
    %v853 = vpop.permute.xlu0 %852
    %854 = vrot.lane.b32.xlu0 %v765, 127
    %v855 = vpop.permute.xlu0 %854
    %856 = vrot.lane.b32.xlu0 %v763, 127
    %v857 = vpop.permute.xlu0 %856
    %858 = vrot.lane.b32.xlu0 %v766, 127
    %v859 = vpop.permute.xlu0 %858
    %v860 = vsel %vm152, %v853, %v857
    %v861 = vsel %vm152, %v855, %v859
    %v862 = vsel %vm152, %v849, %v853
    %v863 = vsel %vm152, %v851, %v855
    %v864 = vsel %vm152, %v857, %v849
    %v865 = vsel %vm152, %v859, %v851
    %866 = vrot.lane.b32.xlu0 %v761, 126
    %v867 = vpop.permute.xlu0 %866
    %868 = vrot.lane.b32.xlu0 %v764, 126
    %v869 = vpop.permute.xlu0 %868
    %870 = vrot.lane.b32.xlu0 %v762, 126
    %v871 = vpop.permute.xlu0 %870
    %872 = vrot.lane.b32.xlu0 %v765, 126
    %v873 = vpop.permute.xlu0 %872
    %874 = vrot.lane.b32.xlu0 %v763, 126
    %v875 = vpop.permute.xlu0 %874
    %876 = vrot.lane.b32.xlu0 %v766, 126
    %v877 = vpop.permute.xlu0 %876
    %v878 = vsel %vm162, %v871, %v875
    %v879 = vsel %vm162, %v873, %v877
    %v880 = vsel %vm162, %v867, %v871
    %v881 = vsel %vm162, %v869, %v873
    %v882 = vsel %vm162, %v875, %v867
    %v883 = vsel %vm162, %v877, %v869
    %884 = vrot.lane.b32.xlu0 %v761, 125
    %v885 = vpop.permute.xlu0 %884
    %886 = vrot.lane.b32.xlu0 %v764, 125
    %v887 = vpop.permute.xlu0 %886
    %888 = vrot.lane.b32.xlu0 %v762, 125
    %v889 = vpop.permute.xlu0 %888
    %890 = vrot.lane.b32.xlu0 %v765, 125
    %v891 = vpop.permute.xlu0 %890
    %892 = vrot.lane.b32.xlu0 %v763, 125
    %v893 = vpop.permute.xlu0 %892
    %894 = vrot.lane.b32.xlu0 %v766, 125
    %v895 = vpop.permute.xlu0 %894
    %v896 = vsel %vm172, %v889, %v893
    %v897 = vsel %vm172, %v891, %v895
    %v898 = vsel %vm172, %v885, %v889
    %v899 = vsel %vm172, %v887, %v891
    %v900 = vsel %vm172, %v893, %v885
    %v901 = vsel %vm172, %v895, %v887
    %902 = vrot.lane.b32.xlu0 %v761, 124
    %v903 = vpop.permute.xlu0 %902
    %904 = vrot.lane.b32.xlu0 %v764, 124
    %v905 = vpop.permute.xlu0 %904
    %906 = vrot.lane.b32.xlu0 %v762, 124
    %v907 = vpop.permute.xlu0 %906
    %908 = vrot.lane.b32.xlu0 %v765, 124
    %v909 = vpop.permute.xlu0 %908
    %910 = vrot.lane.b32.xlu0 %v763, 124
    %v911 = vpop.permute.xlu0 %910
    %912 = vrot.lane.b32.xlu0 %v766, 124
    %v913 = vpop.permute.xlu0 %912
    %v914 = vsel %vm182, %v907, %v911
    %v915 = vsel %vm182, %v909, %v913
    %v916 = vsel %vm182, %v903, %v907
    %v917 = vsel %vm182, %v905, %v909
    %v918 = vsel %vm182, %v911, %v903
    %v919 = vsel %vm182, %v913, %v905
    %vm920 = vcmask 130048
    %v922 = vsel %vm920, %v769, 0
    %v925 = vsel %vm920, %v771, 0
    %v928 = vsel %vm920, %v773, 0
    %v931 = vsel %vm920, %v775, 0
    %933 = vmatprep.subr.mxu0 %v897
    %934 = vmatpush1.msra.mxu0 %v899
    %935 = vmatprep.subr.mxu0 %v896
    %936 = vmatpush1.msra.mxu0 %v898
    %937 = vmatprep.subr.mxu0 %v879
    %938 = vmatpush1.msra.mxu0 %v881
    %939 = vmatprep.subr.mxu0 %v878
    %940 = vmatpush1.msra.mxu0 %v880
    %941 = vmatprep.subr.mxu0 %v861
    %942 = vmatpush1.msra.mxu0 %v863
    %943 = vmatprep.subr.mxu0 %v860
    %944 = vmatpush1.msra.mxu0 %v862
    %945 = vmatprep.subr.mxu0 %v765
    %946 = vmatpush1.msra.mxu0 %v764
    %947 = vmatprep.subr.mxu0 %v762
    %948 = vmatpush1.msra.mxu0 %v761
    %949 = vmatprep.subr.mxu0 %v845
    %950 = vmatpush1.msra.mxu0 %v847
    %951 = vmatprep.subr.mxu0 %v844
    %952 = vmatpush1.msra.mxu0 %v846
    %953 = vmatprep.subr.mxu0 %v827
    %954 = vmatpush1.msra.mxu0 %v829
    %955 = vmatprep.subr.mxu0 %v826
    %956 = vmatpush1.msra.mxu0 %v828
    %957 = vmatprep.subr.mxu0 %v809
    %958 = vmatpush1.msra.mxu0 %v811
    %959 = vmatprep.subr.mxu0 %v808
    %960 = vmatpush1.msra.mxu0 %v810
    %961 = vmatprep.subr.mxu0 %v791
    %962 = vmatpush1.msra.mxu0 %v793
    %963 = vmatprep.subr.mxu0 %v790
    %964 = vmatpush1.msra.mxu0 %v792
    %965 = vmatprep.subr.mxu0 0.0
    %966 = vmatpush2.msra.mxu0 0.0
    %967 = vmatprep.subr.mxu0 0.0
    %968 = vmatpush2.msra.mxu0 0.0
    %969 = vmatprep.subr.mxu0 0.0
    %970 = vmatpush2.msra.mxu0 0.0
    %971 = vmatprep.subr.mxu0 0.0
    %972 = vmatpush2.msra.mxu0 0.0
    %973 = vmatprep.subr.mxu0 0.0
    %974 = vmatpush2.msra.mxu0 0.0
    %975 = vmatprep.subr.mxu0 0.0
    %976 = vmatpush2.msra.mxu0 0.0
    %977 = vmatprep.subr.mxu0 0.0
    %978 = vmatpush2.msra.mxu0 0.0
    %979 = vmatprep.subr.mxu0 0.0
    %980 = vmatpush2.msra.mxu0 0.0
    %981 = vmatprep.subr.mxu0 0.0
    %982 = vmatpush2.msra.mxu0 0.0
    %983 = vmatprep.subr.mxu0 0.0
    %984 = vmatpush2.msra.mxu0 0.0
    %985 = vmatprep.subr.mxu0 0.0
    %986 = vmatpush2.msra.mxu0 0.0
    %987 = vmatprep.subr.mxu0 0.0
    %988 = vmatpush2.msra.mxu0 0.0
    %989 = vmatprep.subr.mxu0 0.0
    %990 = vmatpush2.msra.mxu0 0.0
    %991 = vmatprep.subr.mxu0 0.0
    %992 = vmatpush2.msra.mxu0 0.0
    %993 = vmatprep.subr.mxu0 %v915
    %994 = vmatpush2.msra.mxu0 %v917
    %995 = vmatprep.subr.mxu0 %v914
    %996 = vmatpush2.msra.mxu0 %v916
    %997 = vmatprep.mubr.f32.mxu0 %v922
    %998 = vmatmul.mubr.f32.gmra.mxu0 %v768
    %v999 = vpop.f32.mrf.mxu0
    %v1000 = vadd.f32 0.0, %v999
    %v1001 = vpop.f32.mrf.mxu0
    %v1002 = vadd.f32 0.0, %v1001
    %1003 = vmatprep.mubr.f32.mxu0 %v925
    %1004 = vmatmul.mubr.f32.gmra.mxu0 %v770
    %v1005 = vpop.f32.mrf.mxu0
    %v1006 = vadd.f32 0.0, %v1005
    %v1007 = vpop.f32.mrf.mxu0
    %v1008 = vadd.f32 0.0, %v1007
    %1009 = vmatprep.mubr.f32.mxu0 %v928
    %1010 = vmatmul.mubr.f32.gmra.mxu0 %v772
    %v1011 = vpop.f32.mrf.mxu0
    %v1012 = vadd.f32 0.0, %v1011
    %v1013 = vpop.f32.mrf.mxu0
    %v1014 = vadd.f32 0.0, %v1013
    %1015 = vmatprep.mubr.f32.mxu0 %v931
    %1016 = vmatmul.mubr.f32.gmra.mxu0 %v774
    %v1017 = vpop.f32.mrf.mxu0
    %v1018 = vadd.f32 0.0, %v1017
    %v1019 = vpop.f32.mrf.mxu0
    %v1020 = vadd.f32 0.0, %v1019
    %1021 = vdwg.mxu0
    %1022 = vmatprep.subr.mxu0 0.0
    %1023 = vmatpush1.msra.mxu0 %v901
    %1024 = vmatprep.subr.mxu0 0.0
    %1025 = vmatpush1.msra.mxu0 %v900
    %1026 = vmatprep.subr.mxu0 0.0
    %1027 = vmatpush1.msra.mxu0 %v883
    %1028 = vmatprep.subr.mxu0 0.0
    %1029 = vmatpush1.msra.mxu0 %v882
    %1030 = vmatprep.subr.mxu0 0.0
    %1031 = vmatpush1.msra.mxu0 %v865
    %1032 = vmatprep.subr.mxu0 0.0
    %1033 = vmatpush1.msra.mxu0 %v864
    %1034 = vmatprep.subr.mxu0 0.0
    %1035 = vmatpush1.msra.mxu0 %v766
    %1036 = vmatprep.subr.mxu0 0.0
    %1037 = vmatpush1.msra.mxu0 %v763
    %1038 = vmatprep.subr.mxu0 0.0
    %1039 = vmatpush1.msra.mxu0 %v843
    %1040 = vmatprep.subr.mxu0 0.0
    %1041 = vmatpush1.msra.mxu0 %v842
    %1042 = vmatprep.subr.mxu0 0.0
    %1043 = vmatpush1.msra.mxu0 %v825
    %1044 = vmatprep.subr.mxu0 0.0
    %1045 = vmatpush1.msra.mxu0 %v824
    %1046 = vmatprep.subr.mxu0 0.0
    %1047 = vmatpush1.msra.mxu0 %v807
    %1048 = vmatprep.subr.mxu0 0.0
    %1049 = vmatpush1.msra.mxu0 %v806
    %1050 = vmatprep.subr.mxu0 0.0
    %1051 = vmatpush1.msra.mxu0 %v789
    %1052 = vmatprep.subr.mxu0 0.0
    %1053 = vmatpush1.msra.mxu0 %v788
    %1054 = vmatprep.subr.mxu0 0.0
    %1055 = vmatpush2.msra.mxu0 0.0
    %1056 = vmatprep.subr.mxu0 0.0
    %1057 = vmatpush2.msra.mxu0 0.0
    %1058 = vmatprep.subr.mxu0 0.0
    %1059 = vmatpush2.msra.mxu0 0.0
    %1060 = vmatprep.subr.mxu0 0.0
    %1061 = vmatpush2.msra.mxu0 0.0
    %1062 = vmatprep.subr.mxu0 0.0
    %1063 = vmatpush2.msra.mxu0 0.0
    %1064 = vmatprep.subr.mxu0 0.0
    %1065 = vmatpush2.msra.mxu0 0.0
    %1066 = vmatprep.subr.mxu0 0.0
    %1067 = vmatpush2.msra.mxu0 0.0
    %1068 = vmatprep.subr.mxu0 0.0
    %1069 = vmatpush2.msra.mxu0 0.0
    %1070 = vmatprep.subr.mxu0 0.0
    %1071 = vmatpush2.msra.mxu0 0.0
    %1072 = vmatprep.subr.mxu0 0.0
    %1073 = vmatpush2.msra.mxu0 0.0
    %1074 = vmatprep.subr.mxu0 0.0
    %1075 = vmatpush2.msra.mxu0 0.0
    %1076 = vmatprep.subr.mxu0 0.0
    %1077 = vmatpush2.msra.mxu0 0.0
    %1078 = vmatprep.subr.mxu0 0.0
    %1079 = vmatpush2.msra.mxu0 0.0
    %1080 = vmatprep.subr.mxu0 0.0
    %1081 = vmatpush2.msra.mxu0 0.0
    %1082 = vmatprep.subr.mxu0 0.0
    %1083 = vmatpush2.msra.mxu0 %v919
    %1084 = vmatprep.subr.mxu0 0.0
    %1085 = vmatpush2.msra.mxu0 %v918
    %1086 = vmatprep.mubr.f32.mxu0 %v922
    %1087 = vmatmul.mubr.f32.gmra.mxu0 %v768
    %v1088 = vpop.f32.mrf.mxu0
    %v1089 = vadd.f32 0.0, %v1088
    %v1090 = vpop.f32.mrf.mxu0
    %1091 = vmatprep.mubr.f32.mxu0 %v925
    %1092 = vmatmul.mubr.f32.gmra.mxu0 %v770
    %v1093 = vpop.f32.mrf.mxu0
    %v1094 = vadd.f32 0.0, %v1093
    %v1095 = vpop.f32.mrf.mxu0
    %1096 = vmatprep.mubr.f32.mxu0 %v928
    %1097 = vmatmul.mubr.f32.gmra.mxu0 %v772
    %v1098 = vpop.f32.mrf.mxu0
    %v1099 = vadd.f32 0.0, %v1098
    %v1100 = vpop.f32.mrf.mxu0
    %1101 = vmatprep.mubr.f32.mxu0 %v931
    %1102 = vmatmul.mubr.f32.gmra.mxu0 %v774
    %v1103 = vpop.f32.mrf.mxu0
    %v1104 = vadd.f32 0.0, %v1103
    %v1105 = vpop.f32.mrf.mxu0
    %1106 = vdwg.mxu0
    %1108 = vset.pattern.permute.xlu0 6
    %1109 = vperm.xlu0 %1108, %v45
    %v1110 = vpop.permute.xlu0 %1109
    %1113 = vset.pattern.permute.xlu0 6
    %1114 = vperm.xlu0 %1113, %v46
    %v1115 = vpop.permute.xlu0 %1114
    %v1117 = vadd.f32 %v1012, %v1110
    %v1118 = vadd.f32 %v1014, %v1110
    %v1119 = vadd.f32 %v1099, %v1110
    %v1120 = vadd.f32 %v1018, %v1115
    %v1121 = vadd.f32 %v1020, %v1115
    %v1122 = vadd.f32 %v1104, %v1115
    %1123 = vmatprep.subr.mxu0 0.0
    %1124 = vmatpush1.msra.mxu0 %v66
    %1125 = vmatprep.subr.mxu0 0.0
    %1126 = vmatpush1.msra.mxu0 %v65
    %1127 = vmatprep.subr.mxu0 0.0
    %1128 = vmatpush1.msra.mxu0 %v64
    %1129 = vmatprep.subr.mxu0 0.0
    %1130 = vmatpush1.msra.mxu0 %v63
    %1131 = vmatprep.subr.mxu0 0.0
    %1132 = vmatpush1.msra.mxu0 %v62
    %1133 = vmatprep.subr.mxu0 0.0
    %1134 = vmatpush1.msra.mxu0 %v61
    %1135 = vmatprep.subr.mxu0 0.0
    %1136 = vmatpush1.msra.mxu0 %v60
    %1137 = vmatprep.subr.mxu0 0.0
    %1138 = vmatpush1.msra.mxu0 %v59
    %1139 = vmatprep.subr.mxu0 0.0
    %1140 = vmatpush1.msra.mxu0 %v58
    %1141 = vmatprep.subr.mxu0 0.0
    %1142 = vmatpush1.msra.mxu0 %v57
    %1143 = vmatprep.subr.mxu0 0.0
    %1144 = vmatpush1.msra.mxu0 %v56
    %1145 = vmatprep.subr.mxu0 0.0
    %1146 = vmatpush1.msra.mxu0 %v55
    %1147 = vmatprep.subr.mxu0 0.0
    %1148 = vmatpush1.msra.mxu0 %v54
    %1149 = vmatprep.subr.mxu0 0.0
    %1150 = vmatpush1.msra.mxu0 %v53
    %1151 = vmatprep.subr.mxu0 0.0
    %1152 = vmatpush1.msra.mxu0 %v52
    %1153 = vmatprep.subr.mxu0 0.0
    %1154 = vmatpush1.msra.mxu0 %v51
    %1155 = vmatprep.subr.mxu0 0.0
    %1156 = vmatpush2.msra.mxu0 %v82
    %1157 = vmatprep.subr.mxu0 0.0
    %1158 = vmatpush2.msra.mxu0 %v81
    %1159 = vmatprep.subr.mxu0 0.0
    %1160 = vmatpush2.msra.mxu0 %v80
    %1161 = vmatprep.subr.mxu0 0.0
    %1162 = vmatpush2.msra.mxu0 %v79
    %1163 = vmatprep.subr.mxu0 0.0
    %1164 = vmatpush2.msra.mxu0 %v78
    %1165 = vmatprep.subr.mxu0 0.0
    %1166 = vmatpush2.msra.mxu0 %v77
    %1167 = vmatprep.subr.mxu0 0.0
    %1168 = vmatpush2.msra.mxu0 %v76
    %1169 = vmatprep.subr.mxu0 0.0
    %1170 = vmatpush2.msra.mxu0 %v75
    %1171 = vmatprep.subr.mxu0 0.0
    %1172 = vmatpush2.msra.mxu0 %v74
    %1173 = vmatprep.subr.mxu0 0.0
    %1174 = vmatpush2.msra.mxu0 %v73
    %1175 = vmatprep.subr.mxu0 0.0
    %1176 = vmatpush2.msra.mxu0 %v72
    %1177 = vmatprep.subr.mxu0 0.0
    %1178 = vmatpush2.msra.mxu0 %v71
    %1179 = vmatprep.subr.mxu0 0.0
    %1180 = vmatpush2.msra.mxu0 %v70
    %1181 = vmatprep.subr.mxu0 0.0
    %1182 = vmatpush2.msra.mxu0 %v69
    %1183 = vmatprep.subr.mxu0 0.0
    %1184 = vmatpush2.msra.mxu0 %v68
    %1185 = vmatprep.subr.mxu0 0.0
    %1186 = vmatpush2.msra.mxu0 %v67
    %1187 = vmatprep.mubr.f32.mxu0 %v1002
    %1188 = vmatmul.mubr.f32.gmra.mxu0 %v1000
    %v1189 = vpop.f32.mrf.mxu0
    %v1190 = vadd.f32 0.0, %v1189
    %v1191 = vpop.f32.mrf.mxu0
    %1192 = vmatprep.mubr.f32.mxu0 %v1008
    %1193 = vmatmul.mubr.f32.gmra.mxu0 %v1006
    %v1194 = vpop.f32.mrf.mxu0
    %v1195 = vadd.f32 0.0, %v1194
    %v1196 = vpop.f32.mrf.mxu0
    %1197 = vdwg.mxu0
    %1198 = vmatprep.subr.mxu0 0.0
    %1199 = vmatpush1.msra.mxu0 %v98
    %1200 = vmatprep.subr.mxu0 0.0
    %1201 = vmatpush1.msra.mxu0 %v97
    %1202 = vmatprep.subr.mxu0 0.0
    %1203 = vmatpush1.msra.mxu0 %v96
    %1204 = vmatprep.subr.mxu0 0.0
    %1205 = vmatpush1.msra.mxu0 %v95
    %1206 = vmatprep.subr.mxu0 0.0
    %1207 = vmatpush1.msra.mxu0 %v94
    %1208 = vmatprep.subr.mxu0 0.0
    %1209 = vmatpush1.msra.mxu0 %v93
    %1210 = vmatprep.subr.mxu0 0.0
    %1211 = vmatpush1.msra.mxu0 %v92
    %1212 = vmatprep.subr.mxu0 0.0
    %1213 = vmatpush1.msra.mxu0 %v91
    %1214 = vmatprep.subr.mxu0 0.0
    %1215 = vmatpush1.msra.mxu0 %v90
    %1216 = vmatprep.subr.mxu0 0.0
    %1217 = vmatpush1.msra.mxu0 %v89
    %1218 = vmatprep.subr.mxu0 0.0
    %1219 = vmatpush1.msra.mxu0 %v88
    %1220 = vmatprep.subr.mxu0 0.0
    %1221 = vmatpush1.msra.mxu0 %v87
    %1222 = vmatprep.subr.mxu0 0.0
    %1223 = vmatpush1.msra.mxu0 %v86
    %1224 = vmatprep.subr.mxu0 0.0
    %1225 = vmatpush1.msra.mxu0 %v85
    %1226 = vmatprep.subr.mxu0 0.0
    %1227 = vmatpush1.msra.mxu0 %v84
    %1228 = vmatprep.subr.mxu0 0.0
    %1229 = vmatpush1.msra.mxu0 %v83
    %1230 = vmatprep.subr.mxu0 0.0
    %1231 = vmatpush2.msra.mxu0 0.0
    %1232 = vmatprep.subr.mxu0 0.0
    %1233 = vmatpush2.msra.mxu0 0.0
    %1234 = vmatprep.subr.mxu0 0.0
    %1235 = vmatpush2.msra.mxu0 0.0
    %1236 = vmatprep.subr.mxu0 0.0
    %1237 = vmatpush2.msra.mxu0 0.0
    %1238 = vmatprep.subr.mxu0 0.0
    %1239 = vmatpush2.msra.mxu0 0.0
    %1240 = vmatprep.subr.mxu0 0.0
    %1241 = vmatpush2.msra.mxu0 0.0
    %1242 = vmatprep.subr.mxu0 0.0
    %1243 = vmatpush2.msra.mxu0 0.0
    %1244 = vmatprep.subr.mxu0 0.0
    %1245 = vmatpush2.msra.mxu0 0.0
    %1246 = vmatprep.subr.mxu0 0.0
    %1247 = vmatpush2.msra.mxu0 0.0
    %1248 = vmatprep.subr.mxu0 0.0
    %1249 = vmatpush2.msra.mxu0 0.0
    %1250 = vmatprep.subr.mxu0 0.0
    %1251 = vmatpush2.msra.mxu0 0.0
    %1252 = vmatprep.subr.mxu0 0.0
    %1253 = vmatpush2.msra.mxu0 0.0
    %1254 = vmatprep.subr.mxu0 0.0
    %1255 = vmatpush2.msra.mxu0 0.0
    %1256 = vmatprep.subr.mxu0 0.0
    %1257 = vmatpush2.msra.mxu0 0.0
    %1258 = vmatprep.subr.mxu0 0.0
    %1259 = vmatpush2.msra.mxu0 0.0
    %1260 = vmatprep.subr.mxu0 0.0
    %1261 = vmatpush2.msra.mxu0 0.0
    %1262 = vmatprep.mubr.f32.mxu0 0.0
    %1263 = vmatmul.mubr.f32.gmra.mxu0 %v1089
    %v1264 = vpop.f32.mrf.mxu0
    %v1265 = vadd.f32 %v1190, %v1264
    %v1266 = vpop.f32.mrf.mxu0
    %1267 = vmatprep.mubr.f32.mxu0 0.0
    %1268 = vmatmul.mubr.f32.gmra.mxu0 %v1094
    %v1269 = vpop.f32.mrf.mxu0
    %v1270 = vadd.f32 %v1195, %v1269
    %v1271 = vpop.f32.mrf.mxu0
    %1272 = vdwg.mxu0
    %v1273 = vmul.f32 %v1265, 0.0028409092
    %v1274 = vmul.f32 %v1270, 0.0028409092
    %v1275 = vmul.f32 %v1000, %v1000
    %v1276 = vmul.f32 %v1002, %v1002
    %v1277 = vmul.f32 %v1089, %v1089
    %v1278 = vmul.f32 %v1006, %v1006
    %v1279 = vmul.f32 %v1008, %v1008
    %v1280 = vmul.f32 %v1094, %v1094
    %1281 = vmatprep.subr.mxu0 0.0
    %1282 = vmatpush1.msra.mxu0 %v66
    %1283 = vmatprep.subr.mxu0 0.0
    %1284 = vmatpush1.msra.mxu0 %v65
    %1285 = vmatprep.subr.mxu0 0.0
    %1286 = vmatpush1.msra.mxu0 %v64
    %1287 = vmatprep.subr.mxu0 0.0
    %1288 = vmatpush1.msra.mxu0 %v63
    %1289 = vmatprep.subr.mxu0 0.0
    %1290 = vmatpush1.msra.mxu0 %v62
    %1291 = vmatprep.subr.mxu0 0.0
    %1292 = vmatpush1.msra.mxu0 %v61
    %1293 = vmatprep.subr.mxu0 0.0
    %1294 = vmatpush1.msra.mxu0 %v60
    %1295 = vmatprep.subr.mxu0 0.0
    %1296 = vmatpush1.msra.mxu0 %v59
    %1297 = vmatprep.subr.mxu0 0.0
    %1298 = vmatpush1.msra.mxu0 %v58
    %1299 = vmatprep.subr.mxu0 0.0
    %1300 = vmatpush1.msra.mxu0 %v57
    %1301 = vmatprep.subr.mxu0 0.0
    %1302 = vmatpush1.msra.mxu0 %v56
    %1303 = vmatprep.subr.mxu0 0.0
    %1304 = vmatpush1.msra.mxu0 %v55
    %1305 = vmatprep.subr.mxu0 0.0
    %1306 = vmatpush1.msra.mxu0 %v54
    %1307 = vmatprep.subr.mxu0 0.0
    %1308 = vmatpush1.msra.mxu0 %v53
    %1309 = vmatprep.subr.mxu0 0.0
    %1310 = vmatpush1.msra.mxu0 %v52
    %1311 = vmatprep.subr.mxu0 0.0
    %1312 = vmatpush1.msra.mxu0 %v51
    %1313 = vmatprep.subr.mxu0 0.0
    %1314 = vmatpush2.msra.mxu0 %v82
    %1315 = vmatprep.subr.mxu0 0.0
    %1316 = vmatpush2.msra.mxu0 %v81
    %1317 = vmatprep.subr.mxu0 0.0
    %1318 = vmatpush2.msra.mxu0 %v80
    %1319 = vmatprep.subr.mxu0 0.0
    %1320 = vmatpush2.msra.mxu0 %v79
    %1321 = vmatprep.subr.mxu0 0.0
    %1322 = vmatpush2.msra.mxu0 %v78
    %1323 = vmatprep.subr.mxu0 0.0
    %1324 = vmatpush2.msra.mxu0 %v77
    %1325 = vmatprep.subr.mxu0 0.0
    %1326 = vmatpush2.msra.mxu0 %v76
    %1327 = vmatprep.subr.mxu0 0.0
    %1328 = vmatpush2.msra.mxu0 %v75
    %1329 = vmatprep.subr.mxu0 0.0
    %1330 = vmatpush2.msra.mxu0 %v74
    %1331 = vmatprep.subr.mxu0 0.0
    %1332 = vmatpush2.msra.mxu0 %v73
    %1333 = vmatprep.subr.mxu0 0.0
    %1334 = vmatpush2.msra.mxu0 %v72
    %1335 = vmatprep.subr.mxu0 0.0
    %1336 = vmatpush2.msra.mxu0 %v71
    %1337 = vmatprep.subr.mxu0 0.0
    %1338 = vmatpush2.msra.mxu0 %v70
    %1339 = vmatprep.subr.mxu0 0.0
    %1340 = vmatpush2.msra.mxu0 %v69
    %1341 = vmatprep.subr.mxu0 0.0
    %1342 = vmatpush2.msra.mxu0 %v68
    %1343 = vmatprep.subr.mxu0 0.0
    %1344 = vmatpush2.msra.mxu0 %v67
    %1345 = vmatprep.mubr.f32.mxu0 %v1276
    %1346 = vmatmul.mubr.f32.gmra.mxu0 %v1275
    %v1347 = vpop.f32.mrf.mxu0
    %v1348 = vadd.f32 0.0, %v1347
    %v1349 = vpop.f32.mrf.mxu0
    %1350 = vmatprep.mubr.f32.mxu0 %v1279
    %1351 = vmatmul.mubr.f32.gmra.mxu0 %v1278
    %v1352 = vpop.f32.mrf.mxu0
    %v1353 = vadd.f32 0.0, %v1352
    %v1354 = vpop.f32.mrf.mxu0
    %1355 = vdwg.mxu0
    %1356 = vmatprep.subr.mxu0 0.0
    %1357 = vmatpush1.msra.mxu0 %v98
    %1358 = vmatprep.subr.mxu0 0.0
    %1359 = vmatpush1.msra.mxu0 %v97
    %1360 = vmatprep.subr.mxu0 0.0
    %1361 = vmatpush1.msra.mxu0 %v96
    %1362 = vmatprep.subr.mxu0 0.0
    %1363 = vmatpush1.msra.mxu0 %v95
    %1364 = vmatprep.subr.mxu0 0.0
    %1365 = vmatpush1.msra.mxu0 %v94
    %1366 = vmatprep.subr.mxu0 0.0
    %1367 = vmatpush1.msra.mxu0 %v93
    %1368 = vmatprep.subr.mxu0 0.0
    %1369 = vmatpush1.msra.mxu0 %v92
    %1370 = vmatprep.subr.mxu0 0.0
    %1371 = vmatpush1.msra.mxu0 %v91
    %1372 = vmatprep.subr.mxu0 0.0
    %1373 = vmatpush1.msra.mxu0 %v90
    %1374 = vmatprep.subr.mxu0 0.0
    %1375 = vmatpush1.msra.mxu0 %v89
    %1376 = vmatprep.subr.mxu0 0.0
    %1377 = vmatpush1.msra.mxu0 %v88
    %1378 = vmatprep.subr.mxu0 0.0
    %1379 = vmatpush1.msra.mxu0 %v87
    %1380 = vmatprep.subr.mxu0 0.0
    %1381 = vmatpush1.msra.mxu0 %v86
    %1382 = vmatprep.subr.mxu0 0.0
    %1383 = vmatpush1.msra.mxu0 %v85
    %1384 = vmatprep.subr.mxu0 0.0
    %1385 = vmatpush1.msra.mxu0 %v84
    %1386 = vmatprep.subr.mxu0 0.0
    %1387 = vmatpush1.msra.mxu0 %v83
    %1388 = vmatprep.subr.mxu0 0.0
    %1389 = vmatpush2.msra.mxu0 0.0
    %1390 = vmatprep.subr.mxu0 0.0
    %1391 = vmatpush2.msra.mxu0 0.0
    %1392 = vmatprep.subr.mxu0 0.0
    %1393 = vmatpush2.msra.mxu0 0.0
    %1394 = vmatprep.subr.mxu0 0.0
    %1395 = vmatpush2.msra.mxu0 0.0
    %1396 = vmatprep.subr.mxu0 0.0
    %1397 = vmatpush2.msra.mxu0 0.0
    %1398 = vmatprep.subr.mxu0 0.0
    %1399 = vmatpush2.msra.mxu0 0.0
    %1400 = vmatprep.subr.mxu0 0.0
    %1401 = vmatpush2.msra.mxu0 0.0
    %1402 = vmatprep.subr.mxu0 0.0
    %1403 = vmatpush2.msra.mxu0 0.0
    %1404 = vmatprep.subr.mxu0 0.0
    %1405 = vmatpush2.msra.mxu0 0.0
    %1406 = vmatprep.subr.mxu0 0.0
    %1407 = vmatpush2.msra.mxu0 0.0
    %1408 = vmatprep.subr.mxu0 0.0
    %1409 = vmatpush2.msra.mxu0 0.0
    %1410 = vmatprep.subr.mxu0 0.0
    %1411 = vmatpush2.msra.mxu0 0.0
    %1412 = vmatprep.subr.mxu0 0.0
    %1413 = vmatpush2.msra.mxu0 0.0
    %1414 = vmatprep.subr.mxu0 0.0
    %1415 = vmatpush2.msra.mxu0 0.0
    %1416 = vmatprep.subr.mxu0 0.0
    %1417 = vmatpush2.msra.mxu0 0.0
    %1418 = vmatprep.subr.mxu0 0.0
    %1419 = vmatpush2.msra.mxu0 0.0
    %1420 = vmatprep.mubr.f32.mxu0 0.0
    %1421 = vmatmul.mubr.f32.gmra.mxu0 %v1277
    %v1422 = vpop.f32.mrf.mxu0
    %v1423 = vadd.f32 %v1348, %v1422
    %v1424 = vpop.f32.mrf.mxu0
    %1425 = vmatprep.mubr.f32.mxu0 0.0
    %1426 = vmatmul.mubr.f32.gmra.mxu0 %v1280
    %v1427 = vpop.f32.mrf.mxu0
    %v1428 = vadd.f32 %v1353, %v1427
    %v1429 = vpop.f32.mrf.mxu0
    %1430 = vdwg.mxu0
    %v1431 = vmul.f32 %v1423, 0.0028409092
    %v1432 = vmul.f32 %v1428, 0.0028409092
    %v1433 = vmul.f32 %v1273, %v1273
    %v1434 = vmul.f32 %v1274, %v1274
    %v1435 = vsub.f32 %v1431, %v1433
    %v1436 = vsub.f32 %v1432, %v1434
    %v1437 = vadd.f32 %v1435, 1e-05
    %v1438 = vadd.f32 %v1436, 1e-05
    %v1439 = vrsqrt.pop %v1437
    %v1440 = vrsqrt.pop %v1438
    %1443 = vrot.lane.b32.xlu0 %v1439, 2
    %v1444 = vpop.permute.xlu0 %1443
    %1445 = vrot.lane.b32.xlu0 %v1440, 2
    %v1446 = vpop.permute.xlu0 %1445
    %v1449 = vmul.f32 %v45, %v1444
    %v1450 = vmul.f32 %v46, %v1446
    %1452 = vset.pattern.permute.xlu0 2
    %1453 = vperm.xlu0 %1452, %v1449
    %v1454 = vpop.permute.xlu0 %1453
    %1457 = vset.pattern.permute.xlu0 2
    %1458 = vperm.xlu0 %1457, %v1450
    %v1459 = vpop.permute.xlu0 %1458
    %v1461 = vmul.f32 %v1000, %v1454
    %v1462 = vmul.f32 %v1002, %v1454
    %v1463 = vmul.f32 %v1089, %v1454
    %v1464 = vmul.f32 %v1006, %v1459
    %v1465 = vmul.f32 %v1008, %v1459
    %v1466 = vmul.f32 %v1094, %v1459
    %1467 = vrot.lane.b32.xlu0 %v1449, 126
    %v1468 = vpop.permute.xlu0 %1467
    %1469 = vrot.lane.b32.xlu0 %v1450, 126
    %v1470 = vpop.permute.xlu0 %1469
    %v1473 = vmul.f32 %v1273, %v1468
    %v1474 = vmul.f32 %v1274, %v1470
    %1477 = vrot.lane.b32.xlu0 %v1473, 3
    %v1478 = vpop.permute.xlu0 %1477
    %1479 = vrot.lane.b32.xlu0 %v1474, 3
    %v1480 = vpop.permute.xlu0 %1479
    %v1483 = vsub.f32 %v45, %v1478
    %v1484 = vsub.f32 %v46, %v1480
    %1486 = vset.pattern.permute.xlu0 3
    %1487 = vperm.xlu0 %1486, %v1483
    %v1488 = vpop.permute.xlu0 %1487
    %1491 = vset.pattern.permute.xlu0 3
    %1492 = vperm.xlu0 %1491, %v1484
    %v1493 = vpop.permute.xlu0 %1492
    %v1495 = vadd.f32 %v1461, %v1488
    %v1496 = vadd.f32 %v1462, %v1488
    %v1497 = vadd.f32 %v1463, %v1488
    %v1498 = vadd.f32 %v1464, %v1493
    %v1499 = vadd.f32 %v1465, %v1493
    %v1500 = vadd.f32 %v1466, %v1493
    %v1501 = vmax.f32 %v1495, 0.0
    %v1502 = vmax.f32 %v1496, 0.0
    %v1503 = vmax.f32 %v1497, 0.0
    %v1504 = vmax.f32 %v1498, 0.0
    %v1505 = vmax.f32 %v1499, 0.0
    %v1506 = vmax.f32 %v1500, 0.0
    %v1507 = vmul.f32 %v1501, %v749
    %v1508 = vmul.f32 %v1502, %v753
    %v1509 = vmul.f32 %v1503, %v757
    %v1510 = vmul.f32 %v1504, %v749
    %v1511 = vmul.f32 %v1505, %v753
    %v1512 = vmul.f32 %v1506, %v757
    %s1513 = scalar_lea.vmem [#allocation2], 128
    %v1514 = vld [vmem:[%s1513] sm:$0xff]
    %v1515 = vld [vmem:[%s1513 + $0x8] sm:$0xff]
    %v1516 = vld [vmem:[%s1513 + $0x10] sm:$0xff]
    %v1517 = vld [vmem:[%s1513 + $0x18] sm:$0xff]
    %1518 = vrot.lane.b32.xlu0 %v1507, 4
    %v1519 = vpop.permute.xlu0 %1518
    %1520 = vrot.lane.b32.xlu0 %v1510, 4
    %v1521 = vpop.permute.xlu0 %1520
    %1522 = vrot.lane.b32.xlu0 %v1508, 4
    %v1523 = vpop.permute.xlu0 %1522
    %1524 = vrot.lane.b32.xlu0 %v1511, 4
    %v1525 = vpop.permute.xlu0 %1524
    %1526 = vrot.lane.b32.xlu0 %v1509, 4
    %v1527 = vpop.permute.xlu0 %1526
    %1528 = vrot.lane.b32.xlu0 %v1512, 4
    %v1529 = vpop.permute.xlu0 %1528
    %v1530 = vsel %vm112, %v1523, %v1527
    %v1531 = vsel %vm112, %v1525, %v1529
    %v1532 = vsel %vm112, %v1519, %v1523
    %v1533 = vsel %vm112, %v1521, %v1525
    %v1534 = vsel %vm112, %v1527, %v1519
    %v1535 = vsel %vm112, %v1529, %v1521
    %1536 = vrot.lane.b32.xlu0 %v1507, 3
    %v1537 = vpop.permute.xlu0 %1536
    %1538 = vrot.lane.b32.xlu0 %v1510, 3
    %v1539 = vpop.permute.xlu0 %1538
    %1540 = vrot.lane.b32.xlu0 %v1508, 3
    %v1541 = vpop.permute.xlu0 %1540
    %1542 = vrot.lane.b32.xlu0 %v1511, 3
    %v1543 = vpop.permute.xlu0 %1542
    %1544 = vrot.lane.b32.xlu0 %v1509, 3
    %v1545 = vpop.permute.xlu0 %1544
    %1546 = vrot.lane.b32.xlu0 %v1512, 3
    %v1547 = vpop.permute.xlu0 %1546
    %v1548 = vsel %vm122, %v1541, %v1545
    %v1549 = vsel %vm122, %v1543, %v1547
    %v1550 = vsel %vm122, %v1537, %v1541
    %v1551 = vsel %vm122, %v1539, %v1543
    %v1552 = vsel %vm122, %v1545, %v1537
    %v1553 = vsel %vm122, %v1547, %v1539
    %1554 = vrot.lane.b32.xlu0 %v1507, 2
    %v1555 = vpop.permute.xlu0 %1554
    %1556 = vrot.lane.b32.xlu0 %v1510, 2
    %v1557 = vpop.permute.xlu0 %1556
    %1558 = vrot.lane.b32.xlu0 %v1508, 2
    %v1559 = vpop.permute.xlu0 %1558
    %1560 = vrot.lane.b32.xlu0 %v1511, 2
    %v1561 = vpop.permute.xlu0 %1560
    %1562 = vrot.lane.b32.xlu0 %v1509, 2
    %v1563 = vpop.permute.xlu0 %1562
    %1564 = vrot.lane.b32.xlu0 %v1512, 2
    %v1565 = vpop.permute.xlu0 %1564
    %v1566 = vsel %vm132, %v1559, %v1563
    %v1567 = vsel %vm132, %v1561, %v1565
    %v1568 = vsel %vm132, %v1555, %v1559
    %v1569 = vsel %vm132, %v1557, %v1561
    %v1570 = vsel %vm132, %v1563, %v1555
    %v1571 = vsel %vm132, %v1565, %v1557
    %1572 = vrot.lane.b32.xlu0 %v1507, 1
    %v1573 = vpop.permute.xlu0 %1572
    %1574 = vrot.lane.b32.xlu0 %v1510, 1
    %v1575 = vpop.permute.xlu0 %1574
    %1576 = vrot.lane.b32.xlu0 %v1508, 1
    %v1577 = vpop.permute.xlu0 %1576
    %1578 = vrot.lane.b32.xlu0 %v1511, 1
    %v1579 = vpop.permute.xlu0 %1578
    %1580 = vrot.lane.b32.xlu0 %v1509, 1
    %v1581 = vpop.permute.xlu0 %1580
    %1582 = vrot.lane.b32.xlu0 %v1512, 1
    %v1583 = vpop.permute.xlu0 %1582
    %v1584 = vsel %vm142, %v1577, %v1581
    %v1585 = vsel %vm142, %v1579, %v1583
    %v1586 = vsel %vm142, %v1573, %v1577
    %v1587 = vsel %vm142, %v1575, %v1579
    %v1588 = vsel %vm142, %v1581, %v1573
    %v1589 = vsel %vm142, %v1583, %v1575
    %1590 = vrot.lane.b32.xlu0 %v1507, 127
    %v1591 = vpop.permute.xlu0 %1590
    %1592 = vrot.lane.b32.xlu0 %v1510, 127
    %v1593 = vpop.permute.xlu0 %1592
    %1594 = vrot.lane.b32.xlu0 %v1508, 127
    %v1595 = vpop.permute.xlu0 %1594
    %1596 = vrot.lane.b32.xlu0 %v1511, 127
    %v1597 = vpop.permute.xlu0 %1596
    %1598 = vrot.lane.b32.xlu0 %v1509, 127
    %v1599 = vpop.permute.xlu0 %1598
    %1600 = vrot.lane.b32.xlu0 %v1512, 127
    %v1601 = vpop.permute.xlu0 %1600
    %v1602 = vsel %vm152, %v1595, %v1599
    %v1603 = vsel %vm152, %v1597, %v1601
    %v1604 = vsel %vm152, %v1591, %v1595
    %v1605 = vsel %vm152, %v1593, %v1597
    %v1606 = vsel %vm152, %v1599, %v1591
    %v1607 = vsel %vm152, %v1601, %v1593
    %1608 = vrot.lane.b32.xlu0 %v1507, 126
    %v1609 = vpop.permute.xlu0 %1608
    %1610 = vrot.lane.b32.xlu0 %v1510, 126
    %v1611 = vpop.permute.xlu0 %1610
    %1612 = vrot.lane.b32.xlu0 %v1508, 126
    %v1613 = vpop.permute.xlu0 %1612
    %1614 = vrot.lane.b32.xlu0 %v1511, 126
    %v1615 = vpop.permute.xlu0 %1614
    %1616 = vrot.lane.b32.xlu0 %v1509, 126
    %v1617 = vpop.permute.xlu0 %1616
    %1618 = vrot.lane.b32.xlu0 %v1512, 126
    %v1619 = vpop.permute.xlu0 %1618
    %v1620 = vsel %vm162, %v1613, %v1617
    %v1621 = vsel %vm162, %v1615, %v1619
    %v1622 = vsel %vm162, %v1609, %v1613
    %v1623 = vsel %vm162, %v1611, %v1615
    %v1624 = vsel %vm162, %v1617, %v1609
    %v1625 = vsel %vm162, %v1619, %v1611
    %1626 = vrot.lane.b32.xlu0 %v1507, 125
    %v1627 = vpop.permute.xlu0 %1626
    %1628 = vrot.lane.b32.xlu0 %v1510, 125
    %v1629 = vpop.permute.xlu0 %1628
    %1630 = vrot.lane.b32.xlu0 %v1508, 125
    %v1631 = vpop.permute.xlu0 %1630
    %1632 = vrot.lane.b32.xlu0 %v1511, 125
    %v1633 = vpop.permute.xlu0 %1632
    %1634 = vrot.lane.b32.xlu0 %v1509, 125
    %v1635 = vpop.permute.xlu0 %1634
    %1636 = vrot.lane.b32.xlu0 %v1512, 125
    %v1637 = vpop.permute.xlu0 %1636
    %v1638 = vsel %vm172, %v1631, %v1635
    %v1639 = vsel %vm172, %v1633, %v1637
    %v1640 = vsel %vm172, %v1627, %v1631
    %v1641 = vsel %vm172, %v1629, %v1633
    %v1642 = vsel %vm172, %v1635, %v1627
    %v1643 = vsel %vm172, %v1637, %v1629
    %1644 = vrot.lane.b32.xlu0 %v1507, 124
    %v1645 = vpop.permute.xlu0 %1644
    %1646 = vrot.lane.b32.xlu0 %v1510, 124
    %v1647 = vpop.permute.xlu0 %1646
    %1648 = vrot.lane.b32.xlu0 %v1508, 124
    %v1649 = vpop.permute.xlu0 %1648
    %1650 = vrot.lane.b32.xlu0 %v1511, 124
    %v1651 = vpop.permute.xlu0 %1650
    %1652 = vrot.lane.b32.xlu0 %v1509, 124
    %v1653 = vpop.permute.xlu0 %1652
    %1654 = vrot.lane.b32.xlu0 %v1512, 124
    %v1655 = vpop.permute.xlu0 %1654
    %v1656 = vsel %vm182, %v1649, %v1653
    %v1657 = vsel %vm182, %v1651, %v1655
    %v1658 = vsel %vm182, %v1645, %v1649
    %v1659 = vsel %vm182, %v1647, %v1651
    %v1660 = vsel %vm182, %v1653, %v1645
    %v1661 = vsel %vm182, %v1655, %v1647
    %v1663 = vsel %vm920, %v1515, 0
    %v1666 = vsel %vm920, %v1517, 0
    %1668 = vmatprep.subr.mxu0 %v1639
    %1669 = vmatpush1.msra.mxu0 %v1641
    %1670 = vmatprep.subr.mxu0 %v1638
    %1671 = vmatpush1.msra.mxu0 %v1640
    %1672 = vmatprep.subr.mxu0 %v1621
    %1673 = vmatpush1.msra.mxu0 %v1623
    %1674 = vmatprep.subr.mxu0 %v1620
    %1675 = vmatpush1.msra.mxu0 %v1622
    %1676 = vmatprep.subr.mxu0 %v1603
    %1677 = vmatpush1.msra.mxu0 %v1605
    %1678 = vmatprep.subr.mxu0 %v1602
    %1679 = vmatpush1.msra.mxu0 %v1604
    %1680 = vmatprep.subr.mxu0 %v1511
    %1681 = vmatpush1.msra.mxu0 %v1510
    %1682 = vmatprep.subr.mxu0 %v1508
    %1683 = vmatpush1.msra.mxu0 %v1507
    %1684 = vmatprep.subr.mxu0 %v1587
    %1685 = vmatpush1.msra.mxu0 %v1589
    %1686 = vmatprep.subr.mxu0 %v1586
    %1687 = vmatpush1.msra.mxu0 %v1588
    %1688 = vmatprep.subr.mxu0 %v1569
    %1689 = vmatpush1.msra.mxu0 %v1571
    %1690 = vmatprep.subr.mxu0 %v1568
    %1691 = vmatpush1.msra.mxu0 %v1570
    %1692 = vmatprep.subr.mxu0 %v1551
    %1693 = vmatpush1.msra.mxu0 %v1553
    %1694 = vmatprep.subr.mxu0 %v1550
    %1695 = vmatpush1.msra.mxu0 %v1552
    %1696 = vmatprep.subr.mxu0 %v1533
    %1697 = vmatpush1.msra.mxu0 %v1535
    %1698 = vmatprep.subr.mxu0 %v1532
    %1699 = vmatpush1.msra.mxu0 %v1534
    %1700 = vmatprep.subr.mxu0 0.0
    %1701 = vmatpush2.msra.mxu0 0.0
    %1702 = vmatprep.subr.mxu0 0.0
    %1703 = vmatpush2.msra.mxu0 0.0
    %1704 = vmatprep.subr.mxu0 0.0
    %1705 = vmatpush2.msra.mxu0 0.0
    %1706 = vmatprep.subr.mxu0 0.0
    %1707 = vmatpush2.msra.mxu0 0.0
    %1708 = vmatprep.subr.mxu0 0.0
    %1709 = vmatpush2.msra.mxu0 0.0
    %1710 = vmatprep.subr.mxu0 0.0
    %1711 = vmatpush2.msra.mxu0 0.0
    %1712 = vmatprep.subr.mxu0 0.0
    %1713 = vmatpush2.msra.mxu0 0.0
    %1714 = vmatprep.subr.mxu0 0.0
    %1715 = vmatpush2.msra.mxu0 0.0
    %1716 = vmatprep.subr.mxu0 0.0
    %1717 = vmatpush2.msra.mxu0 0.0
    %1718 = vmatprep.subr.mxu0 0.0
    %1719 = vmatpush2.msra.mxu0 0.0
    %1720 = vmatprep.subr.mxu0 0.0
    %1721 = vmatpush2.msra.mxu0 0.0
    %1722 = vmatprep.subr.mxu0 0.0
    %1723 = vmatpush2.msra.mxu0 0.0
    %1724 = vmatprep.subr.mxu0 0.0
    %1725 = vmatpush2.msra.mxu0 0.0
    %1726 = vmatprep.subr.mxu0 0.0
    %1727 = vmatpush2.msra.mxu0 0.0
    %1728 = vmatprep.subr.mxu0 %v1657
    %1729 = vmatpush2.msra.mxu0 %v1659
    %1730 = vmatprep.subr.mxu0 %v1656
    %1731 = vmatpush2.msra.mxu0 %v1658
    %1732 = vmatprep.mubr.f32.mxu0 %v1663
    %1733 = vmatmul.mubr.f32.gmra.mxu0 %v1514
    %v1734 = vpop.f32.mrf.mxu0
    %v1735 = vadd.f32 0.0, %v1734
    %v1736 = vpop.f32.mrf.mxu0
    %v1737 = vadd.f32 0.0, %v1736
    %1738 = vmatprep.mubr.f32.mxu0 %v1666
    %1739 = vmatmul.mubr.f32.gmra.mxu0 %v1516
    %v1740 = vpop.f32.mrf.mxu0
    %v1741 = vadd.f32 0.0, %v1740
    %v1742 = vpop.f32.mrf.mxu0
    %v1743 = vadd.f32 0.0, %v1742
    %1744 = vdwg.mxu0
    %1745 = vmatprep.subr.mxu0 0.0
    %1746 = vmatpush1.msra.mxu0 %v1643
    %1747 = vmatprep.subr.mxu0 0.0
    %1748 = vmatpush1.msra.mxu0 %v1642
    %1749 = vmatprep.subr.mxu0 0.0
    %1750 = vmatpush1.msra.mxu0 %v1625
    %1751 = vmatprep.subr.mxu0 0.0
    %1752 = vmatpush1.msra.mxu0 %v1624
    %1753 = vmatprep.subr.mxu0 0.0
    %1754 = vmatpush1.msra.mxu0 %v1607
    %1755 = vmatprep.subr.mxu0 0.0
    %1756 = vmatpush1.msra.mxu0 %v1606
    %1757 = vmatprep.subr.mxu0 0.0
    %1758 = vmatpush1.msra.mxu0 %v1512
    %1759 = vmatprep.subr.mxu0 0.0
    %1760 = vmatpush1.msra.mxu0 %v1509
    %1761 = vmatprep.subr.mxu0 0.0
    %1762 = vmatpush1.msra.mxu0 %v1585
    %1763 = vmatprep.subr.mxu0 0.0
    %1764 = vmatpush1.msra.mxu0 %v1584
    %1765 = vmatprep.subr.mxu0 0.0
    %1766 = vmatpush1.msra.mxu0 %v1567
    %1767 = vmatprep.subr.mxu0 0.0
    %1768 = vmatpush1.msra.mxu0 %v1566
    %1769 = vmatprep.subr.mxu0 0.0
    %1770 = vmatpush1.msra.mxu0 %v1549
    %1771 = vmatprep.subr.mxu0 0.0
    %1772 = vmatpush1.msra.mxu0 %v1548
    %1773 = vmatprep.subr.mxu0 0.0
    %1774 = vmatpush1.msra.mxu0 %v1531
    %1775 = vmatprep.subr.mxu0 0.0
    %1776 = vmatpush1.msra.mxu0 %v1530
    %1777 = vmatprep.subr.mxu0 0.0
    %1778 = vmatpush2.msra.mxu0 0.0
    %1779 = vmatprep.subr.mxu0 0.0
    %1780 = vmatpush2.msra.mxu0 0.0
    %1781 = vmatprep.subr.mxu0 0.0
    %1782 = vmatpush2.msra.mxu0 0.0
    %1783 = vmatprep.subr.mxu0 0.0
    %1784 = vmatpush2.msra.mxu0 0.0
    %1785 = vmatprep.subr.mxu0 0.0
    %1786 = vmatpush2.msra.mxu0 0.0
    %1787 = vmatprep.subr.mxu0 0.0
    %1788 = vmatpush2.msra.mxu0 0.0
    %1789 = vmatprep.subr.mxu0 0.0
    %1790 = vmatpush2.msra.mxu0 0.0
    %1791 = vmatprep.subr.mxu0 0.0
    %1792 = vmatpush2.msra.mxu0 0.0
    %1793 = vmatprep.subr.mxu0 0.0
    %1794 = vmatpush2.msra.mxu0 0.0
    %1795 = vmatprep.subr.mxu0 0.0
    %1796 = vmatpush2.msra.mxu0 0.0
    %1797 = vmatprep.subr.mxu0 0.0
    %1798 = vmatpush2.msra.mxu0 0.0
    %1799 = vmatprep.subr.mxu0 0.0
    %1800 = vmatpush2.msra.mxu0 0.0
    %1801 = vmatprep.subr.mxu0 0.0
    %1802 = vmatpush2.msra.mxu0 0.0
    %1803 = vmatprep.subr.mxu0 0.0
    %1804 = vmatpush2.msra.mxu0 0.0
    %1805 = vmatprep.subr.mxu0 0.0
    %1806 = vmatpush2.msra.mxu0 %v1661
    %1807 = vmatprep.subr.mxu0 0.0
    %1808 = vmatpush2.msra.mxu0 %v1660
    %1809 = vmatprep.mubr.f32.mxu0 %v1663
    %1810 = vmatmul.mubr.f32.gmra.mxu0 %v1514
    %v1811 = vpop.f32.mrf.mxu0
    %v1812 = vadd.f32 0.0, %v1811
    %v1813 = vpop.f32.mrf.mxu0
    %1814 = vmatprep.mubr.f32.mxu0 %v1666
    %1815 = vmatmul.mubr.f32.gmra.mxu0 %v1516
    %v1816 = vpop.f32.mrf.mxu0
    %v1817 = vadd.f32 0.0, %v1816
    %v1818 = vpop.f32.mrf.mxu0
    %1819 = vdwg.mxu0
    %1820 = vmatprep.subr.mxu0 0.0
    %1821 = vmatpush1.msra.mxu0 %v66
    %1822 = vmatprep.subr.mxu0 0.0
    %1823 = vmatpush1.msra.mxu0 %v65
    %1824 = vmatprep.subr.mxu0 0.0
    %1825 = vmatpush1.msra.mxu0 %v64
    %1826 = vmatprep.subr.mxu0 0.0
    %1827 = vmatpush1.msra.mxu0 %v63
    %1828 = vmatprep.subr.mxu0 0.0
    %1829 = vmatpush1.msra.mxu0 %v62
    %1830 = vmatprep.subr.mxu0 0.0
    %1831 = vmatpush1.msra.mxu0 %v61
    %1832 = vmatprep.subr.mxu0 0.0
    %1833 = vmatpush1.msra.mxu0 %v60
    %1834 = vmatprep.subr.mxu0 0.0
    %1835 = vmatpush1.msra.mxu0 %v59
    %1836 = vmatprep.subr.mxu0 0.0
    %1837 = vmatpush1.msra.mxu0 %v58
    %1838 = vmatprep.subr.mxu0 0.0
    %1839 = vmatpush1.msra.mxu0 %v57
    %1840 = vmatprep.subr.mxu0 0.0
    %1841 = vmatpush1.msra.mxu0 %v56
    %1842 = vmatprep.subr.mxu0 0.0
    %1843 = vmatpush1.msra.mxu0 %v55
    %1844 = vmatprep.subr.mxu0 0.0
    %1845 = vmatpush1.msra.mxu0 %v54
    %1846 = vmatprep.subr.mxu0 0.0
    %1847 = vmatpush1.msra.mxu0 %v53
    %1848 = vmatprep.subr.mxu0 0.0
    %1849 = vmatpush1.msra.mxu0 %v52
    %1850 = vmatprep.subr.mxu0 0.0
    %1851 = vmatpush1.msra.mxu0 %v51
    %1852 = vmatprep.subr.mxu0 0.0
    %1853 = vmatpush2.msra.mxu0 %v82
    %1854 = vmatprep.subr.mxu0 0.0
    %1855 = vmatpush2.msra.mxu0 %v81
    %1856 = vmatprep.subr.mxu0 0.0
    %1857 = vmatpush2.msra.mxu0 %v80
    %1858 = vmatprep.subr.mxu0 0.0
    %1859 = vmatpush2.msra.mxu0 %v79
    %1860 = vmatprep.subr.mxu0 0.0
    %1861 = vmatpush2.msra.mxu0 %v78
    %1862 = vmatprep.subr.mxu0 0.0
    %1863 = vmatpush2.msra.mxu0 %v77
    %1864 = vmatprep.subr.mxu0 0.0
    %1865 = vmatpush2.msra.mxu0 %v76
    %1866 = vmatprep.subr.mxu0 0.0
    %1867 = vmatpush2.msra.mxu0 %v75
    %1868 = vmatprep.subr.mxu0 0.0
    %1869 = vmatpush2.msra.mxu0 %v74
    %1870 = vmatprep.subr.mxu0 0.0
    %1871 = vmatpush2.msra.mxu0 %v73
    %1872 = vmatprep.subr.mxu0 0.0
    %1873 = vmatpush2.msra.mxu0 %v72
    %1874 = vmatprep.subr.mxu0 0.0
    %1875 = vmatpush2.msra.mxu0 %v71
    %1876 = vmatprep.subr.mxu0 0.0
    %1877 = vmatpush2.msra.mxu0 %v70
    %1878 = vmatprep.subr.mxu0 0.0
    %1879 = vmatpush2.msra.mxu0 %v69
    %1880 = vmatprep.subr.mxu0 0.0
    %1881 = vmatpush2.msra.mxu0 %v68
    %1882 = vmatprep.subr.mxu0 0.0
    %1883 = vmatpush2.msra.mxu0 %v67
    %1884 = vmatprep.mubr.f32.mxu0 %v1737
    %1885 = vmatmul.mubr.f32.gmra.mxu0 %v1735
    %v1886 = vpop.f32.mrf.mxu0
    %v1887 = vadd.f32 0.0, %v1886
    %v1888 = vpop.f32.mrf.mxu0
    %1889 = vmatprep.mubr.f32.mxu0 %v1743
    %1890 = vmatmul.mubr.f32.gmra.mxu0 %v1741
    %v1891 = vpop.f32.mrf.mxu0
    %v1892 = vadd.f32 0.0, %v1891
    %v1893 = vpop.f32.mrf.mxu0
    %1894 = vdwg.mxu0
    %1895 = vmatprep.subr.mxu0 0.0
    %1896 = vmatpush1.msra.mxu0 %v98
    %1897 = vmatprep.subr.mxu0 0.0
    %1898 = vmatpush1.msra.mxu0 %v97
    %1899 = vmatprep.subr.mxu0 0.0
    %1900 = vmatpush1.msra.mxu0 %v96
    %1901 = vmatprep.subr.mxu0 0.0
    %1902 = vmatpush1.msra.mxu0 %v95
    %1903 = vmatprep.subr.mxu0 0.0
    %1904 = vmatpush1.msra.mxu0 %v94
    %1905 = vmatprep.subr.mxu0 0.0
    %1906 = vmatpush1.msra.mxu0 %v93
    %1907 = vmatprep.subr.mxu0 0.0
    %1908 = vmatpush1.msra.mxu0 %v92
    %1909 = vmatprep.subr.mxu0 0.0
    %1910 = vmatpush1.msra.mxu0 %v91
    %1911 = vmatprep.subr.mxu0 0.0
    %1912 = vmatpush1.msra.mxu0 %v90
    %1913 = vmatprep.subr.mxu0 0.0
    %1914 = vmatpush1.msra.mxu0 %v89
    %1915 = vmatprep.subr.mxu0 0.0
    %1916 = vmatpush1.msra.mxu0 %v88
    %1917 = vmatprep.subr.mxu0 0.0
    %1918 = vmatpush1.msra.mxu0 %v87
    %1919 = vmatprep.subr.mxu0 0.0
    %1920 = vmatpush1.msra.mxu0 %v86
    %1921 = vmatprep.subr.mxu0 0.0
    %1922 = vmatpush1.msra.mxu0 %v85
    %1923 = vmatprep.subr.mxu0 0.0
    %1924 = vmatpush1.msra.mxu0 %v84
    %1925 = vmatprep.subr.mxu0 0.0
    %1926 = vmatpush1.msra.mxu0 %v83
    %1927 = vmatprep.subr.mxu0 0.0
    %1928 = vmatpush2.msra.mxu0 0.0
    %1929 = vmatprep.subr.mxu0 0.0
    %1930 = vmatpush2.msra.mxu0 0.0
    %1931 = vmatprep.subr.mxu0 0.0
    %1932 = vmatpush2.msra.mxu0 0.0
    %1933 = vmatprep.subr.mxu0 0.0
    %1934 = vmatpush2.msra.mxu0 0.0
    %1935 = vmatprep.subr.mxu0 0.0
    %1936 = vmatpush2.msra.mxu0 0.0
    %1937 = vmatprep.subr.mxu0 0.0
    %1938 = vmatpush2.msra.mxu0 0.0
    %1939 = vmatprep.subr.mxu0 0.0
    %1940 = vmatpush2.msra.mxu0 0.0
    %1941 = vmatprep.subr.mxu0 0.0
    %1942 = vmatpush2.msra.mxu0 0.0
    %1943 = vmatprep.subr.mxu0 0.0
    %1944 = vmatpush2.msra.mxu0 0.0
    %1945 = vmatprep.subr.mxu0 0.0
    %1946 = vmatpush2.msra.mxu0 0.0
    %1947 = vmatprep.subr.mxu0 0.0
    %1948 = vmatpush2.msra.mxu0 0.0
    %1949 = vmatprep.subr.mxu0 0.0
    %1950 = vmatpush2.msra.mxu0 0.0
    %1951 = vmatprep.subr.mxu0 0.0
    %1952 = vmatpush2.msra.mxu0 0.0
    %1953 = vmatprep.subr.mxu0 0.0
    %1954 = vmatpush2.msra.mxu0 0.0
    %1955 = vmatprep.subr.mxu0 0.0
    %1956 = vmatpush2.msra.mxu0 0.0
    %1957 = vmatprep.subr.mxu0 0.0
    %1958 = vmatpush2.msra.mxu0 0.0
    %1959 = vmatprep.mubr.f32.mxu0 0.0
    %1960 = vmatmul.mubr.f32.gmra.mxu0 %v1812
    %v1961 = vpop.f32.mrf.mxu0
    %v1962 = vadd.f32 %v1887, %v1961
    %v1963 = vpop.f32.mrf.mxu0
    %1964 = vmatprep.mubr.f32.mxu0 0.0
    %1965 = vmatmul.mubr.f32.gmra.mxu0 %v1817
    %v1966 = vpop.f32.mrf.mxu0
    %v1967 = vadd.f32 %v1892, %v1966
    %v1968 = vpop.f32.mrf.mxu0
    %1969 = vdwg.mxu0
    %v1970 = vmul.f32 %v1962, 0.0028409092
    %v1971 = vmul.f32 %v1967, 0.0028409092
    %v1972 = vmul.f32 %v1735, %v1735
    %v1973 = vmul.f32 %v1737, %v1737
    %v1974 = vmul.f32 %v1812, %v1812
    %v1975 = vmul.f32 %v1741, %v1741
    %v1976 = vmul.f32 %v1743, %v1743
    %v1977 = vmul.f32 %v1817, %v1817
    %1978 = vmatprep.subr.mxu0 0.0
    %1979 = vmatpush1.msra.mxu0 %v66
    %1980 = vmatprep.subr.mxu0 0.0
    %1981 = vmatpush1.msra.mxu0 %v65
    %1982 = vmatprep.subr.mxu0 0.0
    %1983 = vmatpush1.msra.mxu0 %v64
    %1984 = vmatprep.subr.mxu0 0.0
    %1985 = vmatpush1.msra.mxu0 %v63
    %1986 = vmatprep.subr.mxu0 0.0
    %1987 = vmatpush1.msra.mxu0 %v62
    %1988 = vmatprep.subr.mxu0 0.0
    %1989 = vmatpush1.msra.mxu0 %v61
    %1990 = vmatprep.subr.mxu0 0.0
    %1991 = vmatpush1.msra.mxu0 %v60
    %1992 = vmatprep.subr.mxu0 0.0
    %1993 = vmatpush1.msra.mxu0 %v59
    %1994 = vmatprep.subr.mxu0 0.0
    %1995 = vmatpush1.msra.mxu0 %v58
    %1996 = vmatprep.subr.mxu0 0.0
    %1997 = vmatpush1.msra.mxu0 %v57
    %1998 = vmatprep.subr.mxu0 0.0
    %1999 = vmatpush1.msra.mxu0 %v56
    %2000 = vmatprep.subr.mxu0 0.0
    %2001 = vmatpush1.msra.mxu0 %v55
    %2002 = vmatprep.subr.mxu0 0.0
    %2003 = vmatpush1.msra.mxu0 %v54
    %2004 = vmatprep.subr.mxu0 0.0
    %2005 = vmatpush1.msra.mxu0 %v53
    %2006 = vmatprep.subr.mxu0 0.0
    %2007 = vmatpush1.msra.mxu0 %v52
    %2008 = vmatprep.subr.mxu0 0.0
    %2009 = vmatpush1.msra.mxu0 %v51
    %2010 = vmatprep.subr.mxu0 0.0
    %2011 = vmatpush2.msra.mxu0 %v82
    %2012 = vmatprep.subr.mxu0 0.0
    %2013 = vmatpush2.msra.mxu0 %v81
    %2014 = vmatprep.subr.mxu0 0.0
    %2015 = vmatpush2.msra.mxu0 %v80
    %2016 = vmatprep.subr.mxu0 0.0
    %2017 = vmatpush2.msra.mxu0 %v79
    %2018 = vmatprep.subr.mxu0 0.0
    %2019 = vmatpush2.msra.mxu0 %v78
    %2020 = vmatprep.subr.mxu0 0.0
    %2021 = vmatpush2.msra.mxu0 %v77
    %2022 = vmatprep.subr.mxu0 0.0
    %2023 = vmatpush2.msra.mxu0 %v76
    %2024 = vmatprep.subr.mxu0 0.0
    %2025 = vmatpush2.msra.mxu0 %v75
    %2026 = vmatprep.subr.mxu0 0.0
    %2027 = vmatpush2.msra.mxu0 %v74
    %2028 = vmatprep.subr.mxu0 0.0
    %2029 = vmatpush2.msra.mxu0 %v73
    %2030 = vmatprep.subr.mxu0 0.0
    %2031 = vmatpush2.msra.mxu0 %v72
    %2032 = vmatprep.subr.mxu0 0.0
    %2033 = vmatpush2.msra.mxu0 %v71
    %2034 = vmatprep.subr.mxu0 0.0
    %2035 = vmatpush2.msra.mxu0 %v70
    %2036 = vmatprep.subr.mxu0 0.0
    %2037 = vmatpush2.msra.mxu0 %v69
    %2038 = vmatprep.subr.mxu0 0.0
    %2039 = vmatpush2.msra.mxu0 %v68
    %2040 = vmatprep.subr.mxu0 0.0
    %2041 = vmatpush2.msra.mxu0 %v67
    %2042 = vmatprep.mubr.f32.mxu0 %v1973
    %2043 = vmatmul.mubr.f32.gmra.mxu0 %v1972
    %v2044 = vpop.f32.mrf.mxu0
    %v2045 = vadd.f32 0.0, %v2044
    %v2046 = vpop.f32.mrf.mxu0
    %2047 = vmatprep.mubr.f32.mxu0 %v1976
    %2048 = vmatmul.mubr.f32.gmra.mxu0 %v1975
    %v2049 = vpop.f32.mrf.mxu0
    %v2050 = vadd.f32 0.0, %v2049
    %v2051 = vpop.f32.mrf.mxu0
    %2052 = vdwg.mxu0
    %2053 = vmatprep.subr.mxu0 0.0
    %2054 = vmatpush1.msra.mxu0 %v98
    %2055 = vmatprep.subr.mxu0 0.0
    %2056 = vmatpush1.msra.mxu0 %v97
    %2057 = vmatprep.subr.mxu0 0.0
    %2058 = vmatpush1.msra.mxu0 %v96
    %2059 = vmatprep.subr.mxu0 0.0
    %2060 = vmatpush1.msra.mxu0 %v95
    %2061 = vmatprep.subr.mxu0 0.0
    %2062 = vmatpush1.msra.mxu0 %v94
    %2063 = vmatprep.subr.mxu0 0.0
    %2064 = vmatpush1.msra.mxu0 %v93
    %2065 = vmatprep.subr.mxu0 0.0
    %2066 = vmatpush1.msra.mxu0 %v92
    %2067 = vmatprep.subr.mxu0 0.0
    %2068 = vmatpush1.msra.mxu0 %v91
    %2069 = vmatprep.subr.mxu0 0.0
    %2070 = vmatpush1.msra.mxu0 %v90
    %2071 = vmatprep.subr.mxu0 0.0
    %2072 = vmatpush1.msra.mxu0 %v89
    %2073 = vmatprep.subr.mxu0 0.0
    %2074 = vmatpush1.msra.mxu0 %v88
    %2075 = vmatprep.subr.mxu0 0.0
    %2076 = vmatpush1.msra.mxu0 %v87
    %2077 = vmatprep.subr.mxu0 0.0
    %2078 = vmatpush1.msra.mxu0 %v86
    %2079 = vmatprep.subr.mxu0 0.0
    %2080 = vmatpush1.msra.mxu0 %v85
    %2081 = vmatprep.subr.mxu0 0.0
    %2082 = vmatpush1.msra.mxu0 %v84
    %2083 = vmatprep.subr.mxu0 0.0
    %2084 = vmatpush1.msra.mxu0 %v83
    %2085 = vmatprep.subr.mxu0 0.0
    %2086 = vmatpush2.msra.mxu0 0.0
    %2087 = vmatprep.subr.mxu0 0.0
    %2088 = vmatpush2.msra.mxu0 0.0
    %2089 = vmatprep.subr.mxu0 0.0
    %2090 = vmatpush2.msra.mxu0 0.0
    %2091 = vmatprep.subr.mxu0 0.0
    %2092 = vmatpush2.msra.mxu0 0.0
    %2093 = vmatprep.subr.mxu0 0.0
    %2094 = vmatpush2.msra.mxu0 0.0
    %2095 = vmatprep.subr.mxu0 0.0
    %2096 = vmatpush2.msra.mxu0 0.0
    %2097 = vmatprep.subr.mxu0 0.0
    %2098 = vmatpush2.msra.mxu0 0.0
    %2099 = vmatprep.subr.mxu0 0.0
    %2100 = vmatpush2.msra.mxu0 0.0
    %2101 = vmatprep.subr.mxu0 0.0
    %2102 = vmatpush2.msra.mxu0 0.0
    %2103 = vmatprep.subr.mxu0 0.0
    %2104 = vmatpush2.msra.mxu0 0.0
    %2105 = vmatprep.subr.mxu0 0.0
    %2106 = vmatpush2.msra.mxu0 0.0
    %2107 = vmatprep.subr.mxu0 0.0
    %2108 = vmatpush2.msra.mxu0 0.0
    %2109 = vmatprep.subr.mxu0 0.0
    %2110 = vmatpush2.msra.mxu0 0.0
    %2111 = vmatprep.subr.mxu0 0.0
    %2112 = vmatpush2.msra.mxu0 0.0
    %2113 = vmatprep.subr.mxu0 0.0
    %2114 = vmatpush2.msra.mxu0 0.0
    %2115 = vmatprep.subr.mxu0 0.0
    %2116 = vmatpush2.msra.mxu0 0.0
    %2117 = vmatprep.mubr.f32.mxu0 0.0
    %2118 = vmatmul.mubr.f32.gmra.mxu0 %v1974
    %v2119 = vpop.f32.mrf.mxu0
    %v2120 = vadd.f32 %v2045, %v2119
    %v2121 = vpop.f32.mrf.mxu0
    %2122 = vmatprep.mubr.f32.mxu0 0.0
    %2123 = vmatmul.mubr.f32.gmra.mxu0 %v1977
    %v2124 = vpop.f32.mrf.mxu0
    %v2125 = vadd.f32 %v2050, %v2124
    %v2126 = vpop.f32.mrf.mxu0
    %2127 = vdwg.mxu0
    %v2128 = vmul.f32 %v2120, 0.0028409092
    %v2129 = vmul.f32 %v2125, 0.0028409092
    %v2130 = vmul.f32 %v1970, %v1970
    %v2131 = vmul.f32 %v1971, %v1971
    %v2132 = vsub.f32 %v2128, %v2130
    %v2133 = vsub.f32 %v2129, %v2131
    %v2134 = vadd.f32 %v2132, 1e-05
    %v2135 = vadd.f32 %v2133, 1e-05
    %v2136 = vrsqrt.pop %v2134
    %v2137 = vrsqrt.pop %v2135
    %2140 = vrot.lane.b32.xlu0 %v2136, 4
    %v2141 = vpop.permute.xlu0 %2140
    %2142 = vrot.lane.b32.xlu0 %v2137, 4
    %v2143 = vpop.permute.xlu0 %2142
    %v2146 = vmul.f32 %v45, %v2141
    %v2147 = vmul.f32 %v46, %v2143
    %2149 = vset.pattern.permute.xlu0 4
    %2150 = vperm.xlu0 %2149, %v2146
    %v2151 = vpop.permute.xlu0 %2150
    %2154 = vset.pattern.permute.xlu0 4
    %2155 = vperm.xlu0 %2154, %v2147
    %v2156 = vpop.permute.xlu0 %2155
    %v2158 = vmul.f32 %v1735, %v2151
    %v2159 = vmul.f32 %v1737, %v2151
    %v2160 = vmul.f32 %v1812, %v2151
    %v2161 = vmul.f32 %v1741, %v2156
    %v2162 = vmul.f32 %v1743, %v2156
    %v2163 = vmul.f32 %v1817, %v2156
    %2164 = vrot.lane.b32.xlu0 %v2146, 124
    %v2165 = vpop.permute.xlu0 %2164
    %2166 = vrot.lane.b32.xlu0 %v2147, 124
    %v2167 = vpop.permute.xlu0 %2166
    %v2170 = vmul.f32 %v1970, %v2165
    %v2171 = vmul.f32 %v1971, %v2167
    %2174 = vrot.lane.b32.xlu0 %v2170, 5
    %v2175 = vpop.permute.xlu0 %2174
    %2176 = vrot.lane.b32.xlu0 %v2171, 5
    %v2177 = vpop.permute.xlu0 %2176
    %v2180 = vsub.f32 %v45, %v2175
    %v2181 = vsub.f32 %v46, %v2177
    %2183 = vset.pattern.permute.xlu0 5
    %2184 = vperm.xlu0 %2183, %v2180
    %v2185 = vpop.permute.xlu0 %2184
    %2188 = vset.pattern.permute.xlu0 5
    %2189 = vperm.xlu0 %2188, %v2181
    %v2190 = vpop.permute.xlu0 %2189
    %v2192 = vadd.f32 %v2158, %v2185
    %v2193 = vadd.f32 %v2159, %v2185
    %v2194 = vadd.f32 %v2160, %v2185
    %v2195 = vadd.f32 %v2161, %v2190
    %v2196 = vadd.f32 %v2162, %v2190
    %v2197 = vadd.f32 %v2163, %v2190
    %v2198 = vadd.f32 %v2192, %v1117
    %v2199 = vadd.f32 %v2193, %v1118
    %v2200 = vadd.f32 %v2194, %v1119
    %v2201 = vadd.f32 %v2195, %v1120
    %v2202 = vadd.f32 %v2196, %v1121
    %v2203 = vadd.f32 %v2197, %v1122
    %v2204 = vmax.f32 %v2198, 0.0
    %v2205 = vmax.f32 %v2199, 0.0
    %v2206 = vmax.f32 %v2200, 0.0
    %v2207 = vmax.f32 %v2201, 0.0
    %v2208 = vmax.f32 %v2202, 0.0
    %v2209 = vmax.f32 %v2203, 0.0
    %v2210 = vmul.f32 %v2204, %v749
    %v2211 = vmul.f32 %v2205, %v753
    %v2212 = vmul.f32 %v2206, %v757
    %v2213 = vmul.f32 %v2207, %v749
    %v2214 = vmul.f32 %v2208, %v753
    %v2215 = vmul.f32 %v2209, %v757
    %2216 = vrot.lane.b32.xlu0 %v2210, 127
    %v2217 = vpop.permute.xlu0 %2216
    %2218 = vrot.lane.b32.xlu0 %v2213, 127
    %v2219 = vpop.permute.xlu0 %2218
    %2220 = vrot.lane.b32.xlu0 %v2211, 127
    %v2221 = vpop.permute.xlu0 %2220
    %2222 = vrot.lane.b32.xlu0 %v2214, 127
    %v2223 = vpop.permute.xlu0 %2222
    %2224 = vrot.lane.b32.xlu0 %v2212, 127
    %v2225 = vpop.permute.xlu0 %2224
    %2226 = vrot.lane.b32.xlu0 %v2215, 127
    %v2227 = vpop.permute.xlu0 %2226
    %v2228 = vsel %vm152, %v2221, %v2225
    %v2229 = vsel %vm152, %v2223, %v2227
    %v2230 = vsel %vm152, %v2217, %v2221
    %v2231 = vsel %vm152, %v2219, %v2223
    %v2232 = vsel %vm152, %v2225, %v2217
    %v2233 = vsel %vm152, %v2227, %v2219
    %v2234 = vmax.f32 %v2210, %v2230
    %v2235 = vmax.f32 %v2211, %v2228
    %v2236 = vmax.f32 %v2212, %v2232
    %v2237 = vmax.f32 %v2213, %v2231
    %v2238 = vmax.f32 %v2214, %v2229
    %v2239 = vmax.f32 %v2215, %v2233
    %2240 = vrot.lane.b32.xlu0 %v2210, 126
    %v2241 = vpop.permute.xlu0 %2240
    %2242 = vrot.lane.b32.xlu0 %v2213, 126
    %v2243 = vpop.permute.xlu0 %2242
    %2244 = vrot.lane.b32.xlu0 %v2211, 126
    %v2245 = vpop.permute.xlu0 %2244
    %2246 = vrot.lane.b32.xlu0 %v2214, 126
    %v2247 = vpop.permute.xlu0 %2246
    %2248 = vrot.lane.b32.xlu0 %v2212, 126
    %v2249 = vpop.permute.xlu0 %2248
    %2250 = vrot.lane.b32.xlu0 %v2215, 126
    %v2251 = vpop.permute.xlu0 %2250
    %v2252 = vsel %vm162, %v2245, %v2249
    %v2253 = vsel %vm162, %v2247, %v2251
    %v2254 = vsel %vm162, %v2241, %v2245
    %v2255 = vsel %vm162, %v2243, %v2247
    %v2256 = vsel %vm162, %v2249, %v2241
    %v2257 = vsel %vm162, %v2251, %v2243
    %v2258 = vmax.f32 %v2234, %v2254
    %v2259 = vmax.f32 %v2235, %v2252
    %v2260 = vmax.f32 %v2236, %v2256
    %v2261 = vmax.f32 %v2237, %v2255
    %v2262 = vmax.f32 %v2238, %v2253
    %v2263 = vmax.f32 %v2239, %v2257
    %v2264 = vld [vmem:[#allocation4] sm:$0xff]
    %v2265 = vld [vmem:[#allocation4 + $0x8] sm:$0xff]
    %v2266 = vld [vmem:[#allocation4 + $0x18] sm:$0xff]
    %v2267 = vld [vmem:[#allocation4 + $0x20] sm:$0xff]
    %v2268 = vld [vmem:[#allocation4 + $0x30] sm:$0xff]
    %v2269 = vld [vmem:[#allocation4 + $0x38] sm:$0xff]
    %v2270 = vld [vmem:[#allocation4 + $0x48] sm:$0xff]
    %v2271 = vld [vmem:[#allocation4 + $0x50] sm:$0xff]
    %v2272 = vld [vmem:[#allocation4 + $0x60] sm:$0xff]
    %v2273 = vld [vmem:[#allocation4 + $0x68] sm:$0xff]
    %v2274 = vld [vmem:[#allocation4 + $0x78] sm:$0xff]
    %v2275 = vld [vmem:[#allocation4 + $0x80] sm:$0xff]
    %v2276 = vld [vmem:[#allocation4 + $0x90] sm:$0xff]
    %v2277 = vld [vmem:[#allocation4 + $0x98] sm:$0xff]
    %v2278 = vld [vmem:[#allocation4 + $0xa8] sm:$0xff]
    %v2279 = vld [vmem:[#allocation4 + $0xb0] sm:$0xff]
    %v2280 = vld [vmem:[#allocation4 + $0xc0] sm:$0xff]
    %v2281 = vld [vmem:[#allocation4 + $0xc8] sm:$0xff]
    %v2282 = vld [vmem:[#allocation4 + $0xd8] sm:$0xff]
    %v2283 = vld [vmem:[#allocation4 + $0xe0] sm:$0xff]
    %v2284 = vld [vmem:[#allocation4 + $0xf0] sm:$0xff]
    %v2285 = vld [vmem:[#allocation4 + $0xf8] sm:$0xff]
    %v2286 = vld [vmem:[#allocation4 + $0x108] sm:$0xff]
    %v2287 = vld [vmem:[#allocation4 + $0x110] sm:$0xff]
    %v2288 = vld [vmem:[#allocation4 + $0x120] sm:$0xff]
    %v2289 = vld [vmem:[#allocation4 + $0x128] sm:$0xff]
    %v2290 = vld [vmem:[#allocation4 + $0x138] sm:$0xff]
    %v2291 = vld [vmem:[#allocation4 + $0x140] sm:$0xff]
    %v2292 = vld [vmem:[#allocation4 + $0x150] sm:$0xff]
    %v2293 = vld [vmem:[#allocation4 + $0x158] sm:$0xff]
    %v2294 = vld [vmem:[#allocation4 + $0x168] sm:$0xff]
    %v2295 = vld [vmem:[#allocation4 + $0x170] sm:$0xff]
    %v2296 = vld [vmem:[#allocation4 + $0x180] sm:$0xff]
    %v2297 = vld [vmem:[#allocation4 + $0x188] sm:$0xff]
    %v2298 = vld [vmem:[#allocation4 + $0x198] sm:$0xff]
    %v2299 = vld [vmem:[#allocation4 + $0x1a0] sm:$0xff]
    %v2300 = vld [vmem:[#allocation4 + $0x1b0] sm:$0xff]
    %v2301 = vld [vmem:[#allocation4 + $0x1b8] sm:$0xff]
    %v2302 = vld [vmem:[#allocation4 + $0x1c8] sm:$0xff]
    %v2303 = vld [vmem:[#allocation4 + $0x1d0] sm:$0xff]
    %v2304 = vld [vmem:[#allocation4 + $0x1e0] sm:$0xff]
    %v2305 = vld [vmem:[#allocation4 + $0x1e8] sm:$0xff]
    %v2306 = vld [vmem:[#allocation4 + $0x1f8] sm:$0xff]
    %v2307 = vld [vmem:[#allocation4 + $0x200] sm:$0xff]
    %v2308 = vld [vmem:[#allocation4 + $0x210] sm:$0xff]
    %v2309 = vld [vmem:[#allocation4 + $0x218] sm:$0xff]
    %v2310 = vld [vmem:[#allocation4 + $0x228] sm:$0xff]
    %v2311 = vld [vmem:[#allocation4 + $0x230] sm:$0xff]
    %v2312 = vld [vmem:[#allocation4 + $0x240] sm:$0xff]
    %v2313 = vld [vmem:[#allocation4 + $0x248] sm:$0xff]
    %v2314 = vld [vmem:[#allocation4 + $0x258] sm:$0xff]
    %v2315 = vld [vmem:[#allocation4 + $0x260] sm:$0xff]
    %v2316 = vld [vmem:[#allocation4 + $0x270] sm:$0xff]
    %v2317 = vld [vmem:[#allocation4 + $0x278] sm:$0xff]
    %v2318 = vld [vmem:[#allocation4 + $0x288] sm:$0xff]
    %v2319 = vld [vmem:[#allocation4 + $0x290] sm:$0xff]
    %v2320 = vld [vmem:[#allocation4 + $0x2a0] sm:$0xff]
    %v2321 = vld [vmem:[#allocation4 + $0x2a8] sm:$0xff]
    %v2322 = vld [vmem:[#allocation4 + $0x2b8] sm:$0xff]
    %v2323 = vld [vmem:[#allocation4 + $0x2c0] sm:$0xff]
    %v2324 = vld [vmem:[#allocation4 + $0x2d0] sm:$0xff]
    %v2325 = vld [vmem:[#allocation4 + $0x2d8] sm:$0xff]
    %v2326 = vld [vmem:[#allocation4 + $0x2e8] sm:$0xff]
    %v2327 = vld [vmem:[#allocation4 + $0x2f0] sm:$0xff]
    %v2328 = vld [vmem:[#allocation4 + $0x300] sm:$0xff]
    %v2329 = vld [vmem:[#allocation4 + $0x308] sm:$0xff]
    %v2330 = vld [vmem:[#allocation4 + $0x318] sm:$0xff]
    %v2331 = vld [vmem:[#allocation4 + $0x320] sm:$0xff]
    %v2332 = vld [vmem:[#allocation4 + $0x330] sm:$0xff]
    %v2333 = vld [vmem:[#allocation4 + $0x338] sm:$0xff]
    %v2334 = vld [vmem:[#allocation4 + $0x348] sm:$0xff]
    %v2335 = vld [vmem:[#allocation4 + $0x350] sm:$0xff]
    %v2336 = vld [vmem:[#allocation4 + $0x360] sm:$0xff]
    %v2337 = vld [vmem:[#allocation4 + $0x368] sm:$0xff]
    %v2338 = vld [vmem:[#allocation4 + $0x378] sm:$0xff]
    %v2339 = vld [vmem:[#allocation4 + $0x380] sm:$0xff]
    %v2340 = vld [vmem:[#allocation4 + $0x390] sm:$0xff]
    %v2341 = vld [vmem:[#allocation4 + $0x398] sm:$0xff]
    %v2342 = vld [vmem:[#allocation4 + $0x3a8] sm:$0xff]
    %v2343 = vld [vmem:[#allocation4 + $0x3b0] sm:$0xff]
    %v2344 = vld [vmem:[#allocation4 + $0x3c0] sm:$0xff]
    %v2345 = vld [vmem:[#allocation4 + $0x3c8] sm:$0xff]
    %v2346 = vld [vmem:[#allocation4 + $0x3d8] sm:$0xff]
    %v2347 = vld [vmem:[#allocation4 + $0x3e0] sm:$0xff]
    %v2348 = vld [vmem:[#allocation4 + $0x3f0] sm:$0xff]
    %v2349 = vld [vmem:[#allocation4 + $0x3f8] sm:$0xff]
    %v2350 = vld [vmem:[#allocation4 + $0x408] sm:$0xff]
    %v2351 = vld [vmem:[#allocation4 + $0x410] sm:$0xff]
    %v2352 = vld [vmem:[#allocation4 + $0x420] sm:$0xff]
    %v2353 = vld [vmem:[#allocation4 + $0x428] sm:$0xff]
    %v2354 = vld [vmem:[#allocation4 + $0x438] sm:$0xff]
    %v2355 = vld [vmem:[#allocation4 + $0x440] sm:$0xff]
    %v2356 = vld [vmem:[#allocation4 + $0x450] sm:$0xff]
    %v2357 = vld [vmem:[#allocation4 + $0x458] sm:$0xff]
    %v2358 = vld [vmem:[#allocation4 + $0x468] sm:$0xff]
    %v2359 = vld [vmem:[#allocation4 + $0x470] sm:$0xff]
    %2360 = vmatprep.subr.mxu0 %v2295
    %2361 = vmatpush1.msra.mxu0 %v2294
    %2362 = vmatprep.subr.mxu0 %v2293
    %2363 = vmatpush1.msra.mxu0 %v2292
    %2364 = vmatprep.subr.mxu0 %v2291
    %2365 = vmatpush1.msra.mxu0 %v2290
    %2366 = vmatprep.subr.mxu0 %v2289
    %2367 = vmatpush1.msra.mxu0 %v2288
    %2368 = vmatprep.subr.mxu0 %v2287
    %2369 = vmatpush1.msra.mxu0 %v2286
    %2370 = vmatprep.subr.mxu0 %v2285
    %2371 = vmatpush1.msra.mxu0 %v2284
    %2372 = vmatprep.subr.mxu0 %v2283
    %2373 = vmatpush1.msra.mxu0 %v2282
    %2374 = vmatprep.subr.mxu0 %v2281
    %2375 = vmatpush1.msra.mxu0 %v2280
    %2376 = vmatprep.subr.mxu0 %v2279
    %2377 = vmatpush1.msra.mxu0 %v2278
    %2378 = vmatprep.subr.mxu0 %v2277
    %2379 = vmatpush1.msra.mxu0 %v2276
    %2380 = vmatprep.subr.mxu0 %v2275
    %2381 = vmatpush1.msra.mxu0 %v2274
    %2382 = vmatprep.subr.mxu0 %v2273
    %2383 = vmatpush1.msra.mxu0 %v2272
    %2384 = vmatprep.subr.mxu0 %v2271
    %2385 = vmatpush1.msra.mxu0 %v2270
    %2386 = vmatprep.subr.mxu0 %v2269
    %2387 = vmatpush1.msra.mxu0 %v2268
    %2388 = vmatprep.subr.mxu0 %v2267
    %2389 = vmatpush1.msra.mxu0 %v2266
    %2390 = vmatprep.subr.mxu0 %v2265
    %2391 = vmatpush1.msra.mxu0 %v2264
    %2392 = vmatprep.subr.mxu0 %v2327
    %2393 = vmatpush2.msra.mxu0 %v2326
    %2394 = vmatprep.subr.mxu0 %v2325
    %2395 = vmatpush2.msra.mxu0 %v2324
    %2396 = vmatprep.subr.mxu0 %v2323
    %2397 = vmatpush2.msra.mxu0 %v2322
    %2398 = vmatprep.subr.mxu0 %v2321
    %2399 = vmatpush2.msra.mxu0 %v2320
    %2400 = vmatprep.subr.mxu0 %v2319
    %2401 = vmatpush2.msra.mxu0 %v2318
    %2402 = vmatprep.subr.mxu0 %v2317
    %2403 = vmatpush2.msra.mxu0 %v2316
    %2404 = vmatprep.subr.mxu0 %v2315
    %2405 = vmatpush2.msra.mxu0 %v2314
    %2406 = vmatprep.subr.mxu0 %v2313
    %2407 = vmatpush2.msra.mxu0 %v2312
    %2408 = vmatprep.subr.mxu0 %v2311
    %2409 = vmatpush2.msra.mxu0 %v2310
    %2410 = vmatprep.subr.mxu0 %v2309
    %2411 = vmatpush2.msra.mxu0 %v2308
    %2412 = vmatprep.subr.mxu0 %v2307
    %2413 = vmatpush2.msra.mxu0 %v2306
    %2414 = vmatprep.subr.mxu0 %v2305
    %2415 = vmatpush2.msra.mxu0 %v2304
    %2416 = vmatprep.subr.mxu0 %v2303
    %2417 = vmatpush2.msra.mxu0 %v2302
    %2418 = vmatprep.subr.mxu0 %v2301
    %2419 = vmatpush2.msra.mxu0 %v2300
    %2420 = vmatprep.subr.mxu0 %v2299
    %2421 = vmatpush2.msra.mxu0 %v2298
    %2422 = vmatprep.subr.mxu0 %v2297
    %2423 = vmatpush2.msra.mxu0 %v2296
    %2424 = vmatprep.mubr.f32.mxu0 %v2259
    %2425 = vmatmul.mubr.f32.gmra.mxu0 %v2258
    %v2426 = vpop.f32.mrf.mxu0
    %v2427 = vadd.f32 0.0, %v2426
    %v2428 = vpop.f32.mrf.mxu0
    %v2429 = vadd.f32 0.0, %v2428
    %2430 = vmatprep.mubr.f32.mxu0 %v2262
    %2431 = vmatmul.mubr.f32.gmra.mxu0 %v2261
    %v2432 = vpop.f32.mrf.mxu0
    %v2433 = vadd.f32 0.0, %v2432
    %v2434 = vpop.f32.mrf.mxu0
    %v2435 = vadd.f32 0.0, %v2434
    %2436 = vdwg.mxu0
    %2437 = vmatprep.subr.mxu0 %v2359
    %2438 = vmatpush1.msra.mxu0 %v2358
    %2439 = vmatprep.subr.mxu0 %v2357
    %2440 = vmatpush1.msra.mxu0 %v2356
    %2441 = vmatprep.subr.mxu0 %v2355
    %2442 = vmatpush1.msra.mxu0 %v2354
    %2443 = vmatprep.subr.mxu0 %v2353
    %2444 = vmatpush1.msra.mxu0 %v2352
    %2445 = vmatprep.subr.mxu0 %v2351
    %2446 = vmatpush1.msra.mxu0 %v2350
    %2447 = vmatprep.subr.mxu0 %v2349
    %2448 = vmatpush1.msra.mxu0 %v2348
    %2449 = vmatprep.subr.mxu0 %v2347
    %2450 = vmatpush1.msra.mxu0 %v2346
    %2451 = vmatprep.subr.mxu0 %v2345
    %2452 = vmatpush1.msra.mxu0 %v2344
    %2453 = vmatprep.subr.mxu0 %v2343
    %2454 = vmatpush1.msra.mxu0 %v2342
    %2455 = vmatprep.subr.mxu0 %v2341
    %2456 = vmatpush1.msra.mxu0 %v2340
    %2457 = vmatprep.subr.mxu0 %v2339
    %2458 = vmatpush1.msra.mxu0 %v2338
    %2459 = vmatprep.subr.mxu0 %v2337
    %2460 = vmatpush1.msra.mxu0 %v2336
    %2461 = vmatprep.subr.mxu0 %v2335
    %2462 = vmatpush1.msra.mxu0 %v2334
    %2463 = vmatprep.subr.mxu0 %v2333
    %2464 = vmatpush1.msra.mxu0 %v2332
    %2465 = vmatprep.subr.mxu0 %v2331
    %2466 = vmatpush1.msra.mxu0 %v2330
    %2467 = vmatprep.subr.mxu0 %v2329
    %2468 = vmatpush1.msra.mxu0 %v2328
    %2469 = vmatprep.subr.mxu0 0.0
    %2470 = vmatpush2.msra.mxu0 0.0
    %2471 = vmatprep.subr.mxu0 0.0
    %2472 = vmatpush2.msra.mxu0 0.0
    %2473 = vmatprep.subr.mxu0 0.0
    %2474 = vmatpush2.msra.mxu0 0.0
    %2475 = vmatprep.subr.mxu0 0.0
    %2476 = vmatpush2.msra.mxu0 0.0
    %2477 = vmatprep.subr.mxu0 0.0
    %2478 = vmatpush2.msra.mxu0 0.0
    %2479 = vmatprep.subr.mxu0 0.0
    %2480 = vmatpush2.msra.mxu0 0.0
    %2481 = vmatprep.subr.mxu0 0.0
    %2482 = vmatpush2.msra.mxu0 0.0
    %2483 = vmatprep.subr.mxu0 0.0
    %2484 = vmatpush2.msra.mxu0 0.0
    %2485 = vmatprep.subr.mxu0 0.0
    %2486 = vmatpush2.msra.mxu0 0.0
    %2487 = vmatprep.subr.mxu0 0.0
    %2488 = vmatpush2.msra.mxu0 0.0
    %2489 = vmatprep.subr.mxu0 0.0
    %2490 = vmatpush2.msra.mxu0 0.0
    %2491 = vmatprep.subr.mxu0 0.0
    %2492 = vmatpush2.msra.mxu0 0.0
    %2493 = vmatprep.subr.mxu0 0.0
    %2494 = vmatpush2.msra.mxu0 0.0
    %2495 = vmatprep.subr.mxu0 0.0
    %2496 = vmatpush2.msra.mxu0 0.0
    %2497 = vmatprep.subr.mxu0 0.0
    %2498 = vmatpush2.msra.mxu0 0.0
    %2499 = vmatprep.subr.mxu0 0.0
    %2500 = vmatpush2.msra.mxu0 0.0
    %2501 = vmatprep.mubr.f32.mxu0 0.0
    %2502 = vmatmul.mubr.f32.gmra.mxu0 %v2260
    %v2503 = vpop.f32.mrf.mxu0
    %v2504 = vadd.f32 %v2427, %v2503
    %v2505 = vpop.f32.mrf.mxu0
    %v2506 = vadd.f32 %v2429, %v2505
    %2507 = vmatprep.mubr.f32.mxu0 0.0
    %2508 = vmatmul.mubr.f32.gmra.mxu0 %v2263
    %v2509 = vpop.f32.mrf.mxu0
    %v2510 = vadd.f32 %v2433, %v2509
    %v2511 = vpop.f32.mrf.mxu0
    %v2512 = vadd.f32 %v2435, %v2511
    %2513 = vdwg.mxu0
    %s2514 = scalar_lea.vmem [#allocation2], 192
    %v2515 = vld [vmem:[%s2514] sm:$0xff]
    %v2516 = vld [vmem:[%s2514 + $0x8] sm:$0xff]
    %v2517 = vld [vmem:[%s2514 + $0x10] sm:$0xff]
    %v2518 = vld [vmem:[%s2514 + $0x18] sm:$0xff]
    %v2519 = vld [vmem:[%s2514 + $0x20] sm:$0xff]
    %v2520 = vld [vmem:[%s2514 + $0x28] sm:$0xff]
    %v2521 = vld [vmem:[%s2514 + $0x30] sm:$0xff]
    %v2522 = vld [vmem:[%s2514 + $0x38] sm:$0xff]
    %2523 = vrot.lane.b32.xlu0 %v2504, 4
    %v2524 = vpop.permute.xlu0 %2523
    %2525 = vrot.lane.b32.xlu0 %v2510, 4
    %v2526 = vpop.permute.xlu0 %2525
    %2527 = vrot.lane.b32.xlu0 %v2506, 4
    %v2528 = vpop.permute.xlu0 %2527
    %2529 = vrot.lane.b32.xlu0 %v2512, 4
    %v2530 = vpop.permute.xlu0 %2529
    %v2531 = vsel %vm112, %v2524, %v2528
    %v2532 = vsel %vm112, %v2526, %v2530
    %v2533 = vsel %vm112, %v2528, %v2524
    %v2534 = vsel %vm112, %v2530, %v2526
    %2535 = vrot.lane.b32.xlu0 %v2504, 3
    %v2536 = vpop.permute.xlu0 %2535
    %2537 = vrot.lane.b32.xlu0 %v2510, 3
    %v2538 = vpop.permute.xlu0 %2537
    %2539 = vrot.lane.b32.xlu0 %v2506, 3
    %v2540 = vpop.permute.xlu0 %2539
    %2541 = vrot.lane.b32.xlu0 %v2512, 3
    %v2542 = vpop.permute.xlu0 %2541
    %v2543 = vsel %vm122, %v2536, %v2540
    %v2544 = vsel %vm122, %v2538, %v2542
    %v2545 = vsel %vm122, %v2540, %v2536
    %v2546 = vsel %vm122, %v2542, %v2538
    %2547 = vrot.lane.b32.xlu0 %v2504, 2
    %v2548 = vpop.permute.xlu0 %2547
    %2549 = vrot.lane.b32.xlu0 %v2510, 2
    %v2550 = vpop.permute.xlu0 %2549
    %2551 = vrot.lane.b32.xlu0 %v2506, 2
    %v2552 = vpop.permute.xlu0 %2551
    %2553 = vrot.lane.b32.xlu0 %v2512, 2
    %v2554 = vpop.permute.xlu0 %2553
    %v2555 = vsel %vm132, %v2548, %v2552
    %v2556 = vsel %vm132, %v2550, %v2554
    %v2557 = vsel %vm132, %v2552, %v2548
    %v2558 = vsel %vm132, %v2554, %v2550
    %2559 = vrot.lane.b32.xlu0 %v2504, 1
    %v2560 = vpop.permute.xlu0 %2559
    %2561 = vrot.lane.b32.xlu0 %v2510, 1
    %v2562 = vpop.permute.xlu0 %2561
    %2563 = vrot.lane.b32.xlu0 %v2506, 1
    %v2564 = vpop.permute.xlu0 %2563
    %2565 = vrot.lane.b32.xlu0 %v2512, 1
    %v2566 = vpop.permute.xlu0 %2565
    %v2567 = vsel %vm142, %v2560, %v2564
    %v2568 = vsel %vm142, %v2562, %v2566
    %v2569 = vsel %vm142, %v2564, %v2560
    %v2570 = vsel %vm142, %v2566, %v2562
    %2571 = vrot.lane.b32.xlu0 %v2504, 127
    %v2572 = vpop.permute.xlu0 %2571
    %2573 = vrot.lane.b32.xlu0 %v2510, 127
    %v2574 = vpop.permute.xlu0 %2573
    %2575 = vrot.lane.b32.xlu0 %v2506, 127
    %v2576 = vpop.permute.xlu0 %2575
    %2577 = vrot.lane.b32.xlu0 %v2512, 127
    %v2578 = vpop.permute.xlu0 %2577
    %v2579 = vsel %vm152, %v2572, %v2576
    %v2580 = vsel %vm152, %v2574, %v2578
    %v2581 = vsel %vm152, %v2576, %v2572
    %v2582 = vsel %vm152, %v2578, %v2574
    %2583 = vrot.lane.b32.xlu0 %v2504, 126
    %v2584 = vpop.permute.xlu0 %2583
    %2585 = vrot.lane.b32.xlu0 %v2510, 126
    %v2586 = vpop.permute.xlu0 %2585
    %2587 = vrot.lane.b32.xlu0 %v2506, 126
    %v2588 = vpop.permute.xlu0 %2587
    %2589 = vrot.lane.b32.xlu0 %v2512, 126
    %v2590 = vpop.permute.xlu0 %2589
    %v2591 = vsel %vm162, %v2584, %v2588
    %v2592 = vsel %vm162, %v2586, %v2590
    %v2593 = vsel %vm162, %v2588, %v2584
    %v2594 = vsel %vm162, %v2590, %v2586
    %2595 = vrot.lane.b32.xlu0 %v2504, 125
    %v2596 = vpop.permute.xlu0 %2595
    %2597 = vrot.lane.b32.xlu0 %v2510, 125
    %v2598 = vpop.permute.xlu0 %2597
    %2599 = vrot.lane.b32.xlu0 %v2506, 125
    %v2600 = vpop.permute.xlu0 %2599
    %2601 = vrot.lane.b32.xlu0 %v2512, 125
    %v2602 = vpop.permute.xlu0 %2601
    %v2603 = vsel %vm172, %v2596, %v2600
    %v2604 = vsel %vm172, %v2598, %v2602
    %v2605 = vsel %vm172, %v2600, %v2596
    %v2606 = vsel %vm172, %v2602, %v2598
    %2607 = vrot.lane.b32.xlu0 %v2504, 124
    %v2608 = vpop.permute.xlu0 %2607
    %2609 = vrot.lane.b32.xlu0 %v2510, 124
    %v2610 = vpop.permute.xlu0 %2609
    %2611 = vrot.lane.b32.xlu0 %v2506, 124
    %v2612 = vpop.permute.xlu0 %2611
    %2613 = vrot.lane.b32.xlu0 %v2512, 124
    %v2614 = vpop.permute.xlu0 %2613
    %v2615 = vsel %vm182, %v2608, %v2612
    %v2616 = vsel %vm182, %v2610, %v2614
    %v2617 = vsel %vm182, %v2612, %v2608
    %v2618 = vsel %vm182, %v2614, %v2610
    %v2620 = vsel %vm920, %v2516, 0
    %v2623 = vsel %vm920, %v2518, 0
    %v2626 = vsel %vm920, %v2520, 0
    %v2629 = vsel %vm920, %v2522, 0
    %2631 = vmatprep.subr.mxu0 %v2606
    %2632 = vmatpush1.msra.mxu0 %v2604
    %2633 = vmatprep.subr.mxu0 %v2605
    %2634 = vmatpush1.msra.mxu0 %v2603
    %2635 = vmatprep.subr.mxu0 %v2594
    %2636 = vmatpush1.msra.mxu0 %v2592
    %2637 = vmatprep.subr.mxu0 %v2593
    %2638 = vmatpush1.msra.mxu0 %v2591
    %2639 = vmatprep.subr.mxu0 %v2582
    %2640 = vmatpush1.msra.mxu0 %v2580
    %2641 = vmatprep.subr.mxu0 %v2581
    %2642 = vmatpush1.msra.mxu0 %v2579
    %2643 = vmatprep.subr.mxu0 %v2512
    %2644 = vmatpush1.msra.mxu0 %v2510
    %2645 = vmatprep.subr.mxu0 %v2506
    %2646 = vmatpush1.msra.mxu0 %v2504
    %2647 = vmatprep.subr.mxu0 %v2568
    %2648 = vmatpush1.msra.mxu0 %v2570
    %2649 = vmatprep.subr.mxu0 %v2567
    %2650 = vmatpush1.msra.mxu0 %v2569
    %2651 = vmatprep.subr.mxu0 %v2556
    %2652 = vmatpush1.msra.mxu0 %v2558
    %2653 = vmatprep.subr.mxu0 %v2555
    %2654 = vmatpush1.msra.mxu0 %v2557
    %2655 = vmatprep.subr.mxu0 %v2544
    %2656 = vmatpush1.msra.mxu0 %v2546
    %2657 = vmatprep.subr.mxu0 %v2543
    %2658 = vmatpush1.msra.mxu0 %v2545
    %2659 = vmatprep.subr.mxu0 %v2532
    %2660 = vmatpush1.msra.mxu0 %v2534
    %2661 = vmatprep.subr.mxu0 %v2531
    %2662 = vmatpush1.msra.mxu0 %v2533
    %2663 = vmatprep.subr.mxu0 0.0
    %2664 = vmatpush2.msra.mxu0 0.0
    %2665 = vmatprep.subr.mxu0 0.0
    %2666 = vmatpush2.msra.mxu0 0.0
    %2667 = vmatprep.subr.mxu0 0.0
    %2668 = vmatpush2.msra.mxu0 0.0
    %2669 = vmatprep.subr.mxu0 0.0
    %2670 = vmatpush2.msra.mxu0 0.0
    %2671 = vmatprep.subr.mxu0 0.0
    %2672 = vmatpush2.msra.mxu0 0.0
    %2673 = vmatprep.subr.mxu0 0.0
    %2674 = vmatpush2.msra.mxu0 0.0
    %2675 = vmatprep.subr.mxu0 0.0
    %2676 = vmatpush2.msra.mxu0 0.0
    %2677 = vmatprep.subr.mxu0 0.0
    %2678 = vmatpush2.msra.mxu0 0.0
    %2679 = vmatprep.subr.mxu0 0.0
    %2680 = vmatpush2.msra.mxu0 0.0
    %2681 = vmatprep.subr.mxu0 0.0
    %2682 = vmatpush2.msra.mxu0 0.0
    %2683 = vmatprep.subr.mxu0 0.0
    %2684 = vmatpush2.msra.mxu0 0.0
    %2685 = vmatprep.subr.mxu0 0.0
    %2686 = vmatpush2.msra.mxu0 0.0
    %2687 = vmatprep.subr.mxu0 0.0
    %2688 = vmatpush2.msra.mxu0 0.0
    %2689 = vmatprep.subr.mxu0 0.0
    %2690 = vmatpush2.msra.mxu0 0.0
    %2691 = vmatprep.subr.mxu0 %v2618
    %2692 = vmatpush2.msra.mxu0 %v2616
    %2693 = vmatprep.subr.mxu0 %v2617
    %2694 = vmatpush2.msra.mxu0 %v2615
    %2695 = vmatprep.mubr.f32.mxu0 %v2620
    %2696 = vmatmul.mubr.f32.gmra.mxu0 %v2515
    %v2697 = vpop.f32.mrf.mxu0
    %v2698 = vadd.f32 0.0, %v2697
    %v2699 = vpop.f32.mrf.mxu0
    %v2700 = vadd.f32 0.0, %v2699
    %2701 = vmatprep.mubr.f32.mxu0 %v2623
    %2702 = vmatmul.mubr.f32.gmra.mxu0 %v2517
    %v2703 = vpop.f32.mrf.mxu0
    %v2704 = vadd.f32 0.0, %v2703
    %v2705 = vpop.f32.mrf.mxu0
    %v2706 = vadd.f32 0.0, %v2705
    %2707 = vmatprep.mubr.f32.mxu0 %v2626
    %2708 = vmatmul.mubr.f32.gmra.mxu0 %v2519
    %v2709 = vpop.f32.mrf.mxu0
    %v2710 = vadd.f32 0.0, %v2709
    %v2711 = vpop.f32.mrf.mxu0
    %v2712 = vadd.f32 0.0, %v2711
    %2713 = vmatprep.mubr.f32.mxu0 %v2629
    %2714 = vmatmul.mubr.f32.gmra.mxu0 %v2521
    %v2715 = vpop.f32.mrf.mxu0
    %v2716 = vadd.f32 0.0, %v2715
    %v2717 = vpop.f32.mrf.mxu0
    %v2718 = vadd.f32 0.0, %v2717
    %2719 = vdwg.mxu0
    %2720 = vset.pattern.permute.xlu0 11
    %2721 = vperm.xlu0 %2720, %v45
    %v2722 = vpop.permute.xlu0 %2721
    %2724 = vset.pattern.permute.xlu0 11
    %2725 = vperm.xlu0 %2724, %v46
    %v2726 = vpop.permute.xlu0 %2725
    %v2728 = vadd.f32 %v2710, %v2722
    %v2729 = vadd.f32 %v2712, %v2722
    %v2730 = vadd.f32 %v2716, %v2726
    %v2731 = vadd.f32 %v2718, %v2726
    %2732 = vmatprep.subr.mxu0 0.0
    %2733 = vmatpush1.msra.mxu0 %v66
    %2734 = vmatprep.subr.mxu0 0.0
    %2735 = vmatpush1.msra.mxu0 %v65
    %2736 = vmatprep.subr.mxu0 0.0
    %2737 = vmatpush1.msra.mxu0 %v64
    %2738 = vmatprep.subr.mxu0 0.0
    %2739 = vmatpush1.msra.mxu0 %v63
    %2740 = vmatprep.subr.mxu0 0.0
    %2741 = vmatpush1.msra.mxu0 %v62
    %2742 = vmatprep.subr.mxu0 0.0
    %2743 = vmatpush1.msra.mxu0 %v61
    %2744 = vmatprep.subr.mxu0 0.0
    %2745 = vmatpush1.msra.mxu0 %v60
    %2746 = vmatprep.subr.mxu0 0.0
    %2747 = vmatpush1.msra.mxu0 %v59
    %2748 = vmatprep.subr.mxu0 0.0
    %2749 = vmatpush1.msra.mxu0 %v58
    %2750 = vmatprep.subr.mxu0 0.0
    %2751 = vmatpush1.msra.mxu0 %v57
    %2752 = vmatprep.subr.mxu0 0.0
    %2753 = vmatpush1.msra.mxu0 %v56
    %2754 = vmatprep.subr.mxu0 0.0
    %2755 = vmatpush1.msra.mxu0 %v55
    %2756 = vmatprep.subr.mxu0 0.0
    %2757 = vmatpush1.msra.mxu0 %v54
    %2758 = vmatprep.subr.mxu0 0.0
    %2759 = vmatpush1.msra.mxu0 %v53
    %2760 = vmatprep.subr.mxu0 0.0
    %2761 = vmatpush1.msra.mxu0 %v52
    %2762 = vmatprep.subr.mxu0 0.0
    %2763 = vmatpush1.msra.mxu0 %v51
    %2764 = vmatprep.subr.mxu0 0.0
    %2765 = vmatpush2.msra.mxu0 %v82
    %2766 = vmatprep.subr.mxu0 0.0
    %2767 = vmatpush2.msra.mxu0 %v81
    %2768 = vmatprep.subr.mxu0 0.0
    %2769 = vmatpush2.msra.mxu0 %v80
    %2770 = vmatprep.subr.mxu0 0.0
    %2771 = vmatpush2.msra.mxu0 %v79
    %2772 = vmatprep.subr.mxu0 0.0
    %2773 = vmatpush2.msra.mxu0 %v78
    %2774 = vmatprep.subr.mxu0 0.0
    %2775 = vmatpush2.msra.mxu0 %v77
    %2776 = vmatprep.subr.mxu0 0.0
    %2777 = vmatpush2.msra.mxu0 %v76
    %2778 = vmatprep.subr.mxu0 0.0
    %2779 = vmatpush2.msra.mxu0 %v75
    %2780 = vmatprep.subr.mxu0 0.0
    %2781 = vmatpush2.msra.mxu0 %v74
    %2782 = vmatprep.subr.mxu0 0.0
    %2783 = vmatpush2.msra.mxu0 %v73
    %2784 = vmatprep.subr.mxu0 0.0
    %2785 = vmatpush2.msra.mxu0 %v72
    %2786 = vmatprep.subr.mxu0 0.0
    %2787 = vmatpush2.msra.mxu0 %v71
    %2788 = vmatprep.subr.mxu0 0.0
    %2789 = vmatpush2.msra.mxu0 %v70
    %2790 = vmatprep.subr.mxu0 0.0
    %2791 = vmatpush2.msra.mxu0 %v69
    %2792 = vmatprep.subr.mxu0 0.0
    %2793 = vmatpush2.msra.mxu0 %v68
    %2794 = vmatprep.subr.mxu0 0.0
    %2795 = vmatpush2.msra.mxu0 %v67
    %2796 = vmatprep.mubr.f32.mxu0 %v2700
    %2797 = vmatmul.mubr.f32.gmra.mxu0 %v2698
    %v2798 = vpop.f32.mrf.mxu0
    %v2799 = vadd.f32 0.0, %v2798
    %v2800 = vpop.f32.mrf.mxu0
    %2801 = vmatprep.mubr.f32.mxu0 %v2706
    %2802 = vmatmul.mubr.f32.gmra.mxu0 %v2704
    %v2803 = vpop.f32.mrf.mxu0
    %v2804 = vadd.f32 0.0, %v2803
    %v2805 = vpop.f32.mrf.mxu0
    %2806 = vdwg.mxu0
    %v2807 = vmul.f32 %v2799, 0.0057471264
    %v2808 = vmul.f32 %v2804, 0.0057471264
    %v2809 = vmul.f32 %v2698, %v2698
    %v2810 = vmul.f32 %v2700, %v2700
    %v2811 = vmul.f32 %v2704, %v2704
    %v2812 = vmul.f32 %v2706, %v2706
    %2813 = vmatprep.subr.mxu0 0.0
    %2814 = vmatpush1.msra.mxu0 %v66
    %2815 = vmatprep.subr.mxu0 0.0
    %2816 = vmatpush1.msra.mxu0 %v65
    %2817 = vmatprep.subr.mxu0 0.0
    %2818 = vmatpush1.msra.mxu0 %v64
    %2819 = vmatprep.subr.mxu0 0.0
    %2820 = vmatpush1.msra.mxu0 %v63
    %2821 = vmatprep.subr.mxu0 0.0
    %2822 = vmatpush1.msra.mxu0 %v62
    %2823 = vmatprep.subr.mxu0 0.0
    %2824 = vmatpush1.msra.mxu0 %v61
    %2825 = vmatprep.subr.mxu0 0.0
    %2826 = vmatpush1.msra.mxu0 %v60
    %2827 = vmatprep.subr.mxu0 0.0
    %2828 = vmatpush1.msra.mxu0 %v59
    %2829 = vmatprep.subr.mxu0 0.0
    %2830 = vmatpush1.msra.mxu0 %v58
    %2831 = vmatprep.subr.mxu0 0.0
    %2832 = vmatpush1.msra.mxu0 %v57
    %2833 = vmatprep.subr.mxu0 0.0
    %2834 = vmatpush1.msra.mxu0 %v56
    %2835 = vmatprep.subr.mxu0 0.0
    %2836 = vmatpush1.msra.mxu0 %v55
    %2837 = vmatprep.subr.mxu0 0.0
    %2838 = vmatpush1.msra.mxu0 %v54
    %2839 = vmatprep.subr.mxu0 0.0
    %2840 = vmatpush1.msra.mxu0 %v53
    %2841 = vmatprep.subr.mxu0 0.0
    %2842 = vmatpush1.msra.mxu0 %v52
    %2843 = vmatprep.subr.mxu0 0.0
    %2844 = vmatpush1.msra.mxu0 %v51
    %2845 = vmatprep.subr.mxu0 0.0
    %2846 = vmatpush2.msra.mxu0 %v82
    %2847 = vmatprep.subr.mxu0 0.0
    %2848 = vmatpush2.msra.mxu0 %v81
    %2849 = vmatprep.subr.mxu0 0.0
    %2850 = vmatpush2.msra.mxu0 %v80
    %2851 = vmatprep.subr.mxu0 0.0
    %2852 = vmatpush2.msra.mxu0 %v79
    %2853 = vmatprep.subr.mxu0 0.0
    %2854 = vmatpush2.msra.mxu0 %v78
    %2855 = vmatprep.subr.mxu0 0.0
    %2856 = vmatpush2.msra.mxu0 %v77
    %2857 = vmatprep.subr.mxu0 0.0
    %2858 = vmatpush2.msra.mxu0 %v76
    %2859 = vmatprep.subr.mxu0 0.0
    %2860 = vmatpush2.msra.mxu0 %v75
    %2861 = vmatprep.subr.mxu0 0.0
    %2862 = vmatpush2.msra.mxu0 %v74
    %2863 = vmatprep.subr.mxu0 0.0
    %2864 = vmatpush2.msra.mxu0 %v73
    %2865 = vmatprep.subr.mxu0 0.0
    %2866 = vmatpush2.msra.mxu0 %v72
    %2867 = vmatprep.subr.mxu0 0.0
    %2868 = vmatpush2.msra.mxu0 %v71
    %2869 = vmatprep.subr.mxu0 0.0
    %2870 = vmatpush2.msra.mxu0 %v70
    %2871 = vmatprep.subr.mxu0 0.0
    %2872 = vmatpush2.msra.mxu0 %v69
    %2873 = vmatprep.subr.mxu0 0.0
    %2874 = vmatpush2.msra.mxu0 %v68
    %2875 = vmatprep.subr.mxu0 0.0
    %2876 = vmatpush2.msra.mxu0 %v67
    %2877 = vmatprep.mubr.f32.mxu0 %v2810
    %2878 = vmatmul.mubr.f32.gmra.mxu0 %v2809
    %v2879 = vpop.f32.mrf.mxu0
    %v2880 = vadd.f32 0.0, %v2879
    %v2881 = vpop.f32.mrf.mxu0
    %2882 = vmatprep.mubr.f32.mxu0 %v2812
    %2883 = vmatmul.mubr.f32.gmra.mxu0 %v2811
    %v2884 = vpop.f32.mrf.mxu0
    %v2885 = vadd.f32 0.0, %v2884
    %v2886 = vpop.f32.mrf.mxu0
    %2887 = vdwg.mxu0
    %v2888 = vmul.f32 %v2880, 0.0057471264
    %v2889 = vmul.f32 %v2885, 0.0057471264
    %v2890 = vmul.f32 %v2807, %v2807
    %v2891 = vmul.f32 %v2808, %v2808
    %v2892 = vsub.f32 %v2888, %v2890
    %v2893 = vsub.f32 %v2889, %v2891
    %v2894 = vadd.f32 %v2892, 1e-05
    %v2895 = vadd.f32 %v2893, 1e-05
    %v2896 = vrsqrt.pop %v2894
    %v2897 = vrsqrt.pop %v2895
    %2900 = vrot.lane.b32.xlu0 %v2896, 6
    %v2901 = vpop.permute.xlu0 %2900
    %2902 = vrot.lane.b32.xlu0 %v2897, 6
    %v2903 = vpop.permute.xlu0 %2902
    %v2906 = vmul.f32 %v45, %v2901
    %v2907 = vmul.f32 %v46, %v2903
    %2909 = vset.pattern.permute.xlu0 7
    %2910 = vperm.xlu0 %2909, %v2906
    %v2911 = vpop.permute.xlu0 %2910
    %2914 = vset.pattern.permute.xlu0 7
    %2915 = vperm.xlu0 %2914, %v2907
    %v2916 = vpop.permute.xlu0 %2915
    %v2918 = vmul.f32 %v2698, %v2911
    %v2919 = vmul.f32 %v2700, %v2911
    %v2920 = vmul.f32 %v2704, %v2916
    %v2921 = vmul.f32 %v2706, %v2916
    %2922 = vrot.lane.b32.xlu0 %v2906, 122
    %v2923 = vpop.permute.xlu0 %2922
    %2924 = vrot.lane.b32.xlu0 %v2907, 122
    %v2925 = vpop.permute.xlu0 %2924
    %v2928 = vmul.f32 %v2807, %v2923
    %v2929 = vmul.f32 %v2808, %v2925
    %2932 = vrot.lane.b32.xlu0 %v2928, 7
    %v2933 = vpop.permute.xlu0 %2932
    %2934 = vrot.lane.b32.xlu0 %v2929, 7
    %v2935 = vpop.permute.xlu0 %2934
    %v2938 = vsub.f32 %v45, %v2933
    %v2939 = vsub.f32 %v46, %v2935
    %2941 = vset.pattern.permute.xlu0 8
    %2942 = vperm.xlu0 %2941, %v2938
    %v2943 = vpop.permute.xlu0 %2942
    %2946 = vset.pattern.permute.xlu0 8
    %2947 = vperm.xlu0 %2946, %v2939
    %v2948 = vpop.permute.xlu0 %2947
    %v2950 = vadd.f32 %v2918, %v2943
    %v2951 = vadd.f32 %v2919, %v2943
    %v2952 = vadd.f32 %v2920, %v2948
    %v2953 = vadd.f32 %v2921, %v2948
    %v2954 = vmax.f32 %v2950, 0.0
    %v2955 = vmax.f32 %v2951, 0.0
    %v2956 = vmax.f32 %v2952, 0.0
    %v2957 = vmax.f32 %v2953, 0.0
    %v2959 = vlaneseq
    %v2960 = vshrl.u32 %v2959, 7
    %v2961 = vsub.s32 0, %v2960
    %v2962 = vrot.slane %v50, %v2961
    %v2963 = vlaneseq
    %v2964 = vshrl.u32 %v2963, 7
    %v2965 = vsub.s32 1, %v2964
    %v2966 = vrot.slane %v50, %v2965
    %v2969 = vmul.f32 %v2954, %v2962
    %v2970 = vmul.f32 %v2955, %v2966
    %v2971 = vmul.f32 %v2956, %v2962
    %v2972 = vmul.f32 %v2957, %v2966
    %s2973 = scalar_lea.vmem [#allocation2], 256
    %v2974 = vld [vmem:[%s2973] sm:$0xff]
    %v2975 = vld [vmem:[%s2973 + $0x8] sm:$0xff]
    %v2976 = vld [vmem:[%s2973 + $0x10] sm:$0xff]
    %v2977 = vld [vmem:[%s2973 + $0x18] sm:$0xff]
    %2978 = vrot.lane.b32.xlu0 %v2969, 4
    %v2979 = vpop.permute.xlu0 %2978
    %2980 = vrot.lane.b32.xlu0 %v2971, 4
    %v2981 = vpop.permute.xlu0 %2980
    %2982 = vrot.lane.b32.xlu0 %v2970, 4
    %v2983 = vpop.permute.xlu0 %2982
    %2984 = vrot.lane.b32.xlu0 %v2972, 4
    %v2985 = vpop.permute.xlu0 %2984
    %v2986 = vsel %vm112, %v2979, %v2983
    %v2987 = vsel %vm112, %v2981, %v2985
    %v2988 = vsel %vm112, %v2983, %v2979
    %v2989 = vsel %vm112, %v2985, %v2981
    %2990 = vrot.lane.b32.xlu0 %v2969, 3
    %v2991 = vpop.permute.xlu0 %2990
    %2992 = vrot.lane.b32.xlu0 %v2971, 3
    %v2993 = vpop.permute.xlu0 %2992
    %2994 = vrot.lane.b32.xlu0 %v2970, 3
    %v2995 = vpop.permute.xlu0 %2994
    %2996 = vrot.lane.b32.xlu0 %v2972, 3
    %v2997 = vpop.permute.xlu0 %2996
    %v2998 = vsel %vm122, %v2991, %v2995
    %v2999 = vsel %vm122, %v2993, %v2997
    %v3000 = vsel %vm122, %v2995, %v2991
    %v3001 = vsel %vm122, %v2997, %v2993
    %3002 = vrot.lane.b32.xlu0 %v2969, 2
    %v3003 = vpop.permute.xlu0 %3002
    %3004 = vrot.lane.b32.xlu0 %v2971, 2
    %v3005 = vpop.permute.xlu0 %3004
    %3006 = vrot.lane.b32.xlu0 %v2970, 2
    %v3007 = vpop.permute.xlu0 %3006
    %3008 = vrot.lane.b32.xlu0 %v2972, 2
    %v3009 = vpop.permute.xlu0 %3008
    %v3010 = vsel %vm132, %v3003, %v3007
    %v3011 = vsel %vm132, %v3005, %v3009
    %v3012 = vsel %vm132, %v3007, %v3003
    %v3013 = vsel %vm132, %v3009, %v3005
    %3014 = vrot.lane.b32.xlu0 %v2969, 1
    %v3015 = vpop.permute.xlu0 %3014
    %3016 = vrot.lane.b32.xlu0 %v2971, 1
    %v3017 = vpop.permute.xlu0 %3016
    %3018 = vrot.lane.b32.xlu0 %v2970, 1
    %v3019 = vpop.permute.xlu0 %3018
    %3020 = vrot.lane.b32.xlu0 %v2972, 1
    %v3021 = vpop.permute.xlu0 %3020
    %v3022 = vsel %vm142, %v3015, %v3019
    %v3023 = vsel %vm142, %v3017, %v3021
    %v3024 = vsel %vm142, %v3019, %v3015
    %v3025 = vsel %vm142, %v3021, %v3017
    %3026 = vrot.lane.b32.xlu0 %v2969, 127
    %v3027 = vpop.permute.xlu0 %3026
    %3028 = vrot.lane.b32.xlu0 %v2971, 127
    %v3029 = vpop.permute.xlu0 %3028
    %3030 = vrot.lane.b32.xlu0 %v2970, 127
    %v3031 = vpop.permute.xlu0 %3030
    %3032 = vrot.lane.b32.xlu0 %v2972, 127
    %v3033 = vpop.permute.xlu0 %3032
    %v3034 = vsel %vm152, %v3027, %v3031
    %v3035 = vsel %vm152, %v3029, %v3033
    %v3036 = vsel %vm152, %v3031, %v3027
    %v3037 = vsel %vm152, %v3033, %v3029
    %3038 = vrot.lane.b32.xlu0 %v2969, 126
    %v3039 = vpop.permute.xlu0 %3038
    %3040 = vrot.lane.b32.xlu0 %v2971, 126
    %v3041 = vpop.permute.xlu0 %3040
    %3042 = vrot.lane.b32.xlu0 %v2970, 126
    %v3043 = vpop.permute.xlu0 %3042
    %3044 = vrot.lane.b32.xlu0 %v2972, 126
    %v3045 = vpop.permute.xlu0 %3044
    %v3046 = vsel %vm162, %v3039, %v3043
    %v3047 = vsel %vm162, %v3041, %v3045
    %v3048 = vsel %vm162, %v3043, %v3039
    %v3049 = vsel %vm162, %v3045, %v3041
    %3050 = vrot.lane.b32.xlu0 %v2969, 125
    %v3051 = vpop.permute.xlu0 %3050
    %3052 = vrot.lane.b32.xlu0 %v2971, 125
    %v3053 = vpop.permute.xlu0 %3052
    %3054 = vrot.lane.b32.xlu0 %v2970, 125
    %v3055 = vpop.permute.xlu0 %3054
    %3056 = vrot.lane.b32.xlu0 %v2972, 125
    %v3057 = vpop.permute.xlu0 %3056
    %v3058 = vsel %vm172, %v3051, %v3055
    %v3059 = vsel %vm172, %v3053, %v3057
    %v3060 = vsel %vm172, %v3055, %v3051
    %v3061 = vsel %vm172, %v3057, %v3053
    %3062 = vrot.lane.b32.xlu0 %v2969, 124
    %v3063 = vpop.permute.xlu0 %3062
    %3064 = vrot.lane.b32.xlu0 %v2971, 124
    %v3065 = vpop.permute.xlu0 %3064
    %3066 = vrot.lane.b32.xlu0 %v2970, 124
    %v3067 = vpop.permute.xlu0 %3066
    %3068 = vrot.lane.b32.xlu0 %v2972, 124
    %v3069 = vpop.permute.xlu0 %3068
    %v3070 = vsel %vm182, %v3063, %v3067
    %v3071 = vsel %vm182, %v3065, %v3069
    %v3072 = vsel %vm182, %v3067, %v3063
    %v3073 = vsel %vm182, %v3069, %v3065
    %v3075 = vsel %vm920, %v2975, 0
    %v3078 = vsel %vm920, %v2977, 0
    %3080 = vmatprep.subr.mxu0 %v3061
    %3081 = vmatpush1.msra.mxu0 %v3059
    %3082 = vmatprep.subr.mxu0 %v3060
    %3083 = vmatpush1.msra.mxu0 %v3058
    %3084 = vmatprep.subr.mxu0 %v3049
    %3085 = vmatpush1.msra.mxu0 %v3047
    %3086 = vmatprep.subr.mxu0 %v3048
    %3087 = vmatpush1.msra.mxu0 %v3046
    %3088 = vmatprep.subr.mxu0 %v3037
    %3089 = vmatpush1.msra.mxu0 %v3035
    %3090 = vmatprep.subr.mxu0 %v3036
    %3091 = vmatpush1.msra.mxu0 %v3034
    %3092 = vmatprep.subr.mxu0 %v2972
    %3093 = vmatpush1.msra.mxu0 %v2971
    %3094 = vmatprep.subr.mxu0 %v2970
    %3095 = vmatpush1.msra.mxu0 %v2969
    %3096 = vmatprep.subr.mxu0 %v3023
    %3097 = vmatpush1.msra.mxu0 %v3025
    %3098 = vmatprep.subr.mxu0 %v3022
    %3099 = vmatpush1.msra.mxu0 %v3024
    %3100 = vmatprep.subr.mxu0 %v3011
    %3101 = vmatpush1.msra.mxu0 %v3013
    %3102 = vmatprep.subr.mxu0 %v3010
    %3103 = vmatpush1.msra.mxu0 %v3012
    %3104 = vmatprep.subr.mxu0 %v2999
    %3105 = vmatpush1.msra.mxu0 %v3001
    %3106 = vmatprep.subr.mxu0 %v2998
    %3107 = vmatpush1.msra.mxu0 %v3000
    %3108 = vmatprep.subr.mxu0 %v2987
    %3109 = vmatpush1.msra.mxu0 %v2989
    %3110 = vmatprep.subr.mxu0 %v2986
    %3111 = vmatpush1.msra.mxu0 %v2988
    %3112 = vmatprep.subr.mxu0 0.0
    %3113 = vmatpush2.msra.mxu0 0.0
    %3114 = vmatprep.subr.mxu0 0.0
    %3115 = vmatpush2.msra.mxu0 0.0
    %3116 = vmatprep.subr.mxu0 0.0
    %3117 = vmatpush2.msra.mxu0 0.0
    %3118 = vmatprep.subr.mxu0 0.0
    %3119 = vmatpush2.msra.mxu0 0.0
    %3120 = vmatprep.subr.mxu0 0.0
    %3121 = vmatpush2.msra.mxu0 0.0
    %3122 = vmatprep.subr.mxu0 0.0
    %3123 = vmatpush2.msra.mxu0 0.0
    %3124 = vmatprep.subr.mxu0 0.0
    %3125 = vmatpush2.msra.mxu0 0.0
    %3126 = vmatprep.subr.mxu0 0.0
    %3127 = vmatpush2.msra.mxu0 0.0
    %3128 = vmatprep.subr.mxu0 0.0
    %3129 = vmatpush2.msra.mxu0 0.0
    %3130 = vmatprep.subr.mxu0 0.0
    %3131 = vmatpush2.msra.mxu0 0.0
    %3132 = vmatprep.subr.mxu0 0.0
    %3133 = vmatpush2.msra.mxu0 0.0
    %3134 = vmatprep.subr.mxu0 0.0
    %3135 = vmatpush2.msra.mxu0 0.0
    %3136 = vmatprep.subr.mxu0 0.0
    %3137 = vmatpush2.msra.mxu0 0.0
    %3138 = vmatprep.subr.mxu0 0.0
    %3139 = vmatpush2.msra.mxu0 0.0
    %3140 = vmatprep.subr.mxu0 %v3073
    %3141 = vmatpush2.msra.mxu0 %v3071
    %3142 = vmatprep.subr.mxu0 %v3072
    %3143 = vmatpush2.msra.mxu0 %v3070
    %3144 = vmatprep.mubr.f32.mxu0 %v3075
    %3145 = vmatmul.mubr.f32.gmra.mxu0 %v2974
    %v3146 = vpop.f32.mrf.mxu0
    %v3147 = vadd.f32 0.0, %v3146
    %v3148 = vpop.f32.mrf.mxu0
    %v3149 = vadd.f32 0.0, %v3148
    %3150 = vmatprep.mubr.f32.mxu0 %v3078
    %3151 = vmatmul.mubr.f32.gmra.mxu0 %v2976
    %v3152 = vpop.f32.mrf.mxu0
    %v3153 = vadd.f32 0.0, %v3152
    %v3154 = vpop.f32.mrf.mxu0
    %v3155 = vadd.f32 0.0, %v3154
    %3156 = vdwg.mxu0
    %3157 = vmatprep.subr.mxu0 0.0
    %3158 = vmatpush1.msra.mxu0 %v66
    %3159 = vmatprep.subr.mxu0 0.0
    %3160 = vmatpush1.msra.mxu0 %v65
    %3161 = vmatprep.subr.mxu0 0.0
    %3162 = vmatpush1.msra.mxu0 %v64
    %3163 = vmatprep.subr.mxu0 0.0
    %3164 = vmatpush1.msra.mxu0 %v63
    %3165 = vmatprep.subr.mxu0 0.0
    %3166 = vmatpush1.msra.mxu0 %v62
    %3167 = vmatprep.subr.mxu0 0.0
    %3168 = vmatpush1.msra.mxu0 %v61
    %3169 = vmatprep.subr.mxu0 0.0
    %3170 = vmatpush1.msra.mxu0 %v60
    %3171 = vmatprep.subr.mxu0 0.0
    %3172 = vmatpush1.msra.mxu0 %v59
    %3173 = vmatprep.subr.mxu0 0.0
    %3174 = vmatpush1.msra.mxu0 %v58
    %3175 = vmatprep.subr.mxu0 0.0
    %3176 = vmatpush1.msra.mxu0 %v57
    %3177 = vmatprep.subr.mxu0 0.0
    %3178 = vmatpush1.msra.mxu0 %v56
    %3179 = vmatprep.subr.mxu0 0.0
    %3180 = vmatpush1.msra.mxu0 %v55
    %3181 = vmatprep.subr.mxu0 0.0
    %3182 = vmatpush1.msra.mxu0 %v54
    %3183 = vmatprep.subr.mxu0 0.0
    %3184 = vmatpush1.msra.mxu0 %v53
    %3185 = vmatprep.subr.mxu0 0.0
    %3186 = vmatpush1.msra.mxu0 %v52
    %3187 = vmatprep.subr.mxu0 0.0
    %3188 = vmatpush1.msra.mxu0 %v51
    %3189 = vmatprep.subr.mxu0 0.0
    %3190 = vmatpush2.msra.mxu0 %v82
    %3191 = vmatprep.subr.mxu0 0.0
    %3192 = vmatpush2.msra.mxu0 %v81
    %3193 = vmatprep.subr.mxu0 0.0
    %3194 = vmatpush2.msra.mxu0 %v80
    %3195 = vmatprep.subr.mxu0 0.0
    %3196 = vmatpush2.msra.mxu0 %v79
    %3197 = vmatprep.subr.mxu0 0.0
    %3198 = vmatpush2.msra.mxu0 %v78
    %3199 = vmatprep.subr.mxu0 0.0
    %3200 = vmatpush2.msra.mxu0 %v77
    %3201 = vmatprep.subr.mxu0 0.0
    %3202 = vmatpush2.msra.mxu0 %v76
    %3203 = vmatprep.subr.mxu0 0.0
    %3204 = vmatpush2.msra.mxu0 %v75
    %3205 = vmatprep.subr.mxu0 0.0
    %3206 = vmatpush2.msra.mxu0 %v74
    %3207 = vmatprep.subr.mxu0 0.0
    %3208 = vmatpush2.msra.mxu0 %v73
    %3209 = vmatprep.subr.mxu0 0.0
    %3210 = vmatpush2.msra.mxu0 %v72
    %3211 = vmatprep.subr.mxu0 0.0
    %3212 = vmatpush2.msra.mxu0 %v71
    %3213 = vmatprep.subr.mxu0 0.0
    %3214 = vmatpush2.msra.mxu0 %v70
    %3215 = vmatprep.subr.mxu0 0.0
    %3216 = vmatpush2.msra.mxu0 %v69
    %3217 = vmatprep.subr.mxu0 0.0
    %3218 = vmatpush2.msra.mxu0 %v68
    %3219 = vmatprep.subr.mxu0 0.0
    %3220 = vmatpush2.msra.mxu0 %v67
    %3221 = vmatprep.mubr.f32.mxu0 %v3149
    %3222 = vmatmul.mubr.f32.gmra.mxu0 %v3147
    %v3223 = vpop.f32.mrf.mxu0
    %v3224 = vadd.f32 0.0, %v3223
    %v3225 = vpop.f32.mrf.mxu0
    %3226 = vmatprep.mubr.f32.mxu0 %v3155
    %3227 = vmatmul.mubr.f32.gmra.mxu0 %v3153
    %v3228 = vpop.f32.mrf.mxu0
    %v3229 = vadd.f32 0.0, %v3228
    %v3230 = vpop.f32.mrf.mxu0
    %3231 = vdwg.mxu0
    %v3232 = vmul.f32 %v3224, 0.0057471264
    %v3233 = vmul.f32 %v3229, 0.0057471264
    %v3234 = vmul.f32 %v3147, %v3147
    %v3235 = vmul.f32 %v3149, %v3149
    %v3236 = vmul.f32 %v3153, %v3153
    %v3237 = vmul.f32 %v3155, %v3155
    %3238 = vmatprep.subr.mxu0 0.0
    %3239 = vmatpush1.msra.mxu0 %v66
    %3240 = vmatprep.subr.mxu0 0.0
    %3241 = vmatpush1.msra.mxu0 %v65
    %3242 = vmatprep.subr.mxu0 0.0
    %3243 = vmatpush1.msra.mxu0 %v64
    %3244 = vmatprep.subr.mxu0 0.0
    %3245 = vmatpush1.msra.mxu0 %v63
    %3246 = vmatprep.subr.mxu0 0.0
    %3247 = vmatpush1.msra.mxu0 %v62
    %3248 = vmatprep.subr.mxu0 0.0
    %3249 = vmatpush1.msra.mxu0 %v61
    %3250 = vmatprep.subr.mxu0 0.0
    %3251 = vmatpush1.msra.mxu0 %v60
    %3252 = vmatprep.subr.mxu0 0.0
    %3253 = vmatpush1.msra.mxu0 %v59
    %3254 = vmatprep.subr.mxu0 0.0
    %3255 = vmatpush1.msra.mxu0 %v58
    %3256 = vmatprep.subr.mxu0 0.0
    %3257 = vmatpush1.msra.mxu0 %v57
    %3258 = vmatprep.subr.mxu0 0.0
    %3259 = vmatpush1.msra.mxu0 %v56
    %3260 = vmatprep.subr.mxu0 0.0
    %3261 = vmatpush1.msra.mxu0 %v55
    %3262 = vmatprep.subr.mxu0 0.0
    %3263 = vmatpush1.msra.mxu0 %v54
    %3264 = vmatprep.subr.mxu0 0.0
    %3265 = vmatpush1.msra.mxu0 %v53
    %3266 = vmatprep.subr.mxu0 0.0
    %3267 = vmatpush1.msra.mxu0 %v52
    %3268 = vmatprep.subr.mxu0 0.0
    %3269 = vmatpush1.msra.mxu0 %v51
    %3270 = vmatprep.subr.mxu0 0.0
    %3271 = vmatpush2.msra.mxu0 %v82
    %3272 = vmatprep.subr.mxu0 0.0
    %3273 = vmatpush2.msra.mxu0 %v81
    %3274 = vmatprep.subr.mxu0 0.0
    %3275 = vmatpush2.msra.mxu0 %v80
    %3276 = vmatprep.subr.mxu0 0.0
    %3277 = vmatpush2.msra.mxu0 %v79
    %3278 = vmatprep.subr.mxu0 0.0
    %3279 = vmatpush2.msra.mxu0 %v78
    %3280 = vmatprep.subr.mxu0 0.0
    %3281 = vmatpush2.msra.mxu0 %v77
    %3282 = vmatprep.subr.mxu0 0.0
    %3283 = vmatpush2.msra.mxu0 %v76
    %3284 = vmatprep.subr.mxu0 0.0
    %3285 = vmatpush2.msra.mxu0 %v75
    %3286 = vmatprep.subr.mxu0 0.0
    %3287 = vmatpush2.msra.mxu0 %v74
    %3288 = vmatprep.subr.mxu0 0.0
    %3289 = vmatpush2.msra.mxu0 %v73
    %3290 = vmatprep.subr.mxu0 0.0
    %3291 = vmatpush2.msra.mxu0 %v72
    %3292 = vmatprep.subr.mxu0 0.0
    %3293 = vmatpush2.msra.mxu0 %v71
    %3294 = vmatprep.subr.mxu0 0.0
    %3295 = vmatpush2.msra.mxu0 %v70
    %3296 = vmatprep.subr.mxu0 0.0
    %3297 = vmatpush2.msra.mxu0 %v69
    %3298 = vmatprep.subr.mxu0 0.0
    %3299 = vmatpush2.msra.mxu0 %v68
    %3300 = vmatprep.subr.mxu0 0.0
    %3301 = vmatpush2.msra.mxu0 %v67
    %3302 = vmatprep.mubr.f32.mxu0 %v3235
    %3303 = vmatmul.mubr.f32.gmra.mxu0 %v3234
    %v3304 = vpop.f32.mrf.mxu0
    %v3305 = vadd.f32 0.0, %v3304
    %v3306 = vpop.f32.mrf.mxu0
    %3307 = vmatprep.mubr.f32.mxu0 %v3237
    %3308 = vmatmul.mubr.f32.gmra.mxu0 %v3236
    %v3309 = vpop.f32.mrf.mxu0
    %v3310 = vadd.f32 0.0, %v3309
    %v3311 = vpop.f32.mrf.mxu0
    %3312 = vdwg.mxu0
    %v3313 = vmul.f32 %v3305, 0.0057471264
    %v3314 = vmul.f32 %v3310, 0.0057471264
    %v3315 = vmul.f32 %v3232, %v3232
    %v3316 = vmul.f32 %v3233, %v3233
    %v3317 = vsub.f32 %v3313, %v3315
    %v3318 = vsub.f32 %v3314, %v3316
    %v3319 = vadd.f32 %v3317, 1e-05
    %v3320 = vadd.f32 %v3318, 1e-05
    %v3321 = vrsqrt.pop %v3319
    %v3322 = vrsqrt.pop %v3320
    %3325 = vrot.lane.b32.xlu0 %v3321, 8
    %v3326 = vpop.permute.xlu0 %3325
    %3327 = vrot.lane.b32.xlu0 %v3322, 8
    %v3328 = vpop.permute.xlu0 %3327
    %v3331 = vmul.f32 %v45, %v3326
    %v3332 = vmul.f32 %v46, %v3328
    %3334 = vset.pattern.permute.xlu0 9
    %3335 = vperm.xlu0 %3334, %v3331
    %v3336 = vpop.permute.xlu0 %3335
    %3339 = vset.pattern.permute.xlu0 9
    %3340 = vperm.xlu0 %3339, %v3332
    %v3341 = vpop.permute.xlu0 %3340
    %v3343 = vmul.f32 %v3147, %v3336
    %v3344 = vmul.f32 %v3149, %v3336
    %v3345 = vmul.f32 %v3153, %v3341
    %v3346 = vmul.f32 %v3155, %v3341
    %3347 = vrot.lane.b32.xlu0 %v3331, 120
    %v3348 = vpop.permute.xlu0 %3347
    %3349 = vrot.lane.b32.xlu0 %v3332, 120
    %v3350 = vpop.permute.xlu0 %3349
    %v3353 = vmul.f32 %v3232, %v3348
    %v3354 = vmul.f32 %v3233, %v3350
    %3357 = vrot.lane.b32.xlu0 %v3353, 9
    %v3358 = vpop.permute.xlu0 %3357
    %3359 = vrot.lane.b32.xlu0 %v3354, 9
    %v3360 = vpop.permute.xlu0 %3359
    %v3363 = vsub.f32 %v45, %v3358
    %v3364 = vsub.f32 %v46, %v3360
    %3366 = vset.pattern.permute.xlu0 10
    %3367 = vperm.xlu0 %3366, %v3363
    %v3368 = vpop.permute.xlu0 %3367
    %3371 = vset.pattern.permute.xlu0 10
    %3372 = vperm.xlu0 %3371, %v3364
    %v3373 = vpop.permute.xlu0 %3372
    %v3375 = vadd.f32 %v3343, %v3368
    %v3376 = vadd.f32 %v3344, %v3368
    %v3377 = vadd.f32 %v3345, %v3373
    %v3378 = vadd.f32 %v3346, %v3373
    %v3379 = vadd.f32 %v3375, %v2728
    %v3380 = vadd.f32 %v3376, %v2729
    %v3381 = vadd.f32 %v3377, %v2730
    %v3382 = vadd.f32 %v3378, %v2731
    %v3383 = vmax.f32 %v3379, 0.0
    %v3384 = vmax.f32 %v3380, 0.0
    %v3385 = vmax.f32 %v3381, 0.0
    %v3386 = vmax.f32 %v3382, 0.0
    %v3387 = vmul.f32 %v3383, %v2962
    %v3388 = vmul.f32 %v3384, %v2966
    %v3389 = vmul.f32 %v3385, %v2962
    %v3390 = vmul.f32 %v3386, %v2966
    %s3391 = scalar_lea.vmem [#allocation2], 320
    %v3392 = vld [vmem:[%s3391] sm:$0xff]
    %v3393 = vld [vmem:[%s3391 + $0x8] sm:$0xff]
    %v3394 = vld [vmem:[%s3391 + $0x10] sm:$0xff]
    %v3395 = vld [vmem:[%s3391 + $0x18] sm:$0xff]
    %v3396 = vld [vmem:[%s3391 + $0x20] sm:$0xff]
    %v3397 = vld [vmem:[%s3391 + $0x28] sm:$0xff]
    %v3398 = vld [vmem:[%s3391 + $0x30] sm:$0xff]
    %v3399 = vld [vmem:[%s3391 + $0x38] sm:$0xff]
    %3400 = vrot.lane.b32.xlu0 %v3387, 4
    %v3401 = vpop.permute.xlu0 %3400
    %3402 = vrot.lane.b32.xlu0 %v3389, 4
    %v3403 = vpop.permute.xlu0 %3402
    %3404 = vrot.lane.b32.xlu0 %v3388, 4
    %v3405 = vpop.permute.xlu0 %3404
    %3406 = vrot.lane.b32.xlu0 %v3390, 4
    %v3407 = vpop.permute.xlu0 %3406
    %v3408 = vsel %vm112, %v3401, %v3405
    %v3409 = vsel %vm112, %v3403, %v3407
    %v3410 = vsel %vm112, %v3405, %v3401
    %v3411 = vsel %vm112, %v3407, %v3403
    %3412 = vrot.lane.b32.xlu0 %v3387, 3
    %v3413 = vpop.permute.xlu0 %3412
    %3414 = vrot.lane.b32.xlu0 %v3389, 3
    %v3415 = vpop.permute.xlu0 %3414
    %3416 = vrot.lane.b32.xlu0 %v3388, 3
    %v3417 = vpop.permute.xlu0 %3416
    %3418 = vrot.lane.b32.xlu0 %v3390, 3
    %v3419 = vpop.permute.xlu0 %3418
    %v3420 = vsel %vm122, %v3413, %v3417
    %v3421 = vsel %vm122, %v3415, %v3419
    %v3422 = vsel %vm122, %v3417, %v3413
    %v3423 = vsel %vm122, %v3419, %v3415
    %3424 = vrot.lane.b32.xlu0 %v3387, 2
    %v3425 = vpop.permute.xlu0 %3424
    %3426 = vrot.lane.b32.xlu0 %v3389, 2
    %v3427 = vpop.permute.xlu0 %3426
    %3428 = vrot.lane.b32.xlu0 %v3388, 2
    %v3429 = vpop.permute.xlu0 %3428
    %3430 = vrot.lane.b32.xlu0 %v3390, 2
    %v3431 = vpop.permute.xlu0 %3430
    %v3432 = vsel %vm132, %v3425, %v3429
    %v3433 = vsel %vm132, %v3427, %v3431
    %v3434 = vsel %vm132, %v3429, %v3425
    %v3435 = vsel %vm132, %v3431, %v3427
    %3436 = vrot.lane.b32.xlu0 %v3387, 1
    %v3437 = vpop.permute.xlu0 %3436
    %3438 = vrot.lane.b32.xlu0 %v3389, 1
    %v3439 = vpop.permute.xlu0 %3438
    %3440 = vrot.lane.b32.xlu0 %v3388, 1
    %v3441 = vpop.permute.xlu0 %3440
    %3442 = vrot.lane.b32.xlu0 %v3390, 1
    %v3443 = vpop.permute.xlu0 %3442
    %v3444 = vsel %vm142, %v3437, %v3441
    %v3445 = vsel %vm142, %v3439, %v3443
    %v3446 = vsel %vm142, %v3441, %v3437
    %v3447 = vsel %vm142, %v3443, %v3439
    %3448 = vrot.lane.b32.xlu0 %v3387, 127
    %v3449 = vpop.permute.xlu0 %3448
    %3450 = vrot.lane.b32.xlu0 %v3389, 127
    %v3451 = vpop.permute.xlu0 %3450
    %3452 = vrot.lane.b32.xlu0 %v3388, 127
    %v3453 = vpop.permute.xlu0 %3452
    %3454 = vrot.lane.b32.xlu0 %v3390, 127
    %v3455 = vpop.permute.xlu0 %3454
    %v3456 = vsel %vm152, %v3449, %v3453
    %v3457 = vsel %vm152, %v3451, %v3455
    %v3458 = vsel %vm152, %v3453, %v3449
    %v3459 = vsel %vm152, %v3455, %v3451
    %3460 = vrot.lane.b32.xlu0 %v3387, 126
    %v3461 = vpop.permute.xlu0 %3460
    %3462 = vrot.lane.b32.xlu0 %v3389, 126
    %v3463 = vpop.permute.xlu0 %3462
    %3464 = vrot.lane.b32.xlu0 %v3388, 126
    %v3465 = vpop.permute.xlu0 %3464
    %3466 = vrot.lane.b32.xlu0 %v3390, 126
    %v3467 = vpop.permute.xlu0 %3466
    %v3468 = vsel %vm162, %v3461, %v3465
    %v3469 = vsel %vm162, %v3463, %v3467
    %v3470 = vsel %vm162, %v3465, %v3461
    %v3471 = vsel %vm162, %v3467, %v3463
    %3472 = vrot.lane.b32.xlu0 %v3387, 125
    %v3473 = vpop.permute.xlu0 %3472
    %3474 = vrot.lane.b32.xlu0 %v3389, 125
    %v3475 = vpop.permute.xlu0 %3474
    %3476 = vrot.lane.b32.xlu0 %v3388, 125
    %v3477 = vpop.permute.xlu0 %3476
    %3478 = vrot.lane.b32.xlu0 %v3390, 125
    %v3479 = vpop.permute.xlu0 %3478
    %v3480 = vsel %vm172, %v3473, %v3477
    %v3481 = vsel %vm172, %v3475, %v3479
    %v3482 = vsel %vm172, %v3477, %v3473
    %v3483 = vsel %vm172, %v3479, %v3475
    %3484 = vrot.lane.b32.xlu0 %v3387, 124
    %v3485 = vpop.permute.xlu0 %3484
    %3486 = vrot.lane.b32.xlu0 %v3389, 124
    %v3487 = vpop.permute.xlu0 %3486
    %3488 = vrot.lane.b32.xlu0 %v3388, 124
    %v3489 = vpop.permute.xlu0 %3488
    %3490 = vrot.lane.b32.xlu0 %v3390, 124
    %v3491 = vpop.permute.xlu0 %3490
    %v3492 = vsel %vm182, %v3485, %v3489
    %v3493 = vsel %vm182, %v3487, %v3491
    %v3494 = vsel %vm182, %v3489, %v3485
    %v3495 = vsel %vm182, %v3491, %v3487
    %v3497 = vsel %vm920, %v3393, 0
    %v3500 = vsel %vm920, %v3395, 0
    %v3503 = vsel %vm920, %v3397, 0
    %v3506 = vsel %vm920, %v3399, 0
    %3508 = vmatprep.subr.mxu0 %v3483
    %3509 = vmatpush1.msra.mxu0 %v3481
    %3510 = vmatprep.subr.mxu0 %v3482
    %3511 = vmatpush1.msra.mxu0 %v3480
    %3512 = vmatprep.subr.mxu0 %v3471
    %3513 = vmatpush1.msra.mxu0 %v3469
    %3514 = vmatprep.subr.mxu0 %v3470
    %3515 = vmatpush1.msra.mxu0 %v3468
    %3516 = vmatprep.subr.mxu0 %v3459
    %3517 = vmatpush1.msra.mxu0 %v3457
    %3518 = vmatprep.subr.mxu0 %v3458
    %3519 = vmatpush1.msra.mxu0 %v3456
    %3520 = vmatprep.subr.mxu0 %v3390
    %3521 = vmatpush1.msra.mxu0 %v3389
    %3522 = vmatprep.subr.mxu0 %v3388
    %3523 = vmatpush1.msra.mxu0 %v3387
    %3524 = vmatprep.subr.mxu0 %v3445
    %3525 = vmatpush1.msra.mxu0 %v3447
    %3526 = vmatprep.subr.mxu0 %v3444
    %3527 = vmatpush1.msra.mxu0 %v3446
    %3528 = vmatprep.subr.mxu0 %v3433
    %3529 = vmatpush1.msra.mxu0 %v3435
    %3530 = vmatprep.subr.mxu0 %v3432
    %3531 = vmatpush1.msra.mxu0 %v3434
    %3532 = vmatprep.subr.mxu0 %v3421
    %3533 = vmatpush1.msra.mxu0 %v3423
    %3534 = vmatprep.subr.mxu0 %v3420
    %3535 = vmatpush1.msra.mxu0 %v3422
    %3536 = vmatprep.subr.mxu0 %v3409
    %3537 = vmatpush1.msra.mxu0 %v3411
    %3538 = vmatprep.subr.mxu0 %v3408
    %3539 = vmatpush1.msra.mxu0 %v3410
    %3540 = vmatprep.subr.mxu0 0.0
    %3541 = vmatpush2.msra.mxu0 0.0
    %3542 = vmatprep.subr.mxu0 0.0
    %3543 = vmatpush2.msra.mxu0 0.0
    %3544 = vmatprep.subr.mxu0 0.0
    %3545 = vmatpush2.msra.mxu0 0.0
    %3546 = vmatprep.subr.mxu0 0.0
    %3547 = vmatpush2.msra.mxu0 0.0
    %3548 = vmatprep.subr.mxu0 0.0
    %3549 = vmatpush2.msra.mxu0 0.0
    %3550 = vmatprep.subr.mxu0 0.0
    %3551 = vmatpush2.msra.mxu0 0.0
    %3552 = vmatprep.subr.mxu0 0.0
    %3553 = vmatpush2.msra.mxu0 0.0
    %3554 = vmatprep.subr.mxu0 0.0
    %3555 = vmatpush2.msra.mxu0 0.0
    %3556 = vmatprep.subr.mxu0 0.0
    %3557 = vmatpush2.msra.mxu0 0.0
    %3558 = vmatprep.subr.mxu0 0.0
    %3559 = vmatpush2.msra.mxu0 0.0
    %3560 = vmatprep.subr.mxu0 0.0
    %3561 = vmatpush2.msra.mxu0 0.0
    %3562 = vmatprep.subr.mxu0 0.0
    %3563 = vmatpush2.msra.mxu0 0.0
    %3564 = vmatprep.subr.mxu0 0.0
    %3565 = vmatpush2.msra.mxu0 0.0
    %3566 = vmatprep.subr.mxu0 0.0
    %3567 = vmatpush2.msra.mxu0 0.0
    %3568 = vmatprep.subr.mxu0 %v3495
    %3569 = vmatpush2.msra.mxu0 %v3493
    %3570 = vmatprep.subr.mxu0 %v3494
    %3571 = vmatpush2.msra.mxu0 %v3492
    %3572 = vmatprep.mubr.f32.mxu0 %v3497
    %3573 = vmatmul.mubr.f32.gmra.mxu0 %v3392
    %v3574 = vpop.f32.mrf.mxu0
    %v3575 = vadd.f32 0.0, %v3574
    %v3576 = vpop.f32.mrf.mxu0
    %v3577 = vadd.f32 0.0, %v3576
    %3578 = vmatprep.mubr.f32.mxu0 %v3500
    %3579 = vmatmul.mubr.f32.gmra.mxu0 %v3394
    %v3580 = vpop.f32.mrf.mxu0
    %v3581 = vadd.f32 0.0, %v3580
    %v3582 = vpop.f32.mrf.mxu0
    %v3583 = vadd.f32 0.0, %v3582
    %3584 = vmatprep.mubr.f32.mxu0 %v3503
    %3585 = vmatmul.mubr.f32.gmra.mxu0 %v3396
    %v3586 = vpop.f32.mrf.mxu0
    %v3587 = vadd.f32 0.0, %v3586
    %v3588 = vpop.f32.mrf.mxu0
    %v3589 = vadd.f32 0.0, %v3588
    %3590 = vmatprep.mubr.f32.mxu0 %v3506
    %3591 = vmatmul.mubr.f32.gmra.mxu0 %v3398
    %v3592 = vpop.f32.mrf.mxu0
    %v3593 = vadd.f32 0.0, %v3592
    %v3594 = vpop.f32.mrf.mxu0
    %v3595 = vadd.f32 0.0, %v3594
    %3596 = vdwg.mxu0
    %3597 = vset.pattern.permute.xlu0 16
    %3598 = vperm.xlu0 %3597, %v45
    %v3599 = vpop.permute.xlu0 %3598
    %3601 = vset.pattern.permute.xlu0 16
    %3602 = vperm.xlu0 %3601, %v46
    %v3603 = vpop.permute.xlu0 %3602
    %v3605 = vadd.f32 %v3587, %v3599
    %v3606 = vadd.f32 %v3589, %v3599
    %v3607 = vadd.f32 %v3593, %v3603
    %v3608 = vadd.f32 %v3595, %v3603
    %3609 = vmatprep.subr.mxu0 0.0
    %3610 = vmatpush1.msra.mxu0 %v66
    %3611 = vmatprep.subr.mxu0 0.0
    %3612 = vmatpush1.msra.mxu0 %v65
    %3613 = vmatprep.subr.mxu0 0.0
    %3614 = vmatpush1.msra.mxu0 %v64
    %3615 = vmatprep.subr.mxu0 0.0
    %3616 = vmatpush1.msra.mxu0 %v63
    %3617 = vmatprep.subr.mxu0 0.0
    %3618 = vmatpush1.msra.mxu0 %v62
    %3619 = vmatprep.subr.mxu0 0.0
    %3620 = vmatpush1.msra.mxu0 %v61
    %3621 = vmatprep.subr.mxu0 0.0
    %3622 = vmatpush1.msra.mxu0 %v60
    %3623 = vmatprep.subr.mxu0 0.0
    %3624 = vmatpush1.msra.mxu0 %v59
    %3625 = vmatprep.subr.mxu0 0.0
    %3626 = vmatpush1.msra.mxu0 %v58
    %3627 = vmatprep.subr.mxu0 0.0
    %3628 = vmatpush1.msra.mxu0 %v57
    %3629 = vmatprep.subr.mxu0 0.0
    %3630 = vmatpush1.msra.mxu0 %v56
    %3631 = vmatprep.subr.mxu0 0.0
    %3632 = vmatpush1.msra.mxu0 %v55
    %3633 = vmatprep.subr.mxu0 0.0
    %3634 = vmatpush1.msra.mxu0 %v54
    %3635 = vmatprep.subr.mxu0 0.0
    %3636 = vmatpush1.msra.mxu0 %v53
    %3637 = vmatprep.subr.mxu0 0.0
    %3638 = vmatpush1.msra.mxu0 %v52
    %3639 = vmatprep.subr.mxu0 0.0
    %3640 = vmatpush1.msra.mxu0 %v51
    %3641 = vmatprep.subr.mxu0 0.0
    %3642 = vmatpush2.msra.mxu0 %v82
    %3643 = vmatprep.subr.mxu0 0.0
    %3644 = vmatpush2.msra.mxu0 %v81
    %3645 = vmatprep.subr.mxu0 0.0
    %3646 = vmatpush2.msra.mxu0 %v80
    %3647 = vmatprep.subr.mxu0 0.0
    %3648 = vmatpush2.msra.mxu0 %v79
    %3649 = vmatprep.subr.mxu0 0.0
    %3650 = vmatpush2.msra.mxu0 %v78
    %3651 = vmatprep.subr.mxu0 0.0
    %3652 = vmatpush2.msra.mxu0 %v77
    %3653 = vmatprep.subr.mxu0 0.0
    %3654 = vmatpush2.msra.mxu0 %v76
    %3655 = vmatprep.subr.mxu0 0.0
    %3656 = vmatpush2.msra.mxu0 %v75
    %3657 = vmatprep.subr.mxu0 0.0
    %3658 = vmatpush2.msra.mxu0 %v74
    %3659 = vmatprep.subr.mxu0 0.0
    %3660 = vmatpush2.msra.mxu0 %v73
    %3661 = vmatprep.subr.mxu0 0.0
    %3662 = vmatpush2.msra.mxu0 %v72
    %3663 = vmatprep.subr.mxu0 0.0
    %3664 = vmatpush2.msra.mxu0 %v71
    %3665 = vmatprep.subr.mxu0 0.0
    %3666 = vmatpush2.msra.mxu0 %v70
    %3667 = vmatprep.subr.mxu0 0.0
    %3668 = vmatpush2.msra.mxu0 %v69
    %3669 = vmatprep.subr.mxu0 0.0
    %3670 = vmatpush2.msra.mxu0 %v68
    %3671 = vmatprep.subr.mxu0 0.0
    %3672 = vmatpush2.msra.mxu0 %v67
    %3673 = vmatprep.mubr.f32.mxu0 %v3577
    %3674 = vmatmul.mubr.f32.gmra.mxu0 %v3575
    %v3675 = vpop.f32.mrf.mxu0
    %v3676 = vadd.f32 0.0, %v3675
    %v3677 = vpop.f32.mrf.mxu0
    %3678 = vmatprep.mubr.f32.mxu0 %v3583
    %3679 = vmatmul.mubr.f32.gmra.mxu0 %v3581
    %v3680 = vpop.f32.mrf.mxu0
    %v3681 = vadd.f32 0.0, %v3680
    %v3682 = vpop.f32.mrf.mxu0
    %3683 = vdwg.mxu0
    %v3684 = vmul.f32 %v3676, 0.0057471264
    %v3685 = vmul.f32 %v3681, 0.0057471264
    %v3686 = vmul.f32 %v3575, %v3575
    %v3687 = vmul.f32 %v3577, %v3577
    %v3688 = vmul.f32 %v3581, %v3581
    %v3689 = vmul.f32 %v3583, %v3583
    %3690 = vmatprep.subr.mxu0 0.0
    %3691 = vmatpush1.msra.mxu0 %v66
    %3692 = vmatprep.subr.mxu0 0.0
    %3693 = vmatpush1.msra.mxu0 %v65
    %3694 = vmatprep.subr.mxu0 0.0
    %3695 = vmatpush1.msra.mxu0 %v64
    %3696 = vmatprep.subr.mxu0 0.0
    %3697 = vmatpush1.msra.mxu0 %v63
    %3698 = vmatprep.subr.mxu0 0.0
    %3699 = vmatpush1.msra.mxu0 %v62
    %3700 = vmatprep.subr.mxu0 0.0
    %3701 = vmatpush1.msra.mxu0 %v61
    %3702 = vmatprep.subr.mxu0 0.0
    %3703 = vmatpush1.msra.mxu0 %v60
    %3704 = vmatprep.subr.mxu0 0.0
    %3705 = vmatpush1.msra.mxu0 %v59
    %3706 = vmatprep.subr.mxu0 0.0
    %3707 = vmatpush1.msra.mxu0 %v58
    %3708 = vmatprep.subr.mxu0 0.0
    %3709 = vmatpush1.msra.mxu0 %v57
    %3710 = vmatprep.subr.mxu0 0.0
    %3711 = vmatpush1.msra.mxu0 %v56
    %3712 = vmatprep.subr.mxu0 0.0
    %3713 = vmatpush1.msra.mxu0 %v55
    %3714 = vmatprep.subr.mxu0 0.0
    %3715 = vmatpush1.msra.mxu0 %v54
    %3716 = vmatprep.subr.mxu0 0.0
    %3717 = vmatpush1.msra.mxu0 %v53
    %3718 = vmatprep.subr.mxu0 0.0
    %3719 = vmatpush1.msra.mxu0 %v52
    %3720 = vmatprep.subr.mxu0 0.0
    %3721 = vmatpush1.msra.mxu0 %v51
    %3722 = vmatprep.subr.mxu0 0.0
    %3723 = vmatpush2.msra.mxu0 %v82
    %3724 = vmatprep.subr.mxu0 0.0
    %3725 = vmatpush2.msra.mxu0 %v81
    %3726 = vmatprep.subr.mxu0 0.0
    %3727 = vmatpush2.msra.mxu0 %v80
    %3728 = vmatprep.subr.mxu0 0.0
    %3729 = vmatpush2.msra.mxu0 %v79
    %3730 = vmatprep.subr.mxu0 0.0
    %3731 = vmatpush2.msra.mxu0 %v78
    %3732 = vmatprep.subr.mxu0 0.0
    %3733 = vmatpush2.msra.mxu0 %v77
    %3734 = vmatprep.subr.mxu0 0.0
    %3735 = vmatpush2.msra.mxu0 %v76
    %3736 = vmatprep.subr.mxu0 0.0
    %3737 = vmatpush2.msra.mxu0 %v75
    %3738 = vmatprep.subr.mxu0 0.0
    %3739 = vmatpush2.msra.mxu0 %v74
    %3740 = vmatprep.subr.mxu0 0.0
    %3741 = vmatpush2.msra.mxu0 %v73
    %3742 = vmatprep.subr.mxu0 0.0
    %3743 = vmatpush2.msra.mxu0 %v72
    %3744 = vmatprep.subr.mxu0 0.0
    %3745 = vmatpush2.msra.mxu0 %v71
    %3746 = vmatprep.subr.mxu0 0.0
    %3747 = vmatpush2.msra.mxu0 %v70
    %3748 = vmatprep.subr.mxu0 0.0
    %3749 = vmatpush2.msra.mxu0 %v69
    %3750 = vmatprep.subr.mxu0 0.0
    %3751 = vmatpush2.msra.mxu0 %v68
    %3752 = vmatprep.subr.mxu0 0.0
    %3753 = vmatpush2.msra.mxu0 %v67
    %3754 = vmatprep.mubr.f32.mxu0 %v3687
    %3755 = vmatmul.mubr.f32.gmra.mxu0 %v3686
    %v3756 = vpop.f32.mrf.mxu0
    %v3757 = vadd.f32 0.0, %v3756
    %v3758 = vpop.f32.mrf.mxu0
    %3759 = vmatprep.mubr.f32.mxu0 %v3689
    %3760 = vmatmul.mubr.f32.gmra.mxu0 %v3688
    %v3761 = vpop.f32.mrf.mxu0
    %v3762 = vadd.f32 0.0, %v3761
    %v3763 = vpop.f32.mrf.mxu0
    %3764 = vdwg.mxu0
    %v3765 = vmul.f32 %v3757, 0.0057471264
    %v3766 = vmul.f32 %v3762, 0.0057471264
    %v3767 = vmul.f32 %v3684, %v3684
    %v3768 = vmul.f32 %v3685, %v3685
    %v3769 = vsub.f32 %v3765, %v3767
    %v3770 = vsub.f32 %v3766, %v3768
    %v3771 = vadd.f32 %v3769, 1e-05
    %v3772 = vadd.f32 %v3770, 1e-05
    %v3773 = vrsqrt.pop %v3771
    %v3774 = vrsqrt.pop %v3772
    %3777 = vrot.lane.b32.xlu0 %v3773, 11
    %v3778 = vpop.permute.xlu0 %3777
    %3779 = vrot.lane.b32.xlu0 %v3774, 11
    %v3780 = vpop.permute.xlu0 %3779
    %v3783 = vmul.f32 %v45, %v3778
    %v3784 = vmul.f32 %v46, %v3780
    %3786 = vset.pattern.permute.xlu0 12
    %3787 = vperm.xlu0 %3786, %v3783
    %v3788 = vpop.permute.xlu0 %3787
    %3791 = vset.pattern.permute.xlu0 12
    %3792 = vperm.xlu0 %3791, %v3784
    %v3793 = vpop.permute.xlu0 %3792
    %v3795 = vmul.f32 %v3575, %v3788
    %v3796 = vmul.f32 %v3577, %v3788
    %v3797 = vmul.f32 %v3581, %v3793
    %v3798 = vmul.f32 %v3583, %v3793
    %3799 = vrot.lane.b32.xlu0 %v3783, 117
    %v3800 = vpop.permute.xlu0 %3799
    %3801 = vrot.lane.b32.xlu0 %v3784, 117
    %v3802 = vpop.permute.xlu0 %3801
    %v3805 = vmul.f32 %v3684, %v3800
    %v3806 = vmul.f32 %v3685, %v3802
    %3809 = vrot.lane.b32.xlu0 %v3805, 12
    %v3810 = vpop.permute.xlu0 %3809
    %3811 = vrot.lane.b32.xlu0 %v3806, 12
    %v3812 = vpop.permute.xlu0 %3811
    %v3815 = vsub.f32 %v45, %v3810
    %v3816 = vsub.f32 %v46, %v3812
    %3818 = vset.pattern.permute.xlu0 13
    %3819 = vperm.xlu0 %3818, %v3815
    %v3820 = vpop.permute.xlu0 %3819
    %3823 = vset.pattern.permute.xlu0 13
    %3824 = vperm.xlu0 %3823, %v3816
    %v3825 = vpop.permute.xlu0 %3824
    %v3827 = vadd.f32 %v3795, %v3820
    %v3828 = vadd.f32 %v3796, %v3820
    %v3829 = vadd.f32 %v3797, %v3825
    %v3830 = vadd.f32 %v3798, %v3825
    %v3831 = vmax.f32 %v3827, 0.0
    %v3832 = vmax.f32 %v3828, 0.0
    %v3833 = vmax.f32 %v3829, 0.0
    %v3834 = vmax.f32 %v3830, 0.0
    %v3835 = vmul.f32 %v3831, %v2962
    %v3836 = vmul.f32 %v3832, %v2966
    %v3837 = vmul.f32 %v3833, %v2962
    %v3838 = vmul.f32 %v3834, %v2966
    %s3839 = scalar_lea.vmem [#allocation2], 384
    %v3840 = vld [vmem:[%s3839] sm:$0xff]
    %v3841 = vld [vmem:[%s3839 + $0x8] sm:$0xff]
    %v3842 = vld [vmem:[%s3839 + $0x10] sm:$0xff]
    %v3843 = vld [vmem:[%s3839 + $0x18] sm:$0xff]
    %3844 = vrot.lane.b32.xlu0 %v3835, 4
    %v3845 = vpop.permute.xlu0 %3844
    %3846 = vrot.lane.b32.xlu0 %v3837, 4
    %v3847 = vpop.permute.xlu0 %3846
    %3848 = vrot.lane.b32.xlu0 %v3836, 4
    %v3849 = vpop.permute.xlu0 %3848
    %3850 = vrot.lane.b32.xlu0 %v3838, 4
    %v3851 = vpop.permute.xlu0 %3850
    %v3852 = vsel %vm112, %v3845, %v3849
    %v3853 = vsel %vm112, %v3847, %v3851
    %v3854 = vsel %vm112, %v3849, %v3845
    %v3855 = vsel %vm112, %v3851, %v3847
    %3856 = vrot.lane.b32.xlu0 %v3835, 3
    %v3857 = vpop.permute.xlu0 %3856
    %3858 = vrot.lane.b32.xlu0 %v3837, 3
    %v3859 = vpop.permute.xlu0 %3858
    %3860 = vrot.lane.b32.xlu0 %v3836, 3
    %v3861 = vpop.permute.xlu0 %3860
    %3862 = vrot.lane.b32.xlu0 %v3838, 3
    %v3863 = vpop.permute.xlu0 %3862
    %v3864 = vsel %vm122, %v3857, %v3861
    %v3865 = vsel %vm122, %v3859, %v3863
    %v3866 = vsel %vm122, %v3861, %v3857
    %v3867 = vsel %vm122, %v3863, %v3859
    %3868 = vrot.lane.b32.xlu0 %v3835, 2
    %v3869 = vpop.permute.xlu0 %3868
    %3870 = vrot.lane.b32.xlu0 %v3837, 2
    %v3871 = vpop.permute.xlu0 %3870
    %3872 = vrot.lane.b32.xlu0 %v3836, 2
    %v3873 = vpop.permute.xlu0 %3872
    %3874 = vrot.lane.b32.xlu0 %v3838, 2
    %v3875 = vpop.permute.xlu0 %3874
    %v3876 = vsel %vm132, %v3869, %v3873
    %v3877 = vsel %vm132, %v3871, %v3875
    %v3878 = vsel %vm132, %v3873, %v3869
    %v3879 = vsel %vm132, %v3875, %v3871
    %3880 = vrot.lane.b32.xlu0 %v3835, 1
    %v3881 = vpop.permute.xlu0 %3880
    %3882 = vrot.lane.b32.xlu0 %v3837, 1
    %v3883 = vpop.permute.xlu0 %3882
    %3884 = vrot.lane.b32.xlu0 %v3836, 1
    %v3885 = vpop.permute.xlu0 %3884
    %3886 = vrot.lane.b32.xlu0 %v3838, 1
    %v3887 = vpop.permute.xlu0 %3886
    %v3888 = vsel %vm142, %v3881, %v3885
    %v3889 = vsel %vm142, %v3883, %v3887
    %v3890 = vsel %vm142, %v3885, %v3881
    %v3891 = vsel %vm142, %v3887, %v3883
    %3892 = vrot.lane.b32.xlu0 %v3835, 127
    %v3893 = vpop.permute.xlu0 %3892
    %3894 = vrot.lane.b32.xlu0 %v3837, 127
    %v3895 = vpop.permute.xlu0 %3894
    %3896 = vrot.lane.b32.xlu0 %v3836, 127
    %v3897 = vpop.permute.xlu0 %3896
    %3898 = vrot.lane.b32.xlu0 %v3838, 127
    %v3899 = vpop.permute.xlu0 %3898
    %v3900 = vsel %vm152, %v3893, %v3897
    %v3901 = vsel %vm152, %v3895, %v3899
    %v3902 = vsel %vm152, %v3897, %v3893
    %v3903 = vsel %vm152, %v3899, %v3895
    %3904 = vrot.lane.b32.xlu0 %v3835, 126
    %v3905 = vpop.permute.xlu0 %3904
    %3906 = vrot.lane.b32.xlu0 %v3837, 126
    %v3907 = vpop.permute.xlu0 %3906
    %3908 = vrot.lane.b32.xlu0 %v3836, 126
    %v3909 = vpop.permute.xlu0 %3908
    %3910 = vrot.lane.b32.xlu0 %v3838, 126
    %v3911 = vpop.permute.xlu0 %3910
    %v3912 = vsel %vm162, %v3905, %v3909
    %v3913 = vsel %vm162, %v3907, %v3911
    %v3914 = vsel %vm162, %v3909, %v3905
    %v3915 = vsel %vm162, %v3911, %v3907
    %3916 = vrot.lane.b32.xlu0 %v3835, 125
    %v3917 = vpop.permute.xlu0 %3916
    %3918 = vrot.lane.b32.xlu0 %v3837, 125
    %v3919 = vpop.permute.xlu0 %3918
    %3920 = vrot.lane.b32.xlu0 %v3836, 125
    %v3921 = vpop.permute.xlu0 %3920
    %3922 = vrot.lane.b32.xlu0 %v3838, 125
    %v3923 = vpop.permute.xlu0 %3922
    %v3924 = vsel %vm172, %v3917, %v3921
    %v3925 = vsel %vm172, %v3919, %v3923
    %v3926 = vsel %vm172, %v3921, %v3917
    %v3927 = vsel %vm172, %v3923, %v3919
    %3928 = vrot.lane.b32.xlu0 %v3835, 124
    %v3929 = vpop.permute.xlu0 %3928
    %3930 = vrot.lane.b32.xlu0 %v3837, 124
    %v3931 = vpop.permute.xlu0 %3930
    %3932 = vrot.lane.b32.xlu0 %v3836, 124
    %v3933 = vpop.permute.xlu0 %3932
    %3934 = vrot.lane.b32.xlu0 %v3838, 124
    %v3935 = vpop.permute.xlu0 %3934
    %v3936 = vsel %vm182, %v3929, %v3933
    %v3937 = vsel %vm182, %v3931, %v3935
    %v3938 = vsel %vm182, %v3933, %v3929
    %v3939 = vsel %vm182, %v3935, %v3931
    %v3941 = vsel %vm920, %v3841, 0
    %v3944 = vsel %vm920, %v3843, 0
    %3946 = vmatprep.subr.mxu0 %v3927
    %3947 = vmatpush1.msra.mxu0 %v3925
    %3948 = vmatprep.subr.mxu0 %v3926
    %3949 = vmatpush1.msra.mxu0 %v3924
    %3950 = vmatprep.subr.mxu0 %v3915
    %3951 = vmatpush1.msra.mxu0 %v3913
    %3952 = vmatprep.subr.mxu0 %v3914
    %3953 = vmatpush1.msra.mxu0 %v3912
    %3954 = vmatprep.subr.mxu0 %v3903
    %3955 = vmatpush1.msra.mxu0 %v3901
    %3956 = vmatprep.subr.mxu0 %v3902
    %3957 = vmatpush1.msra.mxu0 %v3900
    %3958 = vmatprep.subr.mxu0 %v3838
    %3959 = vmatpush1.msra.mxu0 %v3837
    %3960 = vmatprep.subr.mxu0 %v3836
    %3961 = vmatpush1.msra.mxu0 %v3835
    %3962 = vmatprep.subr.mxu0 %v3889
    %3963 = vmatpush1.msra.mxu0 %v3891
    %3964 = vmatprep.subr.mxu0 %v3888
    %3965 = vmatpush1.msra.mxu0 %v3890
    %3966 = vmatprep.subr.mxu0 %v3877
    %3967 = vmatpush1.msra.mxu0 %v3879
    %3968 = vmatprep.subr.mxu0 %v3876
    %3969 = vmatpush1.msra.mxu0 %v3878
    %3970 = vmatprep.subr.mxu0 %v3865
    %3971 = vmatpush1.msra.mxu0 %v3867
    %3972 = vmatprep.subr.mxu0 %v3864
    %3973 = vmatpush1.msra.mxu0 %v3866
    %3974 = vmatprep.subr.mxu0 %v3853
    %3975 = vmatpush1.msra.mxu0 %v3855
    %3976 = vmatprep.subr.mxu0 %v3852
    %3977 = vmatpush1.msra.mxu0 %v3854
    %3978 = vmatprep.subr.mxu0 0.0
    %3979 = vmatpush2.msra.mxu0 0.0
    %3980 = vmatprep.subr.mxu0 0.0
    %3981 = vmatpush2.msra.mxu0 0.0
    %3982 = vmatprep.subr.mxu0 0.0
    %3983 = vmatpush2.msra.mxu0 0.0
    %3984 = vmatprep.subr.mxu0 0.0
    %3985 = vmatpush2.msra.mxu0 0.0
    %3986 = vmatprep.subr.mxu0 0.0
    %3987 = vmatpush2.msra.mxu0 0.0
    %3988 = vmatprep.subr.mxu0 0.0
    %3989 = vmatpush2.msra.mxu0 0.0
    %3990 = vmatprep.subr.mxu0 0.0
    %3991 = vmatpush2.msra.mxu0 0.0
    %3992 = vmatprep.subr.mxu0 0.0
    %3993 = vmatpush2.msra.mxu0 0.0
    %3994 = vmatprep.subr.mxu0 0.0
    %3995 = vmatpush2.msra.mxu0 0.0
    %3996 = vmatprep.subr.mxu0 0.0
    %3997 = vmatpush2.msra.mxu0 0.0
    %3998 = vmatprep.subr.mxu0 0.0
    %3999 = vmatpush2.msra.mxu0 0.0
    %4000 = vmatprep.subr.mxu0 0.0
    %4001 = vmatpush2.msra.mxu0 0.0
    %4002 = vmatprep.subr.mxu0 0.0
    %4003 = vmatpush2.msra.mxu0 0.0
    %4004 = vmatprep.subr.mxu0 0.0
    %4005 = vmatpush2.msra.mxu0 0.0
    %4006 = vmatprep.subr.mxu0 %v3939
    %4007 = vmatpush2.msra.mxu0 %v3937
    %4008 = vmatprep.subr.mxu0 %v3938
    %4009 = vmatpush2.msra.mxu0 %v3936
    %4010 = vmatprep.mubr.f32.mxu0 %v3941
    %4011 = vmatmul.mubr.f32.gmra.mxu0 %v3840
    %v4012 = vpop.f32.mrf.mxu0
    %v4013 = vadd.f32 0.0, %v4012
    %v4014 = vpop.f32.mrf.mxu0
    %v4015 = vadd.f32 0.0, %v4014
    %4016 = vmatprep.mubr.f32.mxu0 %v3944
    %4017 = vmatmul.mubr.f32.gmra.mxu0 %v3842
    %v4018 = vpop.f32.mrf.mxu0
    %v4019 = vadd.f32 0.0, %v4018
    %v4020 = vpop.f32.mrf.mxu0
    %v4021 = vadd.f32 0.0, %v4020
    %4022 = vdwg.mxu0
    %4023 = vmatprep.subr.mxu0 0.0
    %4024 = vmatpush1.msra.mxu0 %v66
    %4025 = vmatprep.subr.mxu0 0.0
    %4026 = vmatpush1.msra.mxu0 %v65
    %4027 = vmatprep.subr.mxu0 0.0
    %4028 = vmatpush1.msra.mxu0 %v64
    %4029 = vmatprep.subr.mxu0 0.0
    %4030 = vmatpush1.msra.mxu0 %v63
    %4031 = vmatprep.subr.mxu0 0.0
    %4032 = vmatpush1.msra.mxu0 %v62
    %4033 = vmatprep.subr.mxu0 0.0
    %4034 = vmatpush1.msra.mxu0 %v61
    %4035 = vmatprep.subr.mxu0 0.0
    %4036 = vmatpush1.msra.mxu0 %v60
    %4037 = vmatprep.subr.mxu0 0.0
    %4038 = vmatpush1.msra.mxu0 %v59
    %4039 = vmatprep.subr.mxu0 0.0
    %4040 = vmatpush1.msra.mxu0 %v58
    %4041 = vmatprep.subr.mxu0 0.0
    %4042 = vmatpush1.msra.mxu0 %v57
    %4043 = vmatprep.subr.mxu0 0.0
    %4044 = vmatpush1.msra.mxu0 %v56
    %4045 = vmatprep.subr.mxu0 0.0
    %4046 = vmatpush1.msra.mxu0 %v55
    %4047 = vmatprep.subr.mxu0 0.0
    %4048 = vmatpush1.msra.mxu0 %v54
    %4049 = vmatprep.subr.mxu0 0.0
    %4050 = vmatpush1.msra.mxu0 %v53
    %4051 = vmatprep.subr.mxu0 0.0
    %4052 = vmatpush1.msra.mxu0 %v52
    %4053 = vmatprep.subr.mxu0 0.0
    %4054 = vmatpush1.msra.mxu0 %v51
    %4055 = vmatprep.subr.mxu0 0.0
    %4056 = vmatpush2.msra.mxu0 %v82
    %4057 = vmatprep.subr.mxu0 0.0
    %4058 = vmatpush2.msra.mxu0 %v81
    %4059 = vmatprep.subr.mxu0 0.0
    %4060 = vmatpush2.msra.mxu0 %v80
    %4061 = vmatprep.subr.mxu0 0.0
    %4062 = vmatpush2.msra.mxu0 %v79
    %4063 = vmatprep.subr.mxu0 0.0
    %4064 = vmatpush2.msra.mxu0 %v78
    %4065 = vmatprep.subr.mxu0 0.0
    %4066 = vmatpush2.msra.mxu0 %v77
    %4067 = vmatprep.subr.mxu0 0.0
    %4068 = vmatpush2.msra.mxu0 %v76
    %4069 = vmatprep.subr.mxu0 0.0
    %4070 = vmatpush2.msra.mxu0 %v75
    %4071 = vmatprep.subr.mxu0 0.0
    %4072 = vmatpush2.msra.mxu0 %v74
    %4073 = vmatprep.subr.mxu0 0.0
    %4074 = vmatpush2.msra.mxu0 %v73
    %4075 = vmatprep.subr.mxu0 0.0
    %4076 = vmatpush2.msra.mxu0 %v72
    %4077 = vmatprep.subr.mxu0 0.0
    %4078 = vmatpush2.msra.mxu0 %v71
    %4079 = vmatprep.subr.mxu0 0.0
    %4080 = vmatpush2.msra.mxu0 %v70
    %4081 = vmatprep.subr.mxu0 0.0
    %4082 = vmatpush2.msra.mxu0 %v69
    %4083 = vmatprep.subr.mxu0 0.0
    %4084 = vmatpush2.msra.mxu0 %v68
    %4085 = vmatprep.subr.mxu0 0.0
    %4086 = vmatpush2.msra.mxu0 %v67
    %4087 = vmatprep.mubr.f32.mxu0 %v4015
    %4088 = vmatmul.mubr.f32.gmra.mxu0 %v4013
    %v4089 = vpop.f32.mrf.mxu0
    %v4090 = vadd.f32 0.0, %v4089
    %v4091 = vpop.f32.mrf.mxu0
    %4092 = vmatprep.mubr.f32.mxu0 %v4021
    %4093 = vmatmul.mubr.f32.gmra.mxu0 %v4019
    %v4094 = vpop.f32.mrf.mxu0
    %v4095 = vadd.f32 0.0, %v4094
    %v4096 = vpop.f32.mrf.mxu0
    %4097 = vdwg.mxu0
    %v4098 = vmul.f32 %v4090, 0.0057471264
    %v4099 = vmul.f32 %v4095, 0.0057471264
    %v4100 = vmul.f32 %v4013, %v4013
    %v4101 = vmul.f32 %v4015, %v4015
    %v4102 = vmul.f32 %v4019, %v4019
    %v4103 = vmul.f32 %v4021, %v4021
    %4104 = vmatprep.subr.mxu0 0.0
    %4105 = vmatpush1.msra.mxu0 %v66
    %4106 = vmatprep.subr.mxu0 0.0
    %4107 = vmatpush1.msra.mxu0 %v65
    %4108 = vmatprep.subr.mxu0 0.0
    %4109 = vmatpush1.msra.mxu0 %v64
    %4110 = vmatprep.subr.mxu0 0.0
    %4111 = vmatpush1.msra.mxu0 %v63
    %4112 = vmatprep.subr.mxu0 0.0
    %4113 = vmatpush1.msra.mxu0 %v62
    %4114 = vmatprep.subr.mxu0 0.0
    %4115 = vmatpush1.msra.mxu0 %v61
    %4116 = vmatprep.subr.mxu0 0.0
    %4117 = vmatpush1.msra.mxu0 %v60
    %4118 = vmatprep.subr.mxu0 0.0
    %4119 = vmatpush1.msra.mxu0 %v59
    %4120 = vmatprep.subr.mxu0 0.0
    %4121 = vmatpush1.msra.mxu0 %v58
    %4122 = vmatprep.subr.mxu0 0.0
    %4123 = vmatpush1.msra.mxu0 %v57
    %4124 = vmatprep.subr.mxu0 0.0
    %4125 = vmatpush1.msra.mxu0 %v56
    %4126 = vmatprep.subr.mxu0 0.0
    %4127 = vmatpush1.msra.mxu0 %v55
    %4128 = vmatprep.subr.mxu0 0.0
    %4129 = vmatpush1.msra.mxu0 %v54
    %4130 = vmatprep.subr.mxu0 0.0
    %4131 = vmatpush1.msra.mxu0 %v53
    %4132 = vmatprep.subr.mxu0 0.0
    %4133 = vmatpush1.msra.mxu0 %v52
    %4134 = vmatprep.subr.mxu0 0.0
    %4135 = vmatpush1.msra.mxu0 %v51
    %4136 = vmatprep.subr.mxu0 0.0
    %4137 = vmatpush2.msra.mxu0 %v82
    %4138 = vmatprep.subr.mxu0 0.0
    %4139 = vmatpush2.msra.mxu0 %v81
    %4140 = vmatprep.subr.mxu0 0.0
    %4141 = vmatpush2.msra.mxu0 %v80
    %4142 = vmatprep.subr.mxu0 0.0
    %4143 = vmatpush2.msra.mxu0 %v79
    %4144 = vmatprep.subr.mxu0 0.0
    %4145 = vmatpush2.msra.mxu0 %v78
    %4146 = vmatprep.subr.mxu0 0.0
    %4147 = vmatpush2.msra.mxu0 %v77
    %4148 = vmatprep.subr.mxu0 0.0
    %4149 = vmatpush2.msra.mxu0 %v76
    %4150 = vmatprep.subr.mxu0 0.0
    %4151 = vmatpush2.msra.mxu0 %v75
    %4152 = vmatprep.subr.mxu0 0.0
    %4153 = vmatpush2.msra.mxu0 %v74
    %4154 = vmatprep.subr.mxu0 0.0
    %4155 = vmatpush2.msra.mxu0 %v73
    %4156 = vmatprep.subr.mxu0 0.0
    %4157 = vmatpush2.msra.mxu0 %v72
    %4158 = vmatprep.subr.mxu0 0.0
    %4159 = vmatpush2.msra.mxu0 %v71
    %4160 = vmatprep.subr.mxu0 0.0
    %4161 = vmatpush2.msra.mxu0 %v70
    %4162 = vmatprep.subr.mxu0 0.0
    %4163 = vmatpush2.msra.mxu0 %v69
    %4164 = vmatprep.subr.mxu0 0.0
    %4165 = vmatpush2.msra.mxu0 %v68
    %4166 = vmatprep.subr.mxu0 0.0
    %4167 = vmatpush2.msra.mxu0 %v67
    %4168 = vmatprep.mubr.f32.mxu0 %v4101
    %4169 = vmatmul.mubr.f32.gmra.mxu0 %v4100
    %v4170 = vpop.f32.mrf.mxu0
    %v4171 = vadd.f32 0.0, %v4170
    %v4172 = vpop.f32.mrf.mxu0
    %4173 = vmatprep.mubr.f32.mxu0 %v4103
    %4174 = vmatmul.mubr.f32.gmra.mxu0 %v4102
    %v4175 = vpop.f32.mrf.mxu0
    %v4176 = vadd.f32 0.0, %v4175
    %v4177 = vpop.f32.mrf.mxu0
    %4178 = vdwg.mxu0
    %v4179 = vmul.f32 %v4171, 0.0057471264
    %v4180 = vmul.f32 %v4176, 0.0057471264
    %v4181 = vmul.f32 %v4098, %v4098
    %v4182 = vmul.f32 %v4099, %v4099
    %v4183 = vsub.f32 %v4179, %v4181
    %v4184 = vsub.f32 %v4180, %v4182
    %v4185 = vadd.f32 %v4183, 1e-05
    %v4186 = vadd.f32 %v4184, 1e-05
    %v4187 = vrsqrt.pop %v4185
    %v4188 = vrsqrt.pop %v4186
    %4191 = vrot.lane.b32.xlu0 %v4187, 13
    %v4192 = vpop.permute.xlu0 %4191
    %4193 = vrot.lane.b32.xlu0 %v4188, 13
    %v4194 = vpop.permute.xlu0 %4193
    %v4197 = vmul.f32 %v45, %v4192
    %v4198 = vmul.f32 %v46, %v4194
    %4200 = vset.pattern.permute.xlu0 14
    %4201 = vperm.xlu0 %4200, %v4197
    %v4202 = vpop.permute.xlu0 %4201
    %4205 = vset.pattern.permute.xlu0 14
    %4206 = vperm.xlu0 %4205, %v4198
    %v4207 = vpop.permute.xlu0 %4206
    %v4209 = vmul.f32 %v4013, %v4202
    %v4210 = vmul.f32 %v4015, %v4202
    %v4211 = vmul.f32 %v4019, %v4207
    %v4212 = vmul.f32 %v4021, %v4207
    %4213 = vrot.lane.b32.xlu0 %v4197, 115
    %v4214 = vpop.permute.xlu0 %4213
    %4215 = vrot.lane.b32.xlu0 %v4198, 115
    %v4216 = vpop.permute.xlu0 %4215
    %v4219 = vmul.f32 %v4098, %v4214
    %v4220 = vmul.f32 %v4099, %v4216
    %4223 = vrot.lane.b32.xlu0 %v4219, 14
    %v4224 = vpop.permute.xlu0 %4223
    %4225 = vrot.lane.b32.xlu0 %v4220, 14
    %v4226 = vpop.permute.xlu0 %4225
    %v4229 = vsub.f32 %v45, %v4224
    %v4230 = vsub.f32 %v46, %v4226
    %4232 = vset.pattern.permute.xlu0 15
    %4233 = vperm.xlu0 %4232, %v4229
    %v4234 = vpop.permute.xlu0 %4233
    %4237 = vset.pattern.permute.xlu0 15
    %4238 = vperm.xlu0 %4237, %v4230
    %v4239 = vpop.permute.xlu0 %4238
    %v4241 = vadd.f32 %v4209, %v4234
    %v4242 = vadd.f32 %v4210, %v4234
    %v4243 = vadd.f32 %v4211, %v4239
    %v4244 = vadd.f32 %v4212, %v4239
    %v4245 = vadd.f32 %v4241, %v3605
    %v4246 = vadd.f32 %v4242, %v3606
    %v4247 = vadd.f32 %v4243, %v3607
    %v4248 = vadd.f32 %v4244, %v3608
    %v4249 = vmax.f32 %v4245, 0.0
    %v4250 = vmax.f32 %v4246, 0.0
    %v4251 = vmax.f32 %v4247, 0.0
    %v4252 = vmax.f32 %v4248, 0.0
    %v4253 = vmul.f32 %v4249, %v2962
    %v4254 = vmul.f32 %v4250, %v2966
    %v4255 = vmul.f32 %v4251, %v2962
    %v4256 = vmul.f32 %v4252, %v2966
    %v4257 = vld [vmem:[#allocation4 + $0x480] sm:$0xff]
    %v4258 = vld [vmem:[#allocation4 + $0x488] sm:$0xff]
    %v4259 = vld [vmem:[#allocation4 + $0x498] sm:$0xff]
    %v4260 = vld [vmem:[#allocation4 + $0x4a0] sm:$0xff]
    %v4261 = vld [vmem:[#allocation4 + $0x4b0] sm:$0xff]
    %v4262 = vld [vmem:[#allocation4 + $0x4b8] sm:$0xff]
    %v4263 = vld [vmem:[#allocation4 + $0x4c8] sm:$0xff]
    %v4264 = vld [vmem:[#allocation4 + $0x4d0] sm:$0xff]
    %v4265 = vld [vmem:[#allocation4 + $0x4e0] sm:$0xff]
    %v4266 = vld [vmem:[#allocation4 + $0x4e8] sm:$0xff]
    %v4267 = vld [vmem:[#allocation4 + $0x4f8] sm:$0xff]
    %v4268 = vld [vmem:[#allocation4 + $0x500] sm:$0xff]
    %v4269 = vld [vmem:[#allocation4 + $0x510] sm:$0xff]
    %v4270 = vld [vmem:[#allocation4 + $0x518] sm:$0xff]
    %v4271 = vld [vmem:[#allocation4 + $0x528] sm:$0xff]
    %v4272 = vld [vmem:[#allocation4 + $0x530] sm:$0xff]
    %v4273 = vld [vmem:[#allocation4 + $0x540] sm:$0xff]
    %v4274 = vld [vmem:[#allocation4 + $0x548] sm:$0xff]
    %v4275 = vld [vmem:[#allocation4 + $0x558] sm:$0xff]
    %v4276 = vld [vmem:[#allocation4 + $0x560] sm:$0xff]
    %v4277 = vld [vmem:[#allocation4 + $0x570] sm:$0xff]
    %v4278 = vld [vmem:[#allocation4 + $0x578] sm:$0xff]
    %v4279 = vld [vmem:[#allocation4 + $0x588] sm:$0xff]
    %v4280 = vld [vmem:[#allocation4 + $0x590] sm:$0xff]
    %v4281 = vld [vmem:[#allocation4 + $0x5a0] sm:$0xff]
    %v4282 = vld [vmem:[#allocation4 + $0x5a8] sm:$0xff]
    %v4283 = vld [vmem:[#allocation4 + $0x5b8] sm:$0xff]
    %v4284 = vld [vmem:[#allocation4 + $0x5c0] sm:$0xff]
    %v4285 = vld [vmem:[#allocation4 + $0x5d0] sm:$0xff]
    %v4286 = vld [vmem:[#allocation4 + $0x5d8] sm:$0xff]
    %v4287 = vld [vmem:[#allocation4 + $0x5e8] sm:$0xff]
    %v4288 = vld [vmem:[#allocation4 + $0x5f0] sm:$0xff]
    %v4289 = vld [vmem:[#allocation4 + $0x600] sm:$0xff]
    %v4290 = vld [vmem:[#allocation4 + $0x608] sm:$0xff]
    %v4291 = vld [vmem:[#allocation4 + $0x618] sm:$0xff]
    %v4292 = vld [vmem:[#allocation4 + $0x620] sm:$0xff]
    %v4293 = vld [vmem:[#allocation4 + $0x630] sm:$0xff]
    %v4294 = vld [vmem:[#allocation4 + $0x638] sm:$0xff]
    %v4295 = vld [vmem:[#allocation4 + $0x648] sm:$0xff]
    %v4296 = vld [vmem:[#allocation4 + $0x650] sm:$0xff]
    %v4297 = vld [vmem:[#allocation4 + $0x660] sm:$0xff]
    %v4298 = vld [vmem:[#allocation4 + $0x668] sm:$0xff]
    %v4299 = vld [vmem:[#allocation4 + $0x678] sm:$0xff]
    %v4300 = vld [vmem:[#allocation4 + $0x680] sm:$0xff]
    %v4301 = vld [vmem:[#allocation4 + $0x690] sm:$0xff]
    %v4302 = vld [vmem:[#allocation4 + $0x698] sm:$0xff]
    %v4303 = vld [vmem:[#allocation4 + $0x6a8] sm:$0xff]
    %v4304 = vld [vmem:[#allocation4 + $0x6b0] sm:$0xff]
    %v4305 = vld [vmem:[#allocation4 + $0x6c0] sm:$0xff]
    %v4306 = vld [vmem:[#allocation4 + $0x6c8] sm:$0xff]
    %v4307 = vld [vmem:[#allocation4 + $0x6d8] sm:$0xff]
    %v4308 = vld [vmem:[#allocation4 + $0x6e0] sm:$0xff]
    %v4309 = vld [vmem:[#allocation4 + $0x6f0] sm:$0xff]
    %v4310 = vld [vmem:[#allocation4 + $0x6f8] sm:$0xff]
    %v4311 = vld [vmem:[#allocation4 + $0x708] sm:$0xff]
    %v4312 = vld [vmem:[#allocation4 + $0x710] sm:$0xff]
    %v4313 = vld [vmem:[#allocation4 + $0x720] sm:$0xff]
    %v4314 = vld [vmem:[#allocation4 + $0x728] sm:$0xff]
    %v4315 = vld [vmem:[#allocation4 + $0x738] sm:$0xff]
    %v4316 = vld [vmem:[#allocation4 + $0x740] sm:$0xff]
    %v4317 = vld [vmem:[#allocation4 + $0x750] sm:$0xff]
    %v4318 = vld [vmem:[#allocation4 + $0x758] sm:$0xff]
    %v4319 = vld [vmem:[#allocation4 + $0x768] sm:$0xff]
    %v4320 = vld [vmem:[#allocation4 + $0x770] sm:$0xff]
    %v4321 = vld [vmem:[#allocation4 + $0xa80] sm:$0xff]
    %v4322 = vld [vmem:[#allocation4 + $0xa88] sm:$0xff]
    %v4323 = vld [vmem:[#allocation4 + $0xa98] sm:$0xff]
    %v4324 = vld [vmem:[#allocation4 + $0xaa0] sm:$0xff]
    %v4325 = vld [vmem:[#allocation4 + $0x780] sm:$0xff]
    %v4326 = vld [vmem:[#allocation4 + $0x798] sm:$0xff]
    %v4327 = vld [vmem:[#allocation4 + $0x7b0] sm:$0xff]
    %v4328 = vld [vmem:[#allocation4 + $0x7c8] sm:$0xff]
    %v4329 = vld [vmem:[#allocation4 + $0x7e0] sm:$0xff]
    %v4330 = vld [vmem:[#allocation4 + $0x7f8] sm:$0xff]
    %v4331 = vld [vmem:[#allocation4 + $0x810] sm:$0xff]
    %v4332 = vld [vmem:[#allocation4 + $0x828] sm:$0xff]
    %v4333 = vld [vmem:[#allocation4 + $0x840] sm:$0xff]
    %v4334 = vld [vmem:[#allocation4 + $0x858] sm:$0xff]
    %v4335 = vld [vmem:[#allocation4 + $0x870] sm:$0xff]
    %v4336 = vld [vmem:[#allocation4 + $0x888] sm:$0xff]
    %v4337 = vld [vmem:[#allocation4 + $0x8a0] sm:$0xff]
    %v4338 = vld [vmem:[#allocation4 + $0x8b8] sm:$0xff]
    %v4339 = vld [vmem:[#allocation4 + $0x8d0] sm:$0xff]
    %v4340 = vld [vmem:[#allocation4 + $0x8e8] sm:$0xff]
    %v4341 = vld [vmem:[#allocation4 + $0x900] sm:$0xff]
    %v4342 = vld [vmem:[#allocation4 + $0x918] sm:$0xff]
    %v4343 = vld [vmem:[#allocation4 + $0x930] sm:$0xff]
    %v4344 = vld [vmem:[#allocation4 + $0x948] sm:$0xff]
    %v4345 = vld [vmem:[#allocation4 + $0x960] sm:$0xff]
    %v4346 = vld [vmem:[#allocation4 + $0x978] sm:$0xff]
    %v4347 = vld [vmem:[#allocation4 + $0x990] sm:$0xff]
    %v4348 = vld [vmem:[#allocation4 + $0x9a8] sm:$0xff]
    %v4349 = vld [vmem:[#allocation4 + $0x9c0] sm:$0xff]
    %v4350 = vld [vmem:[#allocation4 + $0x9d8] sm:$0xff]
    %v4351 = vld [vmem:[#allocation4 + $0x9f0] sm:$0xff]
    %v4352 = vld [vmem:[#allocation4 + $0xa08] sm:$0xff]
    %v4353 = vld [vmem:[#allocation4 + $0xa20] sm:$0xff]
    %v4354 = vld [vmem:[#allocation4 + $0xa38] sm:$0xff]
    %v4355 = vld [vmem:[#allocation4 + $0xa50] sm:$0xff]
    %v4356 = vld [vmem:[#allocation4 + $0xa68] sm:$0xff]
    %v4357 = vld [vmem:[#allocation4 + $0xb10] ss:$0 sm:$0xff]
    %4358 = vmatprep.subr.mxu0 %v4288
    %4359 = vmatpush1.msra.mxu0 %v4287
    %4360 = vmatprep.subr.mxu0 %v4286
    %4361 = vmatpush1.msra.mxu0 %v4285
    %4362 = vmatprep.subr.mxu0 %v4284
    %4363 = vmatpush1.msra.mxu0 %v4283
    %4364 = vmatprep.subr.mxu0 %v4282
    %4365 = vmatpush1.msra.mxu0 %v4281
    %4366 = vmatprep.subr.mxu0 %v4280
    %4367 = vmatpush1.msra.mxu0 %v4279
    %4368 = vmatprep.subr.mxu0 %v4278
    %4369 = vmatpush1.msra.mxu0 %v4277
    %4370 = vmatprep.subr.mxu0 %v4276
    %4371 = vmatpush1.msra.mxu0 %v4275
    %4372 = vmatprep.subr.mxu0 %v4274
    %4373 = vmatpush1.msra.mxu0 %v4273
    %4374 = vmatprep.subr.mxu0 %v4272
    %4375 = vmatpush1.msra.mxu0 %v4271
    %4376 = vmatprep.subr.mxu0 %v4270
    %4377 = vmatpush1.msra.mxu0 %v4269
    %4378 = vmatprep.subr.mxu0 %v4268
    %4379 = vmatpush1.msra.mxu0 %v4267
    %4380 = vmatprep.subr.mxu0 %v4266
    %4381 = vmatpush1.msra.mxu0 %v4265
    %4382 = vmatprep.subr.mxu0 %v4264
    %4383 = vmatpush1.msra.mxu0 %v4263
    %4384 = vmatprep.subr.mxu0 %v4262
    %4385 = vmatpush1.msra.mxu0 %v4261
    %4386 = vmatprep.subr.mxu0 %v4260
    %4387 = vmatpush1.msra.mxu0 %v4259
    %4388 = vmatprep.subr.mxu0 %v4258
    %4389 = vmatpush1.msra.mxu0 %v4257
    %4390 = vmatprep.subr.mxu0 %v4320
    %4391 = vmatpush2.msra.mxu0 %v4319
    %4392 = vmatprep.subr.mxu0 %v4318
    %4393 = vmatpush2.msra.mxu0 %v4317
    %4394 = vmatprep.subr.mxu0 %v4316
    %4395 = vmatpush2.msra.mxu0 %v4315
    %4396 = vmatprep.subr.mxu0 %v4314
    %4397 = vmatpush2.msra.mxu0 %v4313
    %4398 = vmatprep.subr.mxu0 %v4312
    %4399 = vmatpush2.msra.mxu0 %v4311
    %4400 = vmatprep.subr.mxu0 %v4310
    %4401 = vmatpush2.msra.mxu0 %v4309
    %4402 = vmatprep.subr.mxu0 %v4308
    %4403 = vmatpush2.msra.mxu0 %v4307
    %4404 = vmatprep.subr.mxu0 %v4306
    %4405 = vmatpush2.msra.mxu0 %v4305
    %4406 = vmatprep.subr.mxu0 %v4304
    %4407 = vmatpush2.msra.mxu0 %v4303
    %4408 = vmatprep.subr.mxu0 %v4302
    %4409 = vmatpush2.msra.mxu0 %v4301
    %4410 = vmatprep.subr.mxu0 %v4300
    %4411 = vmatpush2.msra.mxu0 %v4299
    %4412 = vmatprep.subr.mxu0 %v4298
    %4413 = vmatpush2.msra.mxu0 %v4297
    %4414 = vmatprep.subr.mxu0 %v4296
    %4415 = vmatpush2.msra.mxu0 %v4295
    %4416 = vmatprep.subr.mxu0 %v4294
    %4417 = vmatpush2.msra.mxu0 %v4293
    %4418 = vmatprep.subr.mxu0 %v4292
    %4419 = vmatpush2.msra.mxu0 %v4291
    %4420 = vmatprep.subr.mxu0 %v4290
    %4421 = vmatpush2.msra.mxu0 %v4289
    %4422 = vmatprep.mubr.f32.mxu0 %v4254
    %4423 = vmatmul.mubr.f32.gmra.mxu0 %v4253
    %v4424 = vpop.f32.mrf.mxu0
    %v4425 = vadd.f32 0.0, %v4424
    %v4426 = vpop.f32.mrf.mxu0
    %v4427 = vadd.f32 0.0, %v4426
    %4428 = vmatprep.mubr.f32.mxu0 %v4256
    %4429 = vmatmul.mubr.f32.gmra.mxu0 %v4255
    %v4430 = vpop.f32.mrf.mxu0
    %v4431 = vadd.f32 0.0, %v4430
    %v4432 = vpop.f32.mrf.mxu0
    %v4433 = vadd.f32 0.0, %v4432
    %4434 = vdwg.mxu0
    %v4435 = vmul.f32 %v4425, %v4321
    %v4436 = vmul.f32 %v4427, %v4322
    %v4437 = vmul.f32 %v4431, %v4323
    %v4438 = vmul.f32 %v4433, %v4324
    %4439 = vmatprep.subr.mxu0 0.0
    %4440 = vmatpush1.msra.mxu0 %v4340
    %4441 = vmatprep.subr.mxu0 0.0
    %4442 = vmatpush1.msra.mxu0 %v4339
    %4443 = vmatprep.subr.mxu0 0.0
    %4444 = vmatpush1.msra.mxu0 %v4338
    %4445 = vmatprep.subr.mxu0 0.0
    %4446 = vmatpush1.msra.mxu0 %v4337
    %4447 = vmatprep.subr.mxu0 0.0
    %4448 = vmatpush1.msra.mxu0 %v4336
    %4449 = vmatprep.subr.mxu0 0.0
    %4450 = vmatpush1.msra.mxu0 %v4335
    %4451 = vmatprep.subr.mxu0 0.0
    %4452 = vmatpush1.msra.mxu0 %v4334
    %4453 = vmatprep.subr.mxu0 0.0
    %4454 = vmatpush1.msra.mxu0 %v4333
    %4455 = vmatprep.subr.mxu0 0.0
    %4456 = vmatpush1.msra.mxu0 %v4332
    %4457 = vmatprep.subr.mxu0 0.0
    %4458 = vmatpush1.msra.mxu0 %v4331
    %4459 = vmatprep.subr.mxu0 0.0
    %4460 = vmatpush1.msra.mxu0 %v4330
    %4461 = vmatprep.subr.mxu0 0.0
    %4462 = vmatpush1.msra.mxu0 %v4329
    %4463 = vmatprep.subr.mxu0 0.0
    %4464 = vmatpush1.msra.mxu0 %v4328
    %4465 = vmatprep.subr.mxu0 0.0
    %4466 = vmatpush1.msra.mxu0 %v4327
    %4467 = vmatprep.subr.mxu0 0.0
    %4468 = vmatpush1.msra.mxu0 %v4326
    %4469 = vmatprep.subr.mxu0 0.0
    %4470 = vmatpush1.msra.mxu0 %v4325
    %4471 = vmatprep.subr.mxu0 0.0
    %4472 = vmatpush2.msra.mxu0 %v4356
    %4473 = vmatprep.subr.mxu0 0.0
    %4474 = vmatpush2.msra.mxu0 %v4355
    %4475 = vmatprep.subr.mxu0 0.0
    %4476 = vmatpush2.msra.mxu0 %v4354
    %4477 = vmatprep.subr.mxu0 0.0
    %4478 = vmatpush2.msra.mxu0 %v4353
    %4479 = vmatprep.subr.mxu0 0.0
    %4480 = vmatpush2.msra.mxu0 %v4352
    %4481 = vmatprep.subr.mxu0 0.0
    %4482 = vmatpush2.msra.mxu0 %v4351
    %4483 = vmatprep.subr.mxu0 0.0
    %4484 = vmatpush2.msra.mxu0 %v4350
    %4485 = vmatprep.subr.mxu0 0.0
    %4486 = vmatpush2.msra.mxu0 %v4349
    %4487 = vmatprep.subr.mxu0 0.0
    %4488 = vmatpush2.msra.mxu0 %v4348
    %4489 = vmatprep.subr.mxu0 0.0
    %4490 = vmatpush2.msra.mxu0 %v4347
    %4491 = vmatprep.subr.mxu0 0.0
    %4492 = vmatpush2.msra.mxu0 %v4346
    %4493 = vmatprep.subr.mxu0 0.0
    %4494 = vmatpush2.msra.mxu0 %v4345
    %4495 = vmatprep.subr.mxu0 0.0
    %4496 = vmatpush2.msra.mxu0 %v4344
    %4497 = vmatprep.subr.mxu0 0.0
    %4498 = vmatpush2.msra.mxu0 %v4343
    %4499 = vmatprep.subr.mxu0 0.0
    %4500 = vmatpush2.msra.mxu0 %v4342
    %4501 = vmatprep.subr.mxu0 0.0
    %4502 = vmatpush2.msra.mxu0 %v4341
    %4503 = vmatprep.mubr.f32.mxu0 %v4436
    %4504 = vmatmul.mubr.f32.gmra.mxu0 %v4435
    %v4505 = vpop.f32.mrf.mxu0
    %v4506 = vadd.f32 0.0, %v4505
    %v4507 = vpop.f32.mrf.mxu0
    %4508 = vmatprep.mubr.f32.mxu0 %v4438
    %4509 = vmatmul.mubr.f32.gmra.mxu0 %v4437
    %v4510 = vpop.f32.mrf.mxu0
    %v4511 = vadd.f32 0.0, %v4510
    %v4512 = vpop.f32.mrf.mxu0
    %4513 = vdwg.mxu0
    %v4514 = vadd.f32 %v4506, %v4511
    %v4515 = vrot.slane %v4514, 4
    %v4516 = vadd.f32 %v4514, %v4515
    %v4517 = vrot.slane %v4516, 2
    %v4518 = vadd.f32 %v4516, %v4517
    %v4519 = vrot.slane %v4518, 1
    %v4520 = vadd.f32 %v4518, %v4519
    %v4521 = vadd.f32 %v4520, %v4357
    %4522 = vst [vmem:[%s4] sm:$0xff] %v4521
    // Predicated region
    $region26: #{resnet1d_forward.1} parent=1 // pred_check
      _
    $region27: #{resnet1d_forward.1} parent=1 // pred_check_branch
      %4524 = sbr.rel (0) target = $region29
    $region28: #{resnet1d_forward.1} parent=1 // pred_region
      _
    $region29: #{resnet1d_forward.1} parent=1 // pred_fallthru
      _
    // Predicated region
    $region30: #{resnet1d_forward.1} parent=1 // pred_check
      _
    $region31: #{resnet1d_forward.1} parent=1 // pred_check_branch
      %4526 = sbr.rel (0) target = $region33
    $region32: #{resnet1d_forward.1} parent=1 // pred_region
      _
    $region33: #{resnet1d_forward.1} parent=1 // pred_fallthru
      _
    %4527 = vsyncpa [#allocation3], 1
    %4528 = vsyncpa [#allocation5], 1

</llo_original>
